<compile_context>
chip_gen: v7x
topology: tpu7x:2x2x1
jax: 0.10.0
libtpu: 0.0.40
codegen_flags: <defaults>
</compile_context>

<pallas_src>
import functools

import jax
import jax.numpy as jnp
from jax import lax
from jax.experimental import pallas as pl
from jax.experimental.pallas import tpu as pltpu

_MB = 1024 * 1024


def _round_up(x, m):
    return ((x + m - 1) // m) * m


def _pad_to(x, shape):
    pads = [(0, s - d) for s, d in zip(shape, x.shape)]
    return jnp.pad(x, pads)


def _vmem_limit(estimate_bytes):
    # Explicit scoped-VMEM hint: 2x headroom over the static estimate, clamped
    # to [32 MiB, 64 MiB] so it is valid on v5e/v6e (128 MiB) and v7x (64 MiB).
    return int(min(max(2 * estimate_bytes, 32 * _MB), 64 * _MB))


def rnn_recurrence_kernel(x_ref, h0_ref, whh_hbm, b_ref,              # inputs
                          y_ref, hn_ref,                              # outputs
                          whh_vmem, h_carry, xb_ref, hbuf, dma_sem,   # scratch
                          *, t_block, batch_p, seq):
    """One grid step = t_block RNN time steps.

    x_ref    : (t_block, batch_p, hidden_p) bf16  pre-gathered x_t @ W_ih^T
    h0_ref   : (batch_p, hidden_p)          f32   initial hidden state
    whh_hbm  : (hidden_p, hidden_p)         bf16  W_hh^T, left in HBM (pl.ANY)
    b_ref    : (1, hidden_p)                f32   b_ih + b_hh
    y_ref    : (t_block*batch_p, hidden_p)  bf16  hidden states (time-major rows)
    hn_ref   : (batch_p, hidden_p)          f32   exact final hidden state
    whh_vmem : VMEM (hidden_p, hidden_p)    bf16  single-buffered W_hh^T copy
    h_carry  : VMEM (batch_p, hidden_p)     f32   hidden carried across grid steps
    xb_ref   : VMEM (t_block, batch_p, hidden_p) f32  x + bias (off-chain precompute)
    hbuf     : VMEM (t_block*batch_p, hidden_p)  f32  staged hidden states
    """
    s = pl.program_id(0)
    t0 = s * t_block

    @pl.when(s == 0)
    def _():
        # DMA the loop-invariant recurrent weight ONCE into single-buffered
        # VMEM scratch (instead of a double-buffered constant BlockSpec block).
        cp = pltpu.make_async_copy(whh_hbm, whh_vmem, dma_sem)
        cp.start()
        cp.wait()
        h_carry[...] = h0_ref[...]
        hn_ref[...] = h0_ref[...]      # keep the constant-index output defined

    # Hoist the bias add and the bf16 -> f32 upcast of x off the serial
    # dot -> add -> tanh dependency chain: one vectorized pass per block.
    xb_ref[...] = x_ref[...].astype(jnp.float32) + b_ref[...].reshape(1, 1, -1)

    def step(t, h_prev):
        # h_t = tanh(x_t @ W_ih^T + b_ih + b_hh + h_{t-1} @ W_hh^T)
        pre = xb_ref[t] + jnp.dot(h_prev.astype(jnp.bfloat16), whh_vmem[...],
                                  preferred_element_type=jnp.float32)
        h_new = jnp.tanh(pre)
        row = pl.multiple_of(t * batch_p, batch_p)
        hbuf[pl.ds(row, batch_p), :] = h_new
        return h_new

    h_last = lax.fori_loop(0, t_block, step, h_carry[...], unroll=True)
    h_carry[...] = h_last

    # Exact f32 final hidden state, taken from the block containing the true
    # last step, so zero-padded tail steps (odd seq) never leak into it.
    last = seq - 1

    @pl.when((t0 <= last) & (last < t0 + t_block))
    def _():
        row = pl.multiple_of((last - t0) * batch_p, batch_p)
        hn_ref[...] = hbuf[pl.ds(row, batch_p), :]

    # Lane-dense bf16 write-back of the whole block of hidden states.
    y_ref[...] = hbuf[...].astype(y_ref.dtype)


def decoder_kernel(y_ref, w_ref, b_ref, o_ref):
    # (tile_m, hidden_p) @ (hidden_p, tile_n) + bias, f32 accumulation on MXU.
    acc = jnp.dot(y_ref[...], w_ref[...], preferred_element_type=jnp.float32)
    o_ref[...] = (acc + b_ref[...]).astype(o_ref.dtype)


def rnn_model_forward(inputs, state, params, *, t_block=32,
                      logits_dtype=jnp.float32):
    """inputs: (batch, seq) int32 token ids; state: (1, batch, hidden) f32.

    Returns (logits (seq*batch, vocab), new_state (1, batch, hidden)), matching
    RNNModel.forward (time-major one-hot stack -> nn.RNN -> Linear decoder).
    """
    w_ih, w_hh, b_ih, b_hh, w_dense, b_dense = params
    hidden = w_hh.shape[0]
    vocab = w_ih.shape[1]
    batch, seq = inputs.shape

    # Padded shapes for full vreg / MXU occupancy and lane-dense stores.
    batch_p = max(8, _round_up(batch, 8))
    hidden_p = max(128, _round_up(hidden, 128))
    vocab_p = max(128, _round_up(vocab, 128))

    # Fixed time-block; zero-pad the sequence up to a multiple of it (no
    # divisor fallback -- odd/prime seq keeps the blocked schedule).
    t_block = max(1, min(t_block, _round_up(seq, 8)))
    seq_p = _round_up(seq, t_block)
    n_blocks = seq_p // t_block
    rows_per_block = t_block * batch_p

    # Embedding gather: one_hot(token) @ W_ih^T == W_ih^T[token]; bf16 feed.
    # TODO(synk): gather in-kernel from scalar-prefetched token ids to avoid
    # materializing the (seq, batch, hidden) activation tensor in HBM.
    x_emb = w_ih.T[inputs.T]                                    # (seq, batch, hidden) f32
    x_emb = _pad_to(x_emb, (seq_p, batch_p, hidden_p)).astype(jnp.bfloat16)

    whh_bf = _pad_to(w_hh.T, (hidden_p, hidden_p)).astype(jnp.bfloat16)
    b_comb = _pad_to((b_ih + b_hh).reshape(1, hidden), (1, hidden_p))
    h0 = _pad_to(state[0], (batch_p, hidden_p))

    full2d = lambda s: (0, 0)

    rec_vmem = (4 * rows_per_block * hidden_p * 2        # x + y blocks (bf16, x2 buffers)
                + hidden_p * hidden_p * 2                # W_hh^T scratch (single buffer)
                + 2 * rows_per_block * hidden_p * 4      # xb + hbuf scratch (f32)
                + 6 * batch_p * hidden_p * 4             # h0 / hn blocks + carry
                + 16 * hidden_p * 4)                     # bias blocks

    rec_kernel = functools.partial(rnn_recurrence_kernel, t_block=t_block,
                                   batch_p=batch_p, seq=seq)

    y_hid, h_n_p = pl.pallas_call(
        rec_kernel,
        out_shape=(
            jax.ShapeDtypeStruct((seq_p * batch_p, hidden_p), jnp.bfloat16),
            jax.ShapeDtypeStruct((batch_p, hidden_p), jnp.float32),
        ),
        grid_spec=pltpu.PrefetchScalarGridSpec(
            num_scalar_prefetch=0,
            grid=(n_blocks,),
            in_specs=[
                pl.BlockSpec((t_block, batch_p, hidden_p),
                             lambda s: (s, 0, 0)),                  # x_emb block
                pl.BlockSpec((batch_p, hidden_p), full2d),           # h0
                pl.BlockSpec(memory_space=pl.ANY),                   # W_hh^T stays in HBM
                pl.BlockSpec((1, hidden_p), full2d),                 # b_ih + b_hh
            ],
            out_specs=[
                pl.BlockSpec((rows_per_block, hidden_p),
                             lambda s: (s, 0)),                      # hidden states (bf16)
                pl.BlockSpec((batch_p, hidden_p), full2d),            # final hidden (f32)
            ],
            scratch_shapes=[
                pltpu.VMEM((hidden_p, hidden_p), jnp.bfloat16),       # W_hh^T single buffer
                pltpu.VMEM((batch_p, hidden_p), jnp.float32),         # h carry
                pltpu.VMEM((t_block, batch_p, hidden_p), jnp.float32),  # x + bias
                pltpu.VMEM((rows_per_block, hidden_p), jnp.float32),    # staged h (f32)
                pltpu.SemaphoreType.DMA(()),                          # weight-copy sem
            ],
        ),
        compiler_params=pltpu.CompilerParams(
            dimension_semantics=("arbitrary",),     # serial recurrence in time
            vmem_limit_bytes=_vmem_limit(rec_vmem),
        ),
    )(x_emb, h0, whh_bf, b_comb)

    # ---- Decoder: standard (rows, vocab)-tiled matmul, both axes "parallel" ----
    # TODO(synk): batch-shard the recurrence over a leading parallel grid axis
    # when batch_p >= 16 (second TensorCore on v7x); batch is tiny here.
    rows_valid = seq * batch_p                       # decode only real time steps
    tile_m = min(256, rows_valid)                    # >=256 fills the v6e/v7x MXU
    rows_pad = _round_up(rows_valid, tile_m)
    tile_n = max(c for c in (128, 256, 512) if vocab_p % c == 0)

    y_dec = y_hid[:rows_valid]
    if rows_pad != rows_valid:
        y_dec = jnp.pad(y_dec, ((0, rows_pad - rows_valid), (0, 0)))

    wout_bf = _pad_to(w_dense.T, (hidden_p, vocab_p)).astype(jnp.bfloat16)
    bout = _pad_to(b_dense.reshape(1, vocab), (1, vocab_p))

    dec_vmem = 2 * (tile_m * hidden_p * 2 + hidden_p * tile_n * 2
                    + 8 * tile_n * 4
                    + tile_m * tile_n * jnp.dtype(logits_dtype).itemsize)

    logits_pad = pl.pallas_call(
        decoder_kernel,
        out_shape=jax.ShapeDtypeStruct((rows_pad, vocab_p), logits_dtype),
        grid=(rows_pad // tile_m, vocab_p // tile_n),
        in_specs=[
            pl.BlockSpec((tile_m, hidden_p), lambda i, j: (i, 0)),   # hidden states
            pl.BlockSpec((hidden_p, tile_n), lambda i, j: (0, j)),   # W_dense^T tile
            pl.BlockSpec((1, tile_n), lambda i, j: (0, j)),          # b_dense tile
        ],
        out_specs=pl.BlockSpec((tile_m, tile_n), lambda i, j: (i, j)),
        compiler_params=pltpu.CompilerParams(
            dimension_semantics=("parallel", "parallel"),
            vmem_limit_bytes=_vmem_limit(dec_vmem),
        ),
    )(y_dec, wout_bf, bout)

    # Strip padding; rows are time-major then batch, matching Y.view(-1, H).
    logits = (logits_pad[:rows_valid]
              .reshape(seq, batch_p, vocab_p)[:, :batch, :vocab]
              .reshape(seq * batch, vocab))
    new_state = h_n_p[:batch, :hidden][None]          # (1, batch, hidden)
    return logits, new_state


def init_params(key, vocab_size, num_hiddens):
    # Deterministic synthetic parameters (PyTorch-style uniform init bounds).
    ks = jax.random.split(key, 6)
    bound = 1.0 / jnp.sqrt(num_hiddens)
    w_ih = jax.random.uniform(ks[0], (num_hiddens, vocab_size), jnp.float32,
                              -bound, bound)
    w_hh = jax.random.uniform(ks[1], (num_hiddens, num_hiddens), jnp.float32,
                              -bound, bound)
    b_ih = jax.random.uniform(ks[2], (num_hiddens,), jnp.float32, -bound, bound)
    b_hh = jax.random.uniform(ks[3], (num_hiddens,), jnp.float32, -bound, bound)
    w_dense = jax.random.uniform(ks[4], (vocab_size, num_hiddens), jnp.float32,
                                 -bound, bound)
    b_dense = jax.random.uniform(ks[5], (vocab_size,), jnp.float32, -bound, bound)
    return (w_ih, w_hh, b_ih, b_hh, w_dense, b_dense)


def reference_forward(inputs, state, params):
    # Pure-JAX reference mirroring the kernel numerics (bf16 x_emb feed, bf16
    # matmul operands, f32 accumulation, f32 hidden carry).
    w_ih, w_hh, b_ih, b_hh, w_dense, b_dense = params
    x_emb = w_ih.T[inputs.T].astype(jnp.bfloat16).astype(jnp.float32)
    whh_bf = w_hh.T.astype(jnp.bfloat16)
    bias = (b_ih + b_hh)[None, :]

    def step(h, x_t):
        pre = (x_t + bias) + jnp.dot(h.astype(jnp.bfloat16), whh_bf,
                                     preferred_element_type=jnp.float32)
        h_new = jnp.tanh(pre)
        return h_new, h_new

    h_n, ys = lax.scan(step, state[0], x_emb)
    ys2 = ys.reshape(-1, ys.shape[-1]).astype(jnp.bfloat16)
    logits = (jnp.dot(ys2, w_dense.T.astype(jnp.bfloat16),
                      preferred_element_type=jnp.float32) + b_dense)
    return logits, h_n[None]


if __name__ == "__main__":
    batch, seq = 2, 35            # odd seq exercises the padded tail block
    vocab_size = 50               # small synthetic char vocab
    num_hiddens = 256             # matches the original module's num_hiddens

    key = jax.random.PRNGKey(0)
    k_tok, k_par, k_state = jax.random.split(key, 3)
    inputs = jax.random.randint(k_tok, (batch, seq), 0, vocab_size, dtype=jnp.int32)
    state = 0.1 * jax.random.normal(k_state, (1, batch, num_hiddens), jnp.float32)
    params = init_params(k_par, vocab_size, num_hiddens)

    logits, new_state = rnn_model_forward(inputs, state, params)
    jax.block_until_ready((logits, new_state))

    # Cross-check against a pure-JAX reference with the same bf16 casts.
    ref_logits, ref_state = reference_forward(inputs, state, params)
    assert logits.shape == (seq * batch, vocab_size)
    assert new_state.shape == (1, batch, num_hiddens)
    assert jnp.allclose(logits, ref_logits, atol=5e-3, rtol=5e-3)
    assert jnp.allclose(new_state, ref_state, atol=5e-3, rtol=5e-3)

    print("KERNEL_OK")
</pallas_src>

<mosaic_0001>
module attributes {stable_mosaic.version = 11 : i64} {
  func.func @rnn_recurrence_kernel(%arg0: i32, %arg1: memref<32x8x256xbf16, #tpu.memory_space<vmem>>, %arg2: memref<8x256xf32, #tpu.memory_space<vmem>>, %arg3: memref<256x256xbf16, #tpu.memory_space<any>>, %arg4: memref<1x256xf32, #tpu.memory_space<vmem>>, %arg5: memref<256x256xbf16, #tpu.memory_space<vmem>>, %arg6: memref<8x256xf32, #tpu.memory_space<vmem>>, %arg7: memref<256x256xbf16, #tpu.memory_space<vmem>>, %arg8: memref<8x256xf32, #tpu.memory_space<vmem>>, %arg9: memref<32x8x256xf32, #tpu.memory_space<vmem>>, %arg10: memref<256x256xf32, #tpu.memory_space<vmem>>, %arg11: memref<!tpu.dma_semaphore, #tpu.memory_space<semaphore_mem>>) attributes {dimension_semantics = [#tpu.dimension_semantics<arbitrary>], iteration_bounds = array<i64: 2>, scalar_prefetch = 0 : i64, scratch_operands = 5 : i64, tpu.core_type = #tpu.core_type<tc>, window_params = [{transform_indices = @transform_0, window_bounds = array<i64: 32, 8, 256>}, {pipeline_mode = #tpu.pipeline_mode<synchronous>, transform_indices = @transform_1, window_bounds = array<i64: 8, 256>}, {}, {pipeline_mode = #tpu.pipeline_mode<synchronous>, transform_indices = @transform_3, window_bounds = array<i64: 1, 256>}, {transform_indices = @transform_4, window_bounds = array<i64: 256, 256>}, {pipeline_mode = #tpu.pipeline_mode<synchronous>, transform_indices = @transform_5, window_bounds = array<i64: 8, 256>}]} {
    %c32_i32 = arith.constant 32 : i32
    %0 = arith.muli %arg0, %c32_i32 : i32
    %c0_i32 = arith.constant 0 : i32
    %1 = arith.cmpi eq, %arg0, %c0_i32 : i32
    %2 = arith.extui %1 : i1 to i32
    %c0_i32_0 = arith.constant 0 : i32
    %3 = arith.cmpi ne, %2, %c0_i32_0 : i32
    scf.if %3 {
      tpu.enqueue_dma source(%arg3 : memref<256x256xbf16, #tpu.memory_space<any>>) target(%arg7 : memref<256x256xbf16, #tpu.memory_space<vmem>>) target_semaphore(%arg11 : memref<!tpu.dma_semaphore, #tpu.memory_space<semaphore_mem>>)
      tpu.wait_dma2 semaphore(%arg11 : memref<!tpu.dma_semaphore, #tpu.memory_space<semaphore_mem>>) src(%arg3 : memref<256x256xbf16, #tpu.memory_space<any>>) dst(%arg7 : memref<256x256xbf16, #tpu.memory_space<vmem>>)
      %c0_244 = arith.constant 0 : index
      %c0_245 = arith.constant 0 : index
      %406 = vector.load %arg2[%c0_244, %c0_245] : memref<8x256xf32, #tpu.memory_space<vmem>>, vector<8x256xf32>
      %c0_246 = arith.constant 0 : index
      %c0_247 = arith.constant 0 : index
      %407 = vector.load %arg8[%c0_246, %c0_247] : memref<8x256xf32, #tpu.memory_space<vmem>>, vector<8x256xf32>
      tpu.vector_store %arg8[%c0_246, %c0_247], %406 {strides = array<i32>} : memref<8x256xf32, #tpu.memory_space<vmem>>, vector<8x256xf32>,
      %c0_248 = arith.constant 0 : index
      %c0_249 = arith.constant 0 : index
      %408 = vector.load %arg2[%c0_248, %c0_249] : memref<8x256xf32, #tpu.memory_space<vmem>>, vector<8x256xf32>
      %c0_250 = arith.constant 0 : index
      %c0_251 = arith.constant 0 : index
      %409 = vector.load %arg6[%c0_250, %c0_251] : memref<8x256xf32, #tpu.memory_space<vmem>>, vector<8x256xf32>
      tpu.vector_store %arg6[%c0_250, %c0_251], %408 {strides = array<i32>} : memref<8x256xf32, #tpu.memory_space<vmem>>, vector<8x256xf32>,
    } else {
    }
    %c0 = arith.constant 0 : index
    %c0_1 = arith.constant 0 : index
    %c0_2 = arith.constant 0 : index
    %4 = vector.load %arg1[%c0, %c0_1, %c0_2] : memref<32x8x256xbf16, #tpu.memory_space<vmem>>, vector<32x8x256xbf16>
    %5 = arith.extf %4 : vector<32x8x256xbf16> to vector<32x8x256xf32>
    %c0_3 = arith.constant 0 : index
    %c0_4 = arith.constant 0 : index
    %6 = vector.load %arg4[%c0_3, %c0_4] : memref<1x256xf32, #tpu.memory_space<vmem>>, vector<1x256xf32>
    %7 = vector.shape_cast %6 : vector<1x256xf32> to vector<1x1x256xf32>
    %8 = vector.broadcast %7 : vector<1x1x256xf32> to vector<32x8x256xf32>
    %9 = arith.addf %5, %8 : vector<32x8x256xf32>
    %c0_5 = arith.constant 0 : index
    %c0_6 = arith.constant 0 : index
    %c0_7 = arith.constant 0 : index
    %10 = vector.load %arg9[%c0_5, %c0_6, %c0_7] : memref<32x8x256xf32, #tpu.memory_space<vmem>>, vector<32x8x256xf32>
    tpu.vector_store %arg9[%c0_5, %c0_6, %c0_7], %9 {strides = array<i32>} : memref<32x8x256xf32, #tpu.memory_space<vmem>>, vector<32x8x256xf32>,
    %c0_8 = arith.constant 0 : index
    %c0_9 = arith.constant 0 : index
    %11 = vector.load %arg8[%c0_8, %c0_9] : memref<8x256xf32, #tpu.memory_space<vmem>>, vector<8x256xf32>
    %c0_i32_10 = arith.constant 0 : i32
    %12 = arith.index_cast %c0_i32_10 : i32 to index
    %c0_11 = arith.constant 0 : index
    %c0_12 = arith.constant 0 : index
    %13 = vector.load %arg9[%12, %c0_11, %c0_12] : memref<32x8x256xf32, #tpu.memory_space<vmem>>, vector<1x8x256xf32>
    %14 = vector.shape_cast %13 : vector<1x8x256xf32> to vector<8x256xf32>
    %15 = arith.truncf %11 : vector<8x256xf32> to vector<8x256xbf16>
    %c0_13 = arith.constant 0 : index
    %c0_14 = arith.constant 0 : index
    %16 = vector.load %arg7[%c0_13, %c0_14] : memref<256x256xbf16, #tpu.memory_space<vmem>>, vector<256x256xbf16>
    %cst = arith.constant dense<0.000000e+00> : vector<8x256xf32>
    %17 = tpu.matmul %15, %16, %cst {dimension_numbers = #tpu.dot_dimension_numbers<[1], [0], [0], [1], [0, 0, 1, 1], [], []>} : vector<8x256xbf16>, vector<256x256xbf16>, vector<8x256xf32> -> vector<8x256xf32>
    %18 = arith.addf %14, %17 : vector<8x256xf32>
    %19 = math.tanh %18 : vector<8x256xf32>
    %c8_i32 = arith.constant 8 : i32
    %20 = arith.muli %c0_i32_10, %c8_i32 : i32
    %21 = tpu.assume_multiple %20, 8 : i32
    %22 = arith.index_cast %21 : i32 to index
    %c0_15 = arith.constant 0 : index
    %23 = vector.load %arg10[%22, %c0_15] : memref<256x256xf32, #tpu.memory_space<vmem>>, vector<8x256xf32>
    tpu.vector_store %arg10[%22, %c0_15], %19 {strides = array<i32>} : memref<256x256xf32, #tpu.memory_space<vmem>>, vector<8x256xf32>,
    %c1_i32 = arith.constant 1 : i32
    %24 = arith.index_cast %c1_i32 : i32 to index
    %c0_16 = arith.constant 0 : index
    %c0_17 = arith.constant 0 : index
    %25 = vector.load %arg9[%24, %c0_16, %c0_17] : memref<32x8x256xf32, #tpu.memory_space<vmem>>, vector<1x8x256xf32>
    %26 = vector.shape_cast %25 : vector<1x8x256xf32> to vector<8x256xf32>
    %27 = arith.truncf %19 : vector<8x256xf32> to vector<8x256xbf16>
    %c0_18 = arith.constant 0 : index
    %c0_19 = arith.constant 0 : index
    %28 = vector.load %arg7[%c0_18, %c0_19] : memref<256x256xbf16, #tpu.memory_space<vmem>>, vector<256x256xbf16>
    %cst_20 = arith.constant dense<0.000000e+00> : vector<8x256xf32>
    %29 = tpu.matmul %27, %28, %cst_20 {dimension_numbers = #tpu.dot_dimension_numbers<[1], [0], [0], [1], [0, 0, 1, 1], [], []>} : vector<8x256xbf16>, vector<256x256xbf16>, vector<8x256xf32> -> vector<8x256xf32>
    %30 = arith.addf %26, %29 : vector<8x256xf32>
    %31 = math.tanh %30 : vector<8x256xf32>
    %c8_i32_21 = arith.constant 8 : i32
    %32 = arith.muli %c1_i32, %c8_i32_21 : i32
    %33 = tpu.assume_multiple %32, 8 : i32
    %34 = arith.index_cast %33 : i32 to index
    %c0_22 = arith.constant 0 : index
    %35 = vector.load %arg10[%34, %c0_22] : memref<256x256xf32, #tpu.memory_space<vmem>>, vector<8x256xf32>
    tpu.vector_store %arg10[%34, %c0_22], %31 {strides = array<i32>} : memref<256x256xf32, #tpu.memory_space<vmem>>, vector<8x256xf32>,
    %c2_i32 = arith.constant 2 : i32
    %36 = arith.index_cast %c2_i32 : i32 to index
    %c0_23 = arith.constant 0 : index
    %c0_24 = arith.constant 0 : index
    %37 = vector.load %arg9[%36, %c0_23, %c0_24] : memref<32x8x256xf32, #tpu.memory_space<vmem>>, vector<1x8x256xf32>
    %38 = vector.shape_cast %37 : vector<1x8x256xf32> to vector<8x256xf32>
    %39 = arith.truncf %31 : vector<8x256xf32> to vector<8x256xbf16>
    %c0_25 = arith.constant 0 : index
    %c0_26 = arith.constant 0 : index
    %40 = vector.load %arg7[%c0_25, %c0_26] : memref<256x256xbf16, #tpu.memory_space<vmem>>, vector<256x256xbf16>
    %cst_27 = arith.constant dense<0.000000e+00> : vector<8x256xf32>
    %41 = tpu.matmul %39, %40, %cst_27 {dimension_numbers = #tpu.dot_dimension_numbers<[1], [0], [0], [1], [0, 0, 1, 1], [], []>} : vector<8x256xbf16>, vector<256x256xbf16>, vector<8x256xf32> -> vector<8x256xf32>
    %42 = arith.addf %38, %41 : vector<8x256xf32>
    %43 = math.tanh %42 : vector<8x256xf32>
    %c8_i32_28 = arith.constant 8 : i32
    %44 = arith.muli %c2_i32, %c8_i32_28 : i32
    %45 = tpu.assume_multiple %44, 8 : i32
    %46 = arith.index_cast %45 : i32 to index
    %c0_29 = arith.constant 0 : index
    %47 = vector.load %arg10[%46, %c0_29] : memref<256x256xf32, #tpu.memory_space<vmem>>, vector<8x256xf32>
    tpu.vector_store %arg10[%46, %c0_29], %43 {strides = array<i32>} : memref<256x256xf32, #tpu.memory_space<vmem>>, vector<8x256xf32>,
    %c3_i32 = arith.constant 3 : i32
    %48 = arith.index_cast %c3_i32 : i32 to index
    %c0_30 = arith.constant 0 : index
    %c0_31 = arith.constant 0 : index
    %49 = vector.load %arg9[%48, %c0_30, %c0_31] : memref<32x8x256xf32, #tpu.memory_space<vmem>>, vector<1x8x256xf32>
    %50 = vector.shape_cast %49 : vector<1x8x256xf32> to vector<8x256xf32>
    %51 = arith.truncf %43 : vector<8x256xf32> to vector<8x256xbf16>
    %c0_32 = arith.constant 0 : index
    %c0_33 = arith.constant 0 : index
    %52 = vector.load %arg7[%c0_32, %c0_33] : memref<256x256xbf16, #tpu.memory_space<vmem>>, vector<256x256xbf16>
    %cst_34 = arith.constant dense<0.000000e+00> : vector<8x256xf32>
    %53 = tpu.matmul %51, %52, %cst_34 {dimension_numbers = #tpu.dot_dimension_numbers<[1], [0], [0], [1], [0, 0, 1, 1], [], []>} : vector<8x256xbf16>, vector<256x256xbf16>, vector<8x256xf32> -> vector<8x256xf32>
    %54 = arith.addf %50, %53 : vector<8x256xf32>
    %55 = math.tanh %54 : vector<8x256xf32>
    %c8_i32_35 = arith.constant 8 : i32
    %56 = arith.muli %c3_i32, %c8_i32_35 : i32
    %57 = tpu.assume_multiple %56, 8 : i32
    %58 = arith.index_cast %57 : i32 to index
    %c0_36 = arith.constant 0 : index
    %59 = vector.load %arg10[%58, %c0_36] : memref<256x256xf32, #tpu.memory_space<vmem>>, vector<8x256xf32>
    tpu.vector_store %arg10[%58, %c0_36], %55 {strides = array<i32>} : memref<256x256xf32, #tpu.memory_space<vmem>>, vector<8x256xf32>,
    %c4_i32 = arith.constant 4 : i32
    %60 = arith.index_cast %c4_i32 : i32 to index
    %c0_37 = arith.constant 0 : index
    %c0_38 = arith.constant 0 : index
    %61 = vector.load %arg9[%60, %c0_37, %c0_38] : memref<32x8x256xf32, #tpu.memory_space<vmem>>, vector<1x8x256xf32>
    %62 = vector.shape_cast %61 : vector<1x8x256xf32> to vector<8x256xf32>
    %63 = arith.truncf %55 : vector<8x256xf32> to vector<8x256xbf16>
    %c0_39 = arith.constant 0 : index
    %c0_40 = arith.constant 0 : index
    %64 = vector.load %arg7[%c0_39, %c0_40] : memref<256x256xbf16, #tpu.memory_space<vmem>>, vector<256x256xbf16>
    %cst_41 = arith.constant dense<0.000000e+00> : vector<8x256xf32>
    %65 = tpu.matmul %63, %64, %cst_41 {dimension_numbers = #tpu.dot_dimension_numbers<[1], [0], [0], [1], [0, 0, 1, 1], [], []>} : vector<8x256xbf16>, vector<256x256xbf16>, vector<8x256xf32> -> vector<8x256xf32>
    %66 = arith.addf %62, %65 : vector<8x256xf32>
    %67 = math.tanh %66 : vector<8x256xf32>
    %c8_i32_42 = arith.constant 8 : i32
    %68 = arith.muli %c4_i32, %c8_i32_42 : i32
    %69 = tpu.assume_multiple %68, 8 : i32
    %70 = arith.index_cast %69 : i32 to index
    %c0_43 = arith.constant 0 : index
    %71 = vector.load %arg10[%70, %c0_43] : memref<256x256xf32, #tpu.memory_space<vmem>>, vector<8x256xf32>
    tpu.vector_store %arg10[%70, %c0_43], %67 {strides = array<i32>} : memref<256x256xf32, #tpu.memory_space<vmem>>, vector<8x256xf32>,
    %c5_i32 = arith.constant 5 : i32
    %72 = arith.index_cast %c5_i32 : i32 to index
    %c0_44 = arith.constant 0 : index
    %c0_45 = arith.constant 0 : index
    %73 = vector.load %arg9[%72, %c0_44, %c0_45] : memref<32x8x256xf32, #tpu.memory_space<vmem>>, vector<1x8x256xf32>
    %74 = vector.shape_cast %73 : vector<1x8x256xf32> to vector<8x256xf32>
    %75 = arith.truncf %67 : vector<8x256xf32> to vector<8x256xbf16>
    %c0_46 = arith.constant 0 : index
    %c0_47 = arith.constant 0 : index
    %76 = vector.load %arg7[%c0_46, %c0_47] : memref<256x256xbf16, #tpu.memory_space<vmem>>, vector<256x256xbf16>
    %cst_48 = arith.constant dense<0.000000e+00> : vector<8x256xf32>
    %77 = tpu.matmul %75, %76, %cst_48 {dimension_numbers = #tpu.dot_dimension_numbers<[1], [0], [0], [1], [0, 0, 1, 1], [], []>} : vector<8x256xbf16>, vector<256x256xbf16>, vector<8x256xf32> -> vector<8x256xf32>
    %78 = arith.addf %74, %77 : vector<8x256xf32>
    %79 = math.tanh %78 : vector<8x256xf32>
    %c8_i32_49 = arith.constant 8 : i32
    %80 = arith.muli %c5_i32, %c8_i32_49 : i32
    %81 = tpu.assume_multiple %80, 8 : i32
    %82 = arith.index_cast %81 : i32 to index
    %c0_50 = arith.constant 0 : index
    %83 = vector.load %arg10[%82, %c0_50] : memref<256x256xf32, #tpu.memory_space<vmem>>, vector<8x256xf32>
    tpu.vector_store %arg10[%82, %c0_50], %79 {strides = array<i32>} : memref<256x256xf32, #tpu.memory_space<vmem>>, vector<8x256xf32>,
    %c6_i32 = arith.constant 6 : i32
    %84 = arith.index_cast %c6_i32 : i32 to index
    %c0_51 = arith.constant 0 : index
    %c0_52 = arith.constant 0 : index
    %85 = vector.load %arg9[%84, %c0_51, %c0_52] : memref<32x8x256xf32, #tpu.memory_space<vmem>>, vector<1x8x256xf32>
    %86 = vector.shape_cast %85 : vector<1x8x256xf32> to vector<8x256xf32>
    %87 = arith.truncf %79 : vector<8x256xf32> to vector<8x256xbf16>
    %c0_53 = arith.constant 0 : index
    %c0_54 = arith.constant 0 : index
    %88 = vector.load %arg7[%c0_53, %c0_54] : memref<256x256xbf16, #tpu.memory_space<vmem>>, vector<256x256xbf16>
    %cst_55 = arith.constant dense<0.000000e+00> : vector<8x256xf32>
    %89 = tpu.matmul %87, %88, %cst_55 {dimension_numbers = #tpu.dot_dimension_numbers<[1], [0], [0], [1], [0, 0, 1, 1], [], []>} : vector<8x256xbf16>, vector<256x256xbf16>, vector<8x256xf32> -> vector<8x256xf32>
    %90 = arith.addf %86, %89 : vector<8x256xf32>
    %91 = math.tanh %90 : vector<8x256xf32>
    %c8_i32_56 = arith.constant 8 : i32
    %92 = arith.muli %c6_i32, %c8_i32_56 : i32
    %93 = tpu.assume_multiple %92, 8 : i32
    %94 = arith.index_cast %93 : i32 to index
    %c0_57 = arith.constant 0 : index
    %95 = vector.load %arg10[%94, %c0_57] : memref<256x256xf32, #tpu.memory_space<vmem>>, vector<8x256xf32>
    tpu.vector_store %arg10[%94, %c0_57], %91 {strides = array<i32>} : memref<256x256xf32, #tpu.memory_space<vmem>>, vector<8x256xf32>,
    %c7_i32 = arith.constant 7 : i32
    %96 = arith.index_cast %c7_i32 : i32 to index
    %c0_58 = arith.constant 0 : index
    %c0_59 = arith.constant 0 : index
    %97 = vector.load %arg9[%96, %c0_58, %c0_59] : memref<32x8x256xf32, #tpu.memory_space<vmem>>, vector<1x8x256xf32>
    %98 = vector.shape_cast %97 : vector<1x8x256xf32> to vector<8x256xf32>
    %99 = arith.truncf %91 : vector<8x256xf32> to vector<8x256xbf16>
    %c0_60 = arith.constant 0 : index
    %c0_61 = arith.constant 0 : index
    %100 = vector.load %arg7[%c0_60, %c0_61] : memref<256x256xbf16, #tpu.memory_space<vmem>>, vector<256x256xbf16>
    %cst_62 = arith.constant dense<0.000000e+00> : vector<8x256xf32>
    %101 = tpu.matmul %99, %100, %cst_62 {dimension_numbers = #tpu.dot_dimension_numbers<[1], [0], [0], [1], [0, 0, 1, 1], [], []>} : vector<8x256xbf16>, vector<256x256xbf16>, vector<8x256xf32> -> vector<8x256xf32>
    %102 = arith.addf %98, %101 : vector<8x256xf32>
    %103 = math.tanh %102 : vector<8x256xf32>
    %c8_i32_63 = arith.constant 8 : i32
    %104 = arith.muli %c7_i32, %c8_i32_63 : i32
    %105 = tpu.assume_multiple %104, 8 : i32
    %106 = arith.index_cast %105 : i32 to index
    %c0_64 = arith.constant 0 : index
    %107 = vector.load %arg10[%106, %c0_64] : memref<256x256xf32, #tpu.memory_space<vmem>>, vector<8x256xf32>
    tpu.vector_store %arg10[%106, %c0_64], %103 {strides = array<i32>} : memref<256x256xf32, #tpu.memory_space<vmem>>, vector<8x256xf32>,
    %c8_i32_65 = arith.constant 8 : i32
    %108 = arith.index_cast %c8_i32_65 : i32 to index
    %c0_66 = arith.constant 0 : index
    %c0_67 = arith.constant 0 : index
    %109 = vector.load %arg9[%108, %c0_66, %c0_67] : memref<32x8x256xf32, #tpu.memory_space<vmem>>, vector<1x8x256xf32>
    %110 = vector.shape_cast %109 : vector<1x8x256xf32> to vector<8x256xf32>
    %111 = arith.truncf %103 : vector<8x256xf32> to vector<8x256xbf16>
    %c0_68 = arith.constant 0 : index
    %c0_69 = arith.constant 0 : index
    %112 = vector.load %arg7[%c0_68, %c0_69] : memref<256x256xbf16, #tpu.memory_space<vmem>>, vector<256x256xbf16>
    %cst_70 = arith.constant dense<0.000000e+00> : vector<8x256xf32>
    %113 = tpu.matmul %111, %112, %cst_70 {dimension_numbers = #tpu.dot_dimension_numbers<[1], [0], [0], [1], [0, 0, 1, 1], [], []>} : vector<8x256xbf16>, vector<256x256xbf16>, vector<8x256xf32> -> vector<8x256xf32>
    %114 = arith.addf %110, %113 : vector<8x256xf32>
    %115 = math.tanh %114 : vector<8x256xf32>
    %c8_i32_71 = arith.constant 8 : i32
    %116 = arith.muli %c8_i32_65, %c8_i32_71 : i32
    %117 = tpu.assume_multiple %116, 8 : i32
    %118 = arith.index_cast %117 : i32 to index
    %c0_72 = arith.constant 0 : index
    %119 = vector.load %arg10[%118, %c0_72] : memref<256x256xf32, #tpu.memory_space<vmem>>, vector<8x256xf32>
    tpu.vector_store %arg10[%118, %c0_72], %115 {strides = array<i32>} : memref<256x256xf32, #tpu.memory_space<vmem>>, vector<8x256xf32>,
    %c9_i32 = arith.constant 9 : i32
    %120 = arith.index_cast %c9_i32 : i32 to index
    %c0_73 = arith.constant 0 : index
    %c0_74 = arith.constant 0 : index
    %121 = vector.load %arg9[%120, %c0_73, %c0_74] : memref<32x8x256xf32, #tpu.memory_space<vmem>>, vector<1x8x256xf32>
    %122 = vector.shape_cast %121 : vector<1x8x256xf32> to vector<8x256xf32>
    %123 = arith.truncf %115 : vector<8x256xf32> to vector<8x256xbf16>
    %c0_75 = arith.constant 0 : index
    %c0_76 = arith.constant 0 : index
    %124 = vector.load %arg7[%c0_75, %c0_76] : memref<256x256xbf16, #tpu.memory_space<vmem>>, vector<256x256xbf16>
    %cst_77 = arith.constant dense<0.000000e+00> : vector<8x256xf32>
    %125 = tpu.matmul %123, %124, %cst_77 {dimension_numbers = #tpu.dot_dimension_numbers<[1], [0], [0], [1], [0, 0, 1, 1], [], []>} : vector<8x256xbf16>, vector<256x256xbf16>, vector<8x256xf32> -> vector<8x256xf32>
    %126 = arith.addf %122, %125 : vector<8x256xf32>
    %127 = math.tanh %126 : vector<8x256xf32>
    %c8_i32_78 = arith.constant 8 : i32
    %128 = arith.muli %c9_i32, %c8_i32_78 : i32
    %129 = tpu.assume_multiple %128, 8 : i32
    %130 = arith.index_cast %129 : i32 to index
    %c0_79 = arith.constant 0 : index
    %131 = vector.load %arg10[%130, %c0_79] : memref<256x256xf32, #tpu.memory_space<vmem>>, vector<8x256xf32>
    tpu.vector_store %arg10[%130, %c0_79], %127 {strides = array<i32>} : memref<256x256xf32, #tpu.memory_space<vmem>>, vector<8x256xf32>,
    %c10_i32 = arith.constant 10 : i32
    %132 = arith.index_cast %c10_i32 : i32 to index
    %c0_80 = arith.constant 0 : index
    %c0_81 = arith.constant 0 : index
    %133 = vector.load %arg9[%132, %c0_80, %c0_81] : memref<32x8x256xf32, #tpu.memory_space<vmem>>, vector<1x8x256xf32>
    %134 = vector.shape_cast %133 : vector<1x8x256xf32> to vector<8x256xf32>
    %135 = arith.truncf %127 : vector<8x256xf32> to vector<8x256xbf16>
    %c0_82 = arith.constant 0 : index
    %c0_83 = arith.constant 0 : index
    %136 = vector.load %arg7[%c0_82, %c0_83] : memref<256x256xbf16, #tpu.memory_space<vmem>>, vector<256x256xbf16>
    %cst_84 = arith.constant dense<0.000000e+00> : vector<8x256xf32>
    %137 = tpu.matmul %135, %136, %cst_84 {dimension_numbers = #tpu.dot_dimension_numbers<[1], [0], [0], [1], [0, 0, 1, 1], [], []>} : vector<8x256xbf16>, vector<256x256xbf16>, vector<8x256xf32> -> vector<8x256xf32>
    %138 = arith.addf %134, %137 : vector<8x256xf32>
    %139 = math.tanh %138 : vector<8x256xf32>
    %c8_i32_85 = arith.constant 8 : i32
    %140 = arith.muli %c10_i32, %c8_i32_85 : i32
    %141 = tpu.assume_multiple %140, 8 : i32
    %142 = arith.index_cast %141 : i32 to index
    %c0_86 = arith.constant 0 : index
    %143 = vector.load %arg10[%142, %c0_86] : memref<256x256xf32, #tpu.memory_space<vmem>>, vector<8x256xf32>
    tpu.vector_store %arg10[%142, %c0_86], %139 {strides = array<i32>} : memref<256x256xf32, #tpu.memory_space<vmem>>, vector<8x256xf32>,
    %c11_i32 = arith.constant 11 : i32
    %144 = arith.index_cast %c11_i32 : i32 to index
    %c0_87 = arith.constant 0 : index
    %c0_88 = arith.constant 0 : index
    %145 = vector.load %arg9[%144, %c0_87, %c0_88] : memref<32x8x256xf32, #tpu.memory_space<vmem>>, vector<1x8x256xf32>
    %146 = vector.shape_cast %145 : vector<1x8x256xf32> to vector<8x256xf32>
    %147 = arith.truncf %139 : vector<8x256xf32> to vector<8x256xbf16>
    %c0_89 = arith.constant 0 : index
    %c0_90 = arith.constant 0 : index
    %148 = vector.load %arg7[%c0_89, %c0_90] : memref<256x256xbf16, #tpu.memory_space<vmem>>, vector<256x256xbf16>
    %cst_91 = arith.constant dense<0.000000e+00> : vector<8x256xf32>
    %149 = tpu.matmul %147, %148, %cst_91 {dimension_numbers = #tpu.dot_dimension_numbers<[1], [0], [0], [1], [0, 0, 1, 1], [], []>} : vector<8x256xbf16>, vector<256x256xbf16>, vector<8x256xf32> -> vector<8x256xf32>
    %150 = arith.addf %146, %149 : vector<8x256xf32>
    %151 = math.tanh %150 : vector<8x256xf32>
    %c8_i32_92 = arith.constant 8 : i32
    %152 = arith.muli %c11_i32, %c8_i32_92 : i32
    %153 = tpu.assume_multiple %152, 8 : i32
    %154 = arith.index_cast %153 : i32 to index
    %c0_93 = arith.constant 0 : index
    %155 = vector.load %arg10[%154, %c0_93] : memref<256x256xf32, #tpu.memory_space<vmem>>, vector<8x256xf32>
    tpu.vector_store %arg10[%154, %c0_93], %151 {strides = array<i32>} : memref<256x256xf32, #tpu.memory_space<vmem>>, vector<8x256xf32>,
    %c12_i32 = arith.constant 12 : i32
    %156 = arith.index_cast %c12_i32 : i32 to index
    %c0_94 = arith.constant 0 : index
    %c0_95 = arith.constant 0 : index
    %157 = vector.load %arg9[%156, %c0_94, %c0_95] : memref<32x8x256xf32, #tpu.memory_space<vmem>>, vector<1x8x256xf32>
    %158 = vector.shape_cast %157 : vector<1x8x256xf32> to vector<8x256xf32>
    %159 = arith.truncf %151 : vector<8x256xf32> to vector<8x256xbf16>
    %c0_96 = arith.constant 0 : index
    %c0_97 = arith.constant 0 : index
    %160 = vector.load %arg7[%c0_96, %c0_97] : memref<256x256xbf16, #tpu.memory_space<vmem>>, vector<256x256xbf16>
    %cst_98 = arith.constant dense<0.000000e+00> : vector<8x256xf32>
    %161 = tpu.matmul %159, %160, %cst_98 {dimension_numbers = #tpu.dot_dimension_numbers<[1], [0], [0], [1], [0, 0, 1, 1], [], []>} : vector<8x256xbf16>, vector<256x256xbf16>, vector<8x256xf32> -> vector<8x256xf32>
    %162 = arith.addf %158, %161 : vector<8x256xf32>
    %163 = math.tanh %162 : vector<8x256xf32>
    %c8_i32_99 = arith.constant 8 : i32
    %164 = arith.muli %c12_i32, %c8_i32_99 : i32
    %165 = tpu.assume_multiple %164, 8 : i32
    %166 = arith.index_cast %165 : i32 to index
    %c0_100 = arith.constant 0 : index
    %167 = vector.load %arg10[%166, %c0_100] : memref<256x256xf32, #tpu.memory_space<vmem>>, vector<8x256xf32>
    tpu.vector_store %arg10[%166, %c0_100], %163 {strides = array<i32>} : memref<256x256xf32, #tpu.memory_space<vmem>>, vector<8x256xf32>,
    %c13_i32 = arith.constant 13 : i32
    %168 = arith.index_cast %c13_i32 : i32 to index
    %c0_101 = arith.constant 0 : index
    %c0_102 = arith.constant 0 : index
    %169 = vector.load %arg9[%168, %c0_101, %c0_102] : memref<32x8x256xf32, #tpu.memory_space<vmem>>, vector<1x8x256xf32>
    %170 = vector.shape_cast %169 : vector<1x8x256xf32> to vector<8x256xf32>
    %171 = arith.truncf %163 : vector<8x256xf32> to vector<8x256xbf16>
    %c0_103 = arith.constant 0 : index
    %c0_104 = arith.constant 0 : index
    %172 = vector.load %arg7[%c0_103, %c0_104] : memref<256x256xbf16, #tpu.memory_space<vmem>>, vector<256x256xbf16>
    %cst_105 = arith.constant dense<0.000000e+00> : vector<8x256xf32>
    %173 = tpu.matmul %171, %172, %cst_105 {dimension_numbers = #tpu.dot_dimension_numbers<[1], [0], [0], [1], [0, 0, 1, 1], [], []>} : vector<8x256xbf16>, vector<256x256xbf16>, vector<8x256xf32> -> vector<8x256xf32>
    %174 = arith.addf %170, %173 : vector<8x256xf32>
    %175 = math.tanh %174 : vector<8x256xf32>
    %c8_i32_106 = arith.constant 8 : i32
    %176 = arith.muli %c13_i32, %c8_i32_106 : i32
    %177 = tpu.assume_multiple %176, 8 : i32
    %178 = arith.index_cast %177 : i32 to index
    %c0_107 = arith.constant 0 : index
    %179 = vector.load %arg10[%178, %c0_107] : memref<256x256xf32, #tpu.memory_space<vmem>>, vector<8x256xf32>
    tpu.vector_store %arg10[%178, %c0_107], %175 {strides = array<i32>} : memref<256x256xf32, #tpu.memory_space<vmem>>, vector<8x256xf32>,
    %c14_i32 = arith.constant 14 : i32
    %180 = arith.index_cast %c14_i32 : i32 to index
    %c0_108 = arith.constant 0 : index
    %c0_109 = arith.constant 0 : index
    %181 = vector.load %arg9[%180, %c0_108, %c0_109] : memref<32x8x256xf32, #tpu.memory_space<vmem>>, vector<1x8x256xf32>
    %182 = vector.shape_cast %181 : vector<1x8x256xf32> to vector<8x256xf32>
    %183 = arith.truncf %175 : vector<8x256xf32> to vector<8x256xbf16>
    %c0_110 = arith.constant 0 : index
    %c0_111 = arith.constant 0 : index
    %184 = vector.load %arg7[%c0_110, %c0_111] : memref<256x256xbf16, #tpu.memory_space<vmem>>, vector<256x256xbf16>
    %cst_112 = arith.constant dense<0.000000e+00> : vector<8x256xf32>
    %185 = tpu.matmul %183, %184, %cst_112 {dimension_numbers = #tpu.dot_dimension_numbers<[1], [0], [0], [1], [0, 0, 1, 1], [], []>} : vector<8x256xbf16>, vector<256x256xbf16>, vector<8x256xf32> -> vector<8x256xf32>
    %186 = arith.addf %182, %185 : vector<8x256xf32>
    %187 = math.tanh %186 : vector<8x256xf32>
    %c8_i32_113 = arith.constant 8 : i32
    %188 = arith.muli %c14_i32, %c8_i32_113 : i32
    %189 = tpu.assume_multiple %188, 8 : i32
    %190 = arith.index_cast %189 : i32 to index
    %c0_114 = arith.constant 0 : index
    %191 = vector.load %arg10[%190, %c0_114] : memref<256x256xf32, #tpu.memory_space<vmem>>, vector<8x256xf32>
    tpu.vector_store %arg10[%190, %c0_114], %187 {strides = array<i32>} : memref<256x256xf32, #tpu.memory_space<vmem>>, vector<8x256xf32>,
    %c15_i32 = arith.constant 15 : i32
    %192 = arith.index_cast %c15_i32 : i32 to index
    %c0_115 = arith.constant 0 : index
    %c0_116 = arith.constant 0 : index
    %193 = vector.load %arg9[%192, %c0_115, %c0_116] : memref<32x8x256xf32, #tpu.memory_space<vmem>>, vector<1x8x256xf32>
    %194 = vector.shape_cast %193 : vector<1x8x256xf32> to vector<8x256xf32>
    %195 = arith.truncf %187 : vector<8x256xf32> to vector<8x256xbf16>
    %c0_117 = arith.constant 0 : index
    %c0_118 = arith.constant 0 : index
    %196 = vector.load %arg7[%c0_117, %c0_118] : memref<256x256xbf16, #tpu.memory_space<vmem>>, vector<256x256xbf16>
    %cst_119 = arith.constant dense<0.000000e+00> : vector<8x256xf32>
    %197 = tpu.matmul %195, %196, %cst_119 {dimension_numbers = #tpu.dot_dimension_numbers<[1], [0], [0], [1], [0, 0, 1, 1], [], []>} : vector<8x256xbf16>, vector<256x256xbf16>, vector<8x256xf32> -> vector<8x256xf32>
    %198 = arith.addf %194, %197 : vector<8x256xf32>
    %199 = math.tanh %198 : vector<8x256xf32>
    %c8_i32_120 = arith.constant 8 : i32
    %200 = arith.muli %c15_i32, %c8_i32_120 : i32
    %201 = tpu.assume_multiple %200, 8 : i32
    %202 = arith.index_cast %201 : i32 to index
    %c0_121 = arith.constant 0 : index
    %203 = vector.load %arg10[%202, %c0_121] : memref<256x256xf32, #tpu.memory_space<vmem>>, vector<8x256xf32>
    tpu.vector_store %arg10[%202, %c0_121], %199 {strides = array<i32>} : memref<256x256xf32, #tpu.memory_space<vmem>>, vector<8x256xf32>,
    %c16_i32 = arith.constant 16 : i32
    %204 = arith.index_cast %c16_i32 : i32 to index
    %c0_122 = arith.constant 0 : index
    %c0_123 = arith.constant 0 : index
    %205 = vector.load %arg9[%204, %c0_122, %c0_123] : memref<32x8x256xf32, #tpu.memory_space<vmem>>, vector<1x8x256xf32>
    %206 = vector.shape_cast %205 : vector<1x8x256xf32> to vector<8x256xf32>
    %207 = arith.truncf %199 : vector<8x256xf32> to vector<8x256xbf16>
    %c0_124 = arith.constant 0 : index
    %c0_125 = arith.constant 0 : index
    %208 = vector.load %arg7[%c0_124, %c0_125] : memref<256x256xbf16, #tpu.memory_space<vmem>>, vector<256x256xbf16>
    %cst_126 = arith.constant dense<0.000000e+00> : vector<8x256xf32>
    %209 = tpu.matmul %207, %208, %cst_126 {dimension_numbers = #tpu.dot_dimension_numbers<[1], [0], [0], [1], [0, 0, 1, 1], [], []>} : vector<8x256xbf16>, vector<256x256xbf16>, vector<8x256xf32> -> vector<8x256xf32>
    %210 = arith.addf %206, %209 : vector<8x256xf32>
    %211 = math.tanh %210 : vector<8x256xf32>
    %c8_i32_127 = arith.constant 8 : i32
    %212 = arith.muli %c16_i32, %c8_i32_127 : i32
    %213 = tpu.assume_multiple %212, 8 : i32
    %214 = arith.index_cast %213 : i32 to index
    %c0_128 = arith.constant 0 : index
    %215 = vector.load %arg10[%214, %c0_128] : memref<256x256xf32, #tpu.memory_space<vmem>>, vector<8x256xf32>
    tpu.vector_store %arg10[%214, %c0_128], %211 {strides = array<i32>} : memref<256x256xf32, #tpu.memory_space<vmem>>, vector<8x256xf32>,
    %c17_i32 = arith.constant 17 : i32
    %216 = arith.index_cast %c17_i32 : i32 to index
    %c0_129 = arith.constant 0 : index
    %c0_130 = arith.constant 0 : index
    %217 = vector.load %arg9[%216, %c0_129, %c0_130] : memref<32x8x256xf32, #tpu.memory_space<vmem>>, vector<1x8x256xf32>
    %218 = vector.shape_cast %217 : vector<1x8x256xf32> to vector<8x256xf32>
    %219 = arith.truncf %211 : vector<8x256xf32> to vector<8x256xbf16>
    %c0_131 = arith.constant 0 : index
    %c0_132 = arith.constant 0 : index
    %220 = vector.load %arg7[%c0_131, %c0_132] : memref<256x256xbf16, #tpu.memory_space<vmem>>, vector<256x256xbf16>
    %cst_133 = arith.constant dense<0.000000e+00> : vector<8x256xf32>
    %221 = tpu.matmul %219, %220, %cst_133 {dimension_numbers = #tpu.dot_dimension_numbers<[1], [0], [0], [1], [0, 0, 1, 1], [], []>} : vector<8x256xbf16>, vector<256x256xbf16>, vector<8x256xf32> -> vector<8x256xf32>
    %222 = arith.addf %218, %221 : vector<8x256xf32>
    %223 = math.tanh %222 : vector<8x256xf32>
    %c8_i32_134 = arith.constant 8 : i32
    %224 = arith.muli %c17_i32, %c8_i32_134 : i32
    %225 = tpu.assume_multiple %224, 8 : i32
    %226 = arith.index_cast %225 : i32 to index
    %c0_135 = arith.constant 0 : index
    %227 = vector.load %arg10[%226, %c0_135] : memref<256x256xf32, #tpu.memory_space<vmem>>, vector<8x256xf32>
    tpu.vector_store %arg10[%226, %c0_135], %223 {strides = array<i32>} : memref<256x256xf32, #tpu.memory_space<vmem>>, vector<8x256xf32>,
    %c18_i32 = arith.constant 18 : i32
    %228 = arith.index_cast %c18_i32 : i32 to index
    %c0_136 = arith.constant 0 : index
    %c0_137 = arith.constant 0 : index
    %229 = vector.load %arg9[%228, %c0_136, %c0_137] : memref<32x8x256xf32, #tpu.memory_space<vmem>>, vector<1x8x256xf32>
    %230 = vector.shape_cast %229 : vector<1x8x256xf32> to vector<8x256xf32>
    %231 = arith.truncf %223 : vector<8x256xf32> to vector<8x256xbf16>
    %c0_138 = arith.constant 0 : index
    %c0_139 = arith.constant 0 : index
    %232 = vector.load %arg7[%c0_138, %c0_139] : memref<256x256xbf16, #tpu.memory_space<vmem>>, vector<256x256xbf16>
    %cst_140 = arith.constant dense<0.000000e+00> : vector<8x256xf32>
    %233 = tpu.matmul %231, %232, %cst_140 {dimension_numbers = #tpu.dot_dimension_numbers<[1], [0], [0], [1], [0, 0, 1, 1], [], []>} : vector<8x256xbf16>, vector<256x256xbf16>, vector<8x256xf32> -> vector<8x256xf32>
    %234 = arith.addf %230, %233 : vector<8x256xf32>
    %235 = math.tanh %234 : vector<8x256xf32>
    %c8_i32_141 = arith.constant 8 : i32
    %236 = arith.muli %c18_i32, %c8_i32_141 : i32
    %237 = tpu.assume_multiple %236, 8 : i32
    %238 = arith.index_cast %237 : i32 to index
    %c0_142 = arith.constant 0 : index
    %239 = vector.load %arg10[%238, %c0_142] : memref<256x256xf32, #tpu.memory_space<vmem>>, vector<8x256xf32>
    tpu.vector_store %arg10[%238, %c0_142], %235 {strides = array<i32>} : memref<256x256xf32, #tpu.memory_space<vmem>>, vector<8x256xf32>,
    %c19_i32 = arith.constant 19 : i32
    %240 = arith.index_cast %c19_i32 : i32 to index
    %c0_143 = arith.constant 0 : index
    %c0_144 = arith.constant 0 : index
    %241 = vector.load %arg9[%240, %c0_143, %c0_144] : memref<32x8x256xf32, #tpu.memory_space<vmem>>, vector<1x8x256xf32>
    %242 = vector.shape_cast %241 : vector<1x8x256xf32> to vector<8x256xf32>
    %243 = arith.truncf %235 : vector<8x256xf32> to vector<8x256xbf16>
    %c0_145 = arith.constant 0 : index
    %c0_146 = arith.constant 0 : index
    %244 = vector.load %arg7[%c0_145, %c0_146] : memref<256x256xbf16, #tpu.memory_space<vmem>>, vector<256x256xbf16>
    %cst_147 = arith.constant dense<0.000000e+00> : vector<8x256xf32>
    %245 = tpu.matmul %243, %244, %cst_147 {dimension_numbers = #tpu.dot_dimension_numbers<[1], [0], [0], [1], [0, 0, 1, 1], [], []>} : vector<8x256xbf16>, vector<256x256xbf16>, vector<8x256xf32> -> vector<8x256xf32>
    %246 = arith.addf %242, %245 : vector<8x256xf32>
    %247 = math.tanh %246 : vector<8x256xf32>
    %c8_i32_148 = arith.constant 8 : i32
    %248 = arith.muli %c19_i32, %c8_i32_148 : i32
    %249 = tpu.assume_multiple %248, 8 : i32
    %250 = arith.index_cast %249 : i32 to index
    %c0_149 = arith.constant 0 : index
    %251 = vector.load %arg10[%250, %c0_149] : memref<256x256xf32, #tpu.memory_space<vmem>>, vector<8x256xf32>
    tpu.vector_store %arg10[%250, %c0_149], %247 {strides = array<i32>} : memref<256x256xf32, #tpu.memory_space<vmem>>, vector<8x256xf32>,
    %c20_i32 = arith.constant 20 : i32
    %252 = arith.index_cast %c20_i32 : i32 to index
    %c0_150 = arith.constant 0 : index
    %c0_151 = arith.constant 0 : index
    %253 = vector.load %arg9[%252, %c0_150, %c0_151] : memref<32x8x256xf32, #tpu.memory_space<vmem>>, vector<1x8x256xf32>
    %254 = vector.shape_cast %253 : vector<1x8x256xf32> to vector<8x256xf32>
    %255 = arith.truncf %247 : vector<8x256xf32> to vector<8x256xbf16>
    %c0_152 = arith.constant 0 : index
    %c0_153 = arith.constant 0 : index
    %256 = vector.load %arg7[%c0_152, %c0_153] : memref<256x256xbf16, #tpu.memory_space<vmem>>, vector<256x256xbf16>
    %cst_154 = arith.constant dense<0.000000e+00> : vector<8x256xf32>
    %257 = tpu.matmul %255, %256, %cst_154 {dimension_numbers = #tpu.dot_dimension_numbers<[1], [0], [0], [1], [0, 0, 1, 1], [], []>} : vector<8x256xbf16>, vector<256x256xbf16>, vector<8x256xf32> -> vector<8x256xf32>
    %258 = arith.addf %254, %257 : vector<8x256xf32>
    %259 = math.tanh %258 : vector<8x256xf32>
    %c8_i32_155 = arith.constant 8 : i32
    %260 = arith.muli %c20_i32, %c8_i32_155 : i32
    %261 = tpu.assume_multiple %260, 8 : i32
    %262 = arith.index_cast %261 : i32 to index
    %c0_156 = arith.constant 0 : index
    %263 = vector.load %arg10[%262, %c0_156] : memref<256x256xf32, #tpu.memory_space<vmem>>, vector<8x256xf32>
    tpu.vector_store %arg10[%262, %c0_156], %259 {strides = array<i32>} : memref<256x256xf32, #tpu.memory_space<vmem>>, vector<8x256xf32>,
    %c21_i32 = arith.constant 21 : i32
    %264 = arith.index_cast %c21_i32 : i32 to index
    %c0_157 = arith.constant 0 : index
    %c0_158 = arith.constant 0 : index
    %265 = vector.load %arg9[%264, %c0_157, %c0_158] : memref<32x8x256xf32, #tpu.memory_space<vmem>>, vector<1x8x256xf32>
    %266 = vector.shape_cast %265 : vector<1x8x256xf32> to vector<8x256xf32>
    %267 = arith.truncf %259 : vector<8x256xf32> to vector<8x256xbf16>
    %c0_159 = arith.constant 0 : index
    %c0_160 = arith.constant 0 : index
    %268 = vector.load %arg7[%c0_159, %c0_160] : memref<256x256xbf16, #tpu.memory_space<vmem>>, vector<256x256xbf16>
    %cst_161 = arith.constant dense<0.000000e+00> : vector<8x256xf32>
    %269 = tpu.matmul %267, %268, %cst_161 {dimension_numbers = #tpu.dot_dimension_numbers<[1], [0], [0], [1], [0, 0, 1, 1], [], []>} : vector<8x256xbf16>, vector<256x256xbf16>, vector<8x256xf32> -> vector<8x256xf32>
    %270 = arith.addf %266, %269 : vector<8x256xf32>
    %271 = math.tanh %270 : vector<8x256xf32>
    %c8_i32_162 = arith.constant 8 : i32
    %272 = arith.muli %c21_i32, %c8_i32_162 : i32
    %273 = tpu.assume_multiple %272, 8 : i32
    %274 = arith.index_cast %273 : i32 to index
    %c0_163 = arith.constant 0 : index
    %275 = vector.load %arg10[%274, %c0_163] : memref<256x256xf32, #tpu.memory_space<vmem>>, vector<8x256xf32>
    tpu.vector_store %arg10[%274, %c0_163], %271 {strides = array<i32>} : memref<256x256xf32, #tpu.memory_space<vmem>>, vector<8x256xf32>,
    %c22_i32 = arith.constant 22 : i32
    %276 = arith.index_cast %c22_i32 : i32 to index
    %c0_164 = arith.constant 0 : index
    %c0_165 = arith.constant 0 : index
    %277 = vector.load %arg9[%276, %c0_164, %c0_165] : memref<32x8x256xf32, #tpu.memory_space<vmem>>, vector<1x8x256xf32>
    %278 = vector.shape_cast %277 : vector<1x8x256xf32> to vector<8x256xf32>
    %279 = arith.truncf %271 : vector<8x256xf32> to vector<8x256xbf16>
    %c0_166 = arith.constant 0 : index
    %c0_167 = arith.constant 0 : index
    %280 = vector.load %arg7[%c0_166, %c0_167] : memref<256x256xbf16, #tpu.memory_space<vmem>>, vector<256x256xbf16>
    %cst_168 = arith.constant dense<0.000000e+00> : vector<8x256xf32>
    %281 = tpu.matmul %279, %280, %cst_168 {dimension_numbers = #tpu.dot_dimension_numbers<[1], [0], [0], [1], [0, 0, 1, 1], [], []>} : vector<8x256xbf16>, vector<256x256xbf16>, vector<8x256xf32> -> vector<8x256xf32>
    %282 = arith.addf %278, %281 : vector<8x256xf32>
    %283 = math.tanh %282 : vector<8x256xf32>
    %c8_i32_169 = arith.constant 8 : i32
    %284 = arith.muli %c22_i32, %c8_i32_169 : i32
    %285 = tpu.assume_multiple %284, 8 : i32
    %286 = arith.index_cast %285 : i32 to index
    %c0_170 = arith.constant 0 : index
    %287 = vector.load %arg10[%286, %c0_170] : memref<256x256xf32, #tpu.memory_space<vmem>>, vector<8x256xf32>
    tpu.vector_store %arg10[%286, %c0_170], %283 {strides = array<i32>} : memref<256x256xf32, #tpu.memory_space<vmem>>, vector<8x256xf32>,
    %c23_i32 = arith.constant 23 : i32
    %288 = arith.index_cast %c23_i32 : i32 to index
    %c0_171 = arith.constant 0 : index
    %c0_172 = arith.constant 0 : index
    %289 = vector.load %arg9[%288, %c0_171, %c0_172] : memref<32x8x256xf32, #tpu.memory_space<vmem>>, vector<1x8x256xf32>
    %290 = vector.shape_cast %289 : vector<1x8x256xf32> to vector<8x256xf32>
    %291 = arith.truncf %283 : vector<8x256xf32> to vector<8x256xbf16>
    %c0_173 = arith.constant 0 : index
    %c0_174 = arith.constant 0 : index
    %292 = vector.load %arg7[%c0_173, %c0_174] : memref<256x256xbf16, #tpu.memory_space<vmem>>, vector<256x256xbf16>
    %cst_175 = arith.constant dense<0.000000e+00> : vector<8x256xf32>
    %293 = tpu.matmul %291, %292, %cst_175 {dimension_numbers = #tpu.dot_dimension_numbers<[1], [0], [0], [1], [0, 0, 1, 1], [], []>} : vector<8x256xbf16>, vector<256x256xbf16>, vector<8x256xf32> -> vector<8x256xf32>
    %294 = arith.addf %290, %293 : vector<8x256xf32>
    %295 = math.tanh %294 : vector<8x256xf32>
    %c8_i32_176 = arith.constant 8 : i32
    %296 = arith.muli %c23_i32, %c8_i32_176 : i32
    %297 = tpu.assume_multiple %296, 8 : i32
    %298 = arith.index_cast %297 : i32 to index
    %c0_177 = arith.constant 0 : index
    %299 = vector.load %arg10[%298, %c0_177] : memref<256x256xf32, #tpu.memory_space<vmem>>, vector<8x256xf32>
    tpu.vector_store %arg10[%298, %c0_177], %295 {strides = array<i32>} : memref<256x256xf32, #tpu.memory_space<vmem>>, vector<8x256xf32>,
    %c24_i32 = arith.constant 24 : i32
    %300 = arith.index_cast %c24_i32 : i32 to index
    %c0_178 = arith.constant 0 : index
    %c0_179 = arith.constant 0 : index
    %301 = vector.load %arg9[%300, %c0_178, %c0_179] : memref<32x8x256xf32, #tpu.memory_space<vmem>>, vector<1x8x256xf32>
    %302 = vector.shape_cast %301 : vector<1x8x256xf32> to vector<8x256xf32>
    %303 = arith.truncf %295 : vector<8x256xf32> to vector<8x256xbf16>
    %c0_180 = arith.constant 0 : index
    %c0_181 = arith.constant 0 : index
    %304 = vector.load %arg7[%c0_180, %c0_181] : memref<256x256xbf16, #tpu.memory_space<vmem>>, vector<256x256xbf16>
    %cst_182 = arith.constant dense<0.000000e+00> : vector<8x256xf32>
    %305 = tpu.matmul %303, %304, %cst_182 {dimension_numbers = #tpu.dot_dimension_numbers<[1], [0], [0], [1], [0, 0, 1, 1], [], []>} : vector<8x256xbf16>, vector<256x256xbf16>, vector<8x256xf32> -> vector<8x256xf32>
    %306 = arith.addf %302, %305 : vector<8x256xf32>
    %307 = math.tanh %306 : vector<8x256xf32>
    %c8_i32_183 = arith.constant 8 : i32
    %308 = arith.muli %c24_i32, %c8_i32_183 : i32
    %309 = tpu.assume_multiple %308, 8 : i32
    %310 = arith.index_cast %309 : i32 to index
    %c0_184 = arith.constant 0 : index
    %311 = vector.load %arg10[%310, %c0_184] : memref<256x256xf32, #tpu.memory_space<vmem>>, vector<8x256xf32>
    tpu.vector_store %arg10[%310, %c0_184], %307 {strides = array<i32>} : memref<256x256xf32, #tpu.memory_space<vmem>>, vector<8x256xf32>,
    %c25_i32 = arith.constant 25 : i32
    %312 = arith.index_cast %c25_i32 : i32 to index
    %c0_185 = arith.constant 0 : index
    %c0_186 = arith.constant 0 : index
    %313 = vector.load %arg9[%312, %c0_185, %c0_186] : memref<32x8x256xf32, #tpu.memory_space<vmem>>, vector<1x8x256xf32>
    %314 = vector.shape_cast %313 : vector<1x8x256xf32> to vector<8x256xf32>
    %315 = arith.truncf %307 : vector<8x256xf32> to vector<8x256xbf16>
    %c0_187 = arith.constant 0 : index
    %c0_188 = arith.constant 0 : index
    %316 = vector.load %arg7[%c0_187, %c0_188] : memref<256x256xbf16, #tpu.memory_space<vmem>>, vector<256x256xbf16>
    %cst_189 = arith.constant dense<0.000000e+00> : vector<8x256xf32>
    %317 = tpu.matmul %315, %316, %cst_189 {dimension_numbers = #tpu.dot_dimension_numbers<[1], [0], [0], [1], [0, 0, 1, 1], [], []>} : vector<8x256xbf16>, vector<256x256xbf16>, vector<8x256xf32> -> vector<8x256xf32>
    %318 = arith.addf %314, %317 : vector<8x256xf32>
    %319 = math.tanh %318 : vector<8x256xf32>
    %c8_i32_190 = arith.constant 8 : i32
    %320 = arith.muli %c25_i32, %c8_i32_190 : i32
    %321 = tpu.assume_multiple %320, 8 : i32
    %322 = arith.index_cast %321 : i32 to index
    %c0_191 = arith.constant 0 : index
    %323 = vector.load %arg10[%322, %c0_191] : memref<256x256xf32, #tpu.memory_space<vmem>>, vector<8x256xf32>
    tpu.vector_store %arg10[%322, %c0_191], %319 {strides = array<i32>} : memref<256x256xf32, #tpu.memory_space<vmem>>, vector<8x256xf32>,
    %c26_i32 = arith.constant 26 : i32
    %324 = arith.index_cast %c26_i32 : i32 to index
    %c0_192 = arith.constant 0 : index
    %c0_193 = arith.constant 0 : index
    %325 = vector.load %arg9[%324, %c0_192, %c0_193] : memref<32x8x256xf32, #tpu.memory_space<vmem>>, vector<1x8x256xf32>
    %326 = vector.shape_cast %325 : vector<1x8x256xf32> to vector<8x256xf32>
    %327 = arith.truncf %319 : vector<8x256xf32> to vector<8x256xbf16>
    %c0_194 = arith.constant 0 : index
    %c0_195 = arith.constant 0 : index
    %328 = vector.load %arg7[%c0_194, %c0_195] : memref<256x256xbf16, #tpu.memory_space<vmem>>, vector<256x256xbf16>
    %cst_196 = arith.constant dense<0.000000e+00> : vector<8x256xf32>
    %329 = tpu.matmul %327, %328, %cst_196 {dimension_numbers = #tpu.dot_dimension_numbers<[1], [0], [0], [1], [0, 0, 1, 1], [], []>} : vector<8x256xbf16>, vector<256x256xbf16>, vector<8x256xf32> -> vector<8x256xf32>
    %330 = arith.addf %326, %329 : vector<8x256xf32>
    %331 = math.tanh %330 : vector<8x256xf32>
    %c8_i32_197 = arith.constant 8 : i32
    %332 = arith.muli %c26_i32, %c8_i32_197 : i32
    %333 = tpu.assume_multiple %332, 8 : i32
    %334 = arith.index_cast %333 : i32 to index
    %c0_198 = arith.constant 0 : index
    %335 = vector.load %arg10[%334, %c0_198] : memref<256x256xf32, #tpu.memory_space<vmem>>, vector<8x256xf32>
    tpu.vector_store %arg10[%334, %c0_198], %331 {strides = array<i32>} : memref<256x256xf32, #tpu.memory_space<vmem>>, vector<8x256xf32>,
    %c27_i32 = arith.constant 27 : i32
    %336 = arith.index_cast %c27_i32 : i32 to index
    %c0_199 = arith.constant 0 : index
    %c0_200 = arith.constant 0 : index
    %337 = vector.load %arg9[%336, %c0_199, %c0_200] : memref<32x8x256xf32, #tpu.memory_space<vmem>>, vector<1x8x256xf32>
    %338 = vector.shape_cast %337 : vector<1x8x256xf32> to vector<8x256xf32>
    %339 = arith.truncf %331 : vector<8x256xf32> to vector<8x256xbf16>
    %c0_201 = arith.constant 0 : index
    %c0_202 = arith.constant 0 : index
    %340 = vector.load %arg7[%c0_201, %c0_202] : memref<256x256xbf16, #tpu.memory_space<vmem>>, vector<256x256xbf16>
    %cst_203 = arith.constant dense<0.000000e+00> : vector<8x256xf32>
    %341 = tpu.matmul %339, %340, %cst_203 {dimension_numbers = #tpu.dot_dimension_numbers<[1], [0], [0], [1], [0, 0, 1, 1], [], []>} : vector<8x256xbf16>, vector<256x256xbf16>, vector<8x256xf32> -> vector<8x256xf32>
    %342 = arith.addf %338, %341 : vector<8x256xf32>
    %343 = math.tanh %342 : vector<8x256xf32>
    %c8_i32_204 = arith.constant 8 : i32
    %344 = arith.muli %c27_i32, %c8_i32_204 : i32
    %345 = tpu.assume_multiple %344, 8 : i32
    %346 = arith.index_cast %345 : i32 to index
    %c0_205 = arith.constant 0 : index
    %347 = vector.load %arg10[%346, %c0_205] : memref<256x256xf32, #tpu.memory_space<vmem>>, vector<8x256xf32>
    tpu.vector_store %arg10[%346, %c0_205], %343 {strides = array<i32>} : memref<256x256xf32, #tpu.memory_space<vmem>>, vector<8x256xf32>,
    %c28_i32 = arith.constant 28 : i32
    %348 = arith.index_cast %c28_i32 : i32 to index
    %c0_206 = arith.constant 0 : index
    %c0_207 = arith.constant 0 : index
    %349 = vector.load %arg9[%348, %c0_206, %c0_207] : memref<32x8x256xf32, #tpu.memory_space<vmem>>, vector<1x8x256xf32>
    %350 = vector.shape_cast %349 : vector<1x8x256xf32> to vector<8x256xf32>
    %351 = arith.truncf %343 : vector<8x256xf32> to vector<8x256xbf16>
    %c0_208 = arith.constant 0 : index
    %c0_209 = arith.constant 0 : index
    %352 = vector.load %arg7[%c0_208, %c0_209] : memref<256x256xbf16, #tpu.memory_space<vmem>>, vector<256x256xbf16>
    %cst_210 = arith.constant dense<0.000000e+00> : vector<8x256xf32>
    %353 = tpu.matmul %351, %352, %cst_210 {dimension_numbers = #tpu.dot_dimension_numbers<[1], [0], [0], [1], [0, 0, 1, 1], [], []>} : vector<8x256xbf16>, vector<256x256xbf16>, vector<8x256xf32> -> vector<8x256xf32>
    %354 = arith.addf %350, %353 : vector<8x256xf32>
    %355 = math.tanh %354 : vector<8x256xf32>
    %c8_i32_211 = arith.constant 8 : i32
    %356 = arith.muli %c28_i32, %c8_i32_211 : i32
    %357 = tpu.assume_multiple %356, 8 : i32
    %358 = arith.index_cast %357 : i32 to index
    %c0_212 = arith.constant 0 : index
    %359 = vector.load %arg10[%358, %c0_212] : memref<256x256xf32, #tpu.memory_space<vmem>>, vector<8x256xf32>
    tpu.vector_store %arg10[%358, %c0_212], %355 {strides = array<i32>} : memref<256x256xf32, #tpu.memory_space<vmem>>, vector<8x256xf32>,
    %c29_i32 = arith.constant 29 : i32
    %360 = arith.index_cast %c29_i32 : i32 to index
    %c0_213 = arith.constant 0 : index
    %c0_214 = arith.constant 0 : index
    %361 = vector.load %arg9[%360, %c0_213, %c0_214] : memref<32x8x256xf32, #tpu.memory_space<vmem>>, vector<1x8x256xf32>
    %362 = vector.shape_cast %361 : vector<1x8x256xf32> to vector<8x256xf32>
    %363 = arith.truncf %355 : vector<8x256xf32> to vector<8x256xbf16>
    %c0_215 = arith.constant 0 : index
    %c0_216 = arith.constant 0 : index
    %364 = vector.load %arg7[%c0_215, %c0_216] : memref<256x256xbf16, #tpu.memory_space<vmem>>, vector<256x256xbf16>
    %cst_217 = arith.constant dense<0.000000e+00> : vector<8x256xf32>
    %365 = tpu.matmul %363, %364, %cst_217 {dimension_numbers = #tpu.dot_dimension_numbers<[1], [0], [0], [1], [0, 0, 1, 1], [], []>} : vector<8x256xbf16>, vector<256x256xbf16>, vector<8x256xf32> -> vector<8x256xf32>
    %366 = arith.addf %362, %365 : vector<8x256xf32>
    %367 = math.tanh %366 : vector<8x256xf32>
    %c8_i32_218 = arith.constant 8 : i32
    %368 = arith.muli %c29_i32, %c8_i32_218 : i32
    %369 = tpu.assume_multiple %368, 8 : i32
    %370 = arith.index_cast %369 : i32 to index
    %c0_219 = arith.constant 0 : index
    %371 = vector.load %arg10[%370, %c0_219] : memref<256x256xf32, #tpu.memory_space<vmem>>, vector<8x256xf32>
    tpu.vector_store %arg10[%370, %c0_219], %367 {strides = array<i32>} : memref<256x256xf32, #tpu.memory_space<vmem>>, vector<8x256xf32>,
    %c30_i32 = arith.constant 30 : i32
    %372 = arith.index_cast %c30_i32 : i32 to index
    %c0_220 = arith.constant 0 : index
    %c0_221 = arith.constant 0 : index
    %373 = vector.load %arg9[%372, %c0_220, %c0_221] : memref<32x8x256xf32, #tpu.memory_space<vmem>>, vector<1x8x256xf32>
    %374 = vector.shape_cast %373 : vector<1x8x256xf32> to vector<8x256xf32>
    %375 = arith.truncf %367 : vector<8x256xf32> to vector<8x256xbf16>
    %c0_222 = arith.constant 0 : index
    %c0_223 = arith.constant 0 : index
    %376 = vector.load %arg7[%c0_222, %c0_223] : memref<256x256xbf16, #tpu.memory_space<vmem>>, vector<256x256xbf16>
    %cst_224 = arith.constant dense<0.000000e+00> : vector<8x256xf32>
    %377 = tpu.matmul %375, %376, %cst_224 {dimension_numbers = #tpu.dot_dimension_numbers<[1], [0], [0], [1], [0, 0, 1, 1], [], []>} : vector<8x256xbf16>, vector<256x256xbf16>, vector<8x256xf32> -> vector<8x256xf32>
    %378 = arith.addf %374, %377 : vector<8x256xf32>
    %379 = math.tanh %378 : vector<8x256xf32>
    %c8_i32_225 = arith.constant 8 : i32
    %380 = arith.muli %c30_i32, %c8_i32_225 : i32
    %381 = tpu.assume_multiple %380, 8 : i32
    %382 = arith.index_cast %381 : i32 to index
    %c0_226 = arith.constant 0 : index
    %383 = vector.load %arg10[%382, %c0_226] : memref<256x256xf32, #tpu.memory_space<vmem>>, vector<8x256xf32>
    tpu.vector_store %arg10[%382, %c0_226], %379 {strides = array<i32>} : memref<256x256xf32, #tpu.memory_space<vmem>>, vector<8x256xf32>,
    %c31_i32 = arith.constant 31 : i32
    %384 = arith.index_cast %c31_i32 : i32 to index
    %c0_227 = arith.constant 0 : index
    %c0_228 = arith.constant 0 : index
    %385 = vector.load %arg9[%384, %c0_227, %c0_228] : memref<32x8x256xf32, #tpu.memory_space<vmem>>, vector<1x8x256xf32>
    %386 = vector.shape_cast %385 : vector<1x8x256xf32> to vector<8x256xf32>
    %387 = arith.truncf %379 : vector<8x256xf32> to vector<8x256xbf16>
    %c0_229 = arith.constant 0 : index
    %c0_230 = arith.constant 0 : index
    %388 = vector.load %arg7[%c0_229, %c0_230] : memref<256x256xbf16, #tpu.memory_space<vmem>>, vector<256x256xbf16>
    %cst_231 = arith.constant dense<0.000000e+00> : vector<8x256xf32>
    %389 = tpu.matmul %387, %388, %cst_231 {dimension_numbers = #tpu.dot_dimension_numbers<[1], [0], [0], [1], [0, 0, 1, 1], [], []>} : vector<8x256xbf16>, vector<256x256xbf16>, vector<8x256xf32> -> vector<8x256xf32>
    %390 = arith.addf %386, %389 : vector<8x256xf32>
    %391 = math.tanh %390 : vector<8x256xf32>
    %c8_i32_232 = arith.constant 8 : i32
    %392 = arith.muli %c31_i32, %c8_i32_232 : i32
    %393 = tpu.assume_multiple %392, 8 : i32
    %394 = arith.index_cast %393 : i32 to index
    %c0_233 = arith.constant 0 : index
    %395 = vector.load %arg10[%394, %c0_233] : memref<256x256xf32, #tpu.memory_space<vmem>>, vector<8x256xf32>
    tpu.vector_store %arg10[%394, %c0_233], %391 {strides = array<i32>} : memref<256x256xf32, #tpu.memory_space<vmem>>, vector<8x256xf32>,
    %c32_i32_234 = arith.constant 32 : i32
    %c0_235 = arith.constant 0 : index
    %c0_236 = arith.constant 0 : index
    %396 = vector.load %arg8[%c0_235, %c0_236] : memref<8x256xf32, #tpu.memory_space<vmem>>, vector<8x256xf32>
    tpu.vector_store %arg8[%c0_235, %c0_236], %391 {strides = array<i32>} : memref<8x256xf32, #tpu.memory_space<vmem>>, vector<8x256xf32>,
    %c34_i32 = arith.constant 34 : i32
    %397 = arith.cmpi sle, %0, %c34_i32 : i32
    %c32_i32_237 = arith.constant 32 : i32
    %398 = arith.addi %0, %c32_i32_237 : i32
    %c34_i32_238 = arith.constant 34 : i32
    %399 = arith.cmpi sgt, %398, %c34_i32_238 : i32
    %400 = arith.andi %397, %399 : i1
    %401 = arith.extui %400 : i1 to i32
    %c0_i32_239 = arith.constant 0 : i32
    %402 = arith.cmpi ne, %401, %c0_i32_239 : i32
    scf.if %402 {
      %c34_i32_244 = arith.constant 34 : i32
      %406 = arith.subi %c34_i32_244, %0 : i32
      %c8_i32_245 = arith.constant 8 : i32
      %407 = arith.muli %406, %c8_i32_245 : i32
      %408 = tpu.assume_multiple %407, 8 : i32
      %409 = arith.index_cast %408 : i32 to index
      %c0_246 = arith.constant 0 : index
      %410 = vector.load %arg10[%409, %c0_246] : memref<256x256xf32, #tpu.memory_space<vmem>>, vector<8x256xf32>
      %c0_247 = arith.constant 0 : index
      %c0_248 = arith.constant 0 : index
      %411 = vector.load %arg6[%c0_247, %c0_248] : memref<8x256xf32, #tpu.memory_space<vmem>>, vector<8x256xf32>
      tpu.vector_store %arg6[%c0_247, %c0_248], %410 {strides = array<i32>} : memref<8x256xf32, #tpu.memory_space<vmem>>, vector<8x256xf32>,
    } else {
    }
    %c0_240 = arith.constant 0 : index
    %c0_241 = arith.constant 0 : index
    %403 = vector.load %arg10[%c0_240, %c0_241] : memref<256x256xf32, #tpu.memory_space<vmem>>, vector<256x256xf32>
    %404 = arith.truncf %403 : vector<256x256xf32> to vector<256x256xbf16>
    %c0_242 = arith.constant 0 : index
    %c0_243 = arith.constant 0 : index
    %405 = vector.load %arg5[%c0_242, %c0_243] : memref<256x256xbf16, #tpu.memory_space<vmem>>, vector<256x256xbf16>
    tpu.vector_store %arg5[%c0_242, %c0_243], %404 {strides = array<i32>} : memref<256x256xbf16, #tpu.memory_space<vmem>>, vector<256x256xbf16>,
    return
  }
  func.func @transform_0(%arg0: i32) -> (i32, i32, i32) {
    %c0_i32 = arith.constant 0 : i32
    %c0_i32_0 = arith.constant 0 : i32
    %c0_i32_1 = arith.constant 0 : i32
    return %arg0, %c0_i32, %c0_i32_0 : i32, i32, i32
  }
  func.func @transform_1(%arg0: i32) -> (i32, i32) {
    %c0_i32 = arith.constant 0 : i32
    %c0_i32_0 = arith.constant 0 : i32
    %c0_i32_1 = arith.constant 0 : i32
    return %c0_i32, %c0_i32_0 : i32, i32
  }
  func.func @transform_3(%arg0: i32) -> (i32, i32) {
    %c0_i32 = arith.constant 0 : i32
    %c0_i32_0 = arith.constant 0 : i32
    %c0_i32_1 = arith.constant 0 : i32
    return %c0_i32, %c0_i32_0 : i32, i32
  }
  func.func @transform_4(%arg0: i32) -> (i32, i32) {
    %c0_i32 = arith.constant 0 : i32
    %c0_i32_0 = arith.constant 0 : i32
    return %arg0, %c0_i32 : i32, i32
  }
  func.func @transform_5(%arg0: i32) -> (i32, i32) {
    %c0_i32 = arith.constant 0 : i32
    %c0_i32_0 = arith.constant 0 : i32
    %c0_i32_1 = arith.constant 0 : i32
    return %c0_i32, %c0_i32_0 : i32, i32
  }
}

</mosaic_0001>

<llo_original>
// kernel: tpu_custom_call.1
$region0: #{tpu_custom_call.1}
  #allocation0 [shape = 'u32[]', space=smem, size = 0x4, offset = 0x4, fixed_abs, tag = 'smem constant byte address 0x4 - core index']
  #allocation1 [shape = 'u32[144,128]{1,0:T(1,128)}', space=vmem, size = 0x12000, scoped, tag = 'internal scratch']
  #allocation2 [shape = 'bf16[256,256]{1,0:T(16,128)(2,1)}', space=vmem, size = 0x20000, scoped, tag = 'scratch operand']
  #allocation3 [shape = 'f32[8,256]{1,0:T(8,128)}', space=vmem, size = 0x2000, scoped, tag = 'scratch operand']
  #allocation4 [shape = 'f32[32,8,256]{2,1,0:T(8,128)}', space=vmem, size = 0x40000, scoped, tag = 'scratch operand']
  #allocation5 [shape = 'f32[256,256]{1,0:T(8,128)}', space=vmem, size = 0x40000, scoped, tag = 'scratch operand']
  #allocation6 [shape = 's32[1]{0}', space=sflag, size = 0x4, scoped, tag = 'scratch operand']
  #allocation15 [shape = 's32[]', space=sflag, size = 0x4, offset = 0, fixed_abs, tag = 'sflag constant byte address 0x0 - dummy sync flag']
  %s0 = inlined_call_operand.hbm [shape: bf16[64,8,256], index: 0, kind: input, shape index: {}]
  %s1 = inlined_call_operand.hbm [shape: f32[8,256], index: 1, kind: input, shape index: {}]
  %s2 = inlined_call_operand.hbm [shape: bf16[256,256], index: 2, kind: input, shape index: {}]
  %s3 = inlined_call_operand.vmem [shape: f32[1,256], index: 3, kind: input, shape index: {}]
  %s4 = inlined_call_operand.hbm [shape: bf16[512,256], index: 4, kind: output, shape index: {0}]
  %s5 = inlined_call_operand.hbm [shape: f32[8,256], index: 5, kind: output, shape index: {1}]
  %6 = xla_tuple %s4, %s5
  %s7 = sld [smem:[#allocation0]]
  $region69: #{tpu_custom_call.1} parent=0
    _
  %s9 = ssub.s32 1, %s7
  %s10 = scalar_select 0, %s9, %s7
  $region1: #{tpu_custom_call.1} parent=0
    #allocation7 [shape = 'u8[262144]{0}', space=vmem, size = 0x40000, scoped, tag = 'input window, operand 0']
    #allocation8 [shape = 's32[2]{0}', space=sflag, size = 0x8, scoped, tag = 'scoped memory for tpu_custom_call.1']
    #allocation9 [shape = 's32[2]{0}', space=sflag, size = 0x8, scoped, tag = 'scoped memory for tpu_custom_call.1']
    #allocation10 [shape = 'u8[8192]{0}', space=vmem, size = 0x2000, scoped, tag = 'input window, operand 1, single buffered']
    #allocation11 [shape = 's32[1]{0}', space=sflag, size = 0x4, scoped, tag = 'scoped memory for tpu_custom_call.1']
    #allocation12 [shape = 'u8[262144]{0}', space=vmem, size = 0x40000, scoped, tag = 'output window, operand 0']
    #allocation13 [shape = 'u8[8192]{0}', space=vmem, size = 0x2000, scoped, tag = 'output window, operand 1, single buffered']
    #allocation14 [shape = 's32[1]{0}', space=sflag, size = 0x4, scoped, tag = 'scoped memory for tpu_custom_call.1']
    %11 = vsyncpa [#allocation8], 0
    %s12 = scalar_lea.sflag [#allocation8], 1
    %13 = vsyncpa %s12, 0
    %14 = vsyncpa [#allocation11], 0
    %15 = vsyncpa [#allocation9], 0
    %s16 = scalar_lea.sflag [#allocation9], 1
    %17 = vsyncpa %s16, 0
    %18 = vsyncpa [#allocation14], 0
    loop: start=0, step=1, limit=4
    $region2: #{tpu_custom_call.1} parent=1 // loop_pre_header
      _
    $region3: #{tpu_custom_call.1} parent=1 // loop_header
      %s20 = sphi 0, %s24
      %p21 = scmp.ge.s32.totalorder %s20, 4
      %s30 = sphi 0, %s32
      %s33 = sphi 0, %s30
      %s34 = sphi 0, %s33
      %s50 = sphi 0, %s34
      %s54 = sphi 0, %s54
      %s56 = sphi 0, %s54
      %s57 = sphi 0, %s56
      %s71 = sphi 0, %s57
      %s75 = sphi 0, %s75
      %s77 = sphi 0, %s75
      %s78 = sphi 0, %s77
      %s92 = sphi 0, %s78
      %s98 = sphi 0, %s100
      %s101 = sphi 0, %s98
      %s102 = sphi 0, %s101
      %s118 = sphi 0, %s102
      %s122 = sphi 0, %s122
      %s124 = sphi 0, %s122
      %s125 = sphi 0, %s124
      %s139 = sphi 0, %s125
    $region4: #{tpu_custom_call.1} parent=1 // loop_header_branch
      %23 = sbr.rel (%p21) target = $region8
    $region5: #{tpu_custom_call.1} parent=1 // loop_body
      %s25 = ssub.s32 %s20, 1
      %s26 = ssub.s32 %s20, 2
      %s27 = sadd.s32 %s20, 1
      %s28 = ssub.s32 %s20, %s27
      %p29 = scmp.eq.s32.totalorder %s28, 0
      %s31 = sadd.s32 %s30, 1
      %s32 = scalar_select %p29, %s30, %s31
      %p35 = pneg %p29
      %p36 = scmp.eq.s32.totalorder %s20, 1
      %p37 = por %p35, %p36
      %p38 = scmp.ne.s32.totalorder %s30, %s33
      %p39 = scmp.eq.s32.totalorder %s20, 0
      %p40 = por %p38, %p39
      %p41 = scmp.ne.s32.totalorder %s30, %s33
      %p42 = scmp.eq.s32.totalorder %s25, 1
      %p43 = por %p41, %p42
      %p44 = scmp.ne.s32.totalorder %s33, %s34
      %p45 = scmp.eq.s32.totalorder %s25, 0
      %p46 = por %p44, %p45
      %p47 = scmp.ne.s32.totalorder %s33, %s34
      %p48 = scmp.eq.s32.totalorder %s26, 1
      %p49 = por %p47, %p48
      %p51 = scmp.ne.s32.totalorder %s34, %s50
      %p52 = scmp.eq.s32.totalorder %s26, 0
      %p53 = por %p51, %p52
      %s55 = sadd.s32 %s54, 1
      %p58 = scmp.eq.s32.totalorder %s20, 1
      %p59 = scmp.ne.s32.totalorder %s54, %s56
      %p60 = scmp.eq.s32.totalorder %s20, 0
      %p61 = por %p59, %p60
      %p62 = scmp.ne.s32.totalorder %s54, %s56
      %p63 = scmp.eq.s32.totalorder %s25, 1
      %p64 = por %p62, %p63
      %p65 = scmp.ne.s32.totalorder %s56, %s57
      %p66 = scmp.eq.s32.totalorder %s25, 0
      %p67 = por %p65, %p66
      %p68 = scmp.ne.s32.totalorder %s56, %s57
      %p69 = scmp.eq.s32.totalorder %s26, 1
      %p70 = por %p68, %p69
      %p72 = scmp.ne.s32.totalorder %s57, %s71
      %p73 = scmp.eq.s32.totalorder %s26, 0
      %p74 = por %p72, %p73
      %s76 = sadd.s32 %s75, 1
      %p79 = scmp.eq.s32.totalorder %s20, 1
      %p80 = scmp.ne.s32.totalorder %s75, %s77
      %p81 = scmp.eq.s32.totalorder %s20, 0
      %p82 = por %p80, %p81
      %p83 = scmp.ne.s32.totalorder %s75, %s77
      %p84 = scmp.eq.s32.totalorder %s25, 1
      %p85 = por %p83, %p84
      %p86 = scmp.ne.s32.totalorder %s77, %s78
      %p87 = scmp.eq.s32.totalorder %s25, 0
      %p88 = por %p86, %p87
      %p89 = scmp.ne.s32.totalorder %s77, %s78
      %p90 = scmp.eq.s32.totalorder %s26, 1
      %p91 = por %p89, %p90
      %p93 = scmp.ne.s32.totalorder %s78, %s92
      %p94 = scmp.eq.s32.totalorder %s26, 0
      %p95 = por %p93, %p94
      %s96 = ssub.s32 %s20, %s27
      %p97 = scmp.eq.s32.totalorder %s96, 0
      %s99 = sadd.s32 %s98, 1
      %s100 = scalar_select %p97, %s98, %s99
      %p103 = pneg %p97
      %p104 = scmp.eq.s32.totalorder %s20, 1
      %p105 = por %p103, %p104
      %p106 = scmp.ne.s32.totalorder %s98, %s101
      %p107 = scmp.eq.s32.totalorder %s20, 0
      %p108 = por %p106, %p107
      %p109 = scmp.ne.s32.totalorder %s98, %s101
      %p110 = scmp.eq.s32.totalorder %s25, 1
      %p111 = por %p109, %p110
      %p112 = scmp.ne.s32.totalorder %s101, %s102
      %p113 = scmp.eq.s32.totalorder %s25, 0
      %p114 = por %p112, %p113
      %p115 = scmp.ne.s32.totalorder %s101, %s102
      %p116 = scmp.eq.s32.totalorder %s26, 1
      %p117 = por %p115, %p116
      %p119 = scmp.ne.s32.totalorder %s102, %s118
      %p120 = scmp.eq.s32.totalorder %s26, 0
      %p121 = por %p119, %p120
      %s123 = sadd.s32 %s122, 1
      %p126 = scmp.eq.s32.totalorder %s20, 1
      %p127 = scmp.ne.s32.totalorder %s122, %s124
      %p128 = scmp.eq.s32.totalorder %s20, 0
      %p129 = por %p127, %p128
      %p130 = scmp.ne.s32.totalorder %s122, %s124
      %p131 = scmp.eq.s32.totalorder %s25, 1
      %p132 = por %p130, %p131
      %p133 = scmp.ne.s32.totalorder %s124, %s125
      %p134 = scmp.eq.s32.totalorder %s25, 0
      %p135 = por %p133, %p134
      %p136 = scmp.ne.s32.totalorder %s124, %s125
      %p137 = scmp.eq.s32.totalorder %s26, 1
      %p138 = por %p136, %p137
      %p140 = scmp.ne.s32.totalorder %s125, %s139
      %p141 = scmp.eq.s32.totalorder %s26, 0
      %p142 = por %p140, %p141
      %p143 = scmp.le.s32.totalorder 1, %s20
      %p144 = scmp.lt.s32.totalorder %s20, 3
      %p145 = pnand %p143, %p144
      %p146 = pneg %p145
      // Predicated region
      $region9: #{tpu_custom_call.1} parent=5 // pred_check
        _
      $region10: #{tpu_custom_call.1} parent=5 // pred_check_branch
        %148 = sbr.rel (%p145) target = $region12
      $region11: #{tpu_custom_call.1} parent=5 // pred_region
        %s149 = ssub.s32 %s20, 1
        // Predicated region
        $region13: #{tpu_custom_call.1} parent=11 // pred_check
          %p150 = pneg %p67
        $region14: #{tpu_custom_call.1} parent=11 // pred_check_branch
          %152 = sbr.rel (%p150) target = $region16
        $region15: #{tpu_custom_call.1} parent=11 // pred_region
          %s154 = ssub.s32 256, 256
          %155 = vsyncadd [#allocation11], %s154
          %s157 = sshll.u32 [#allocation10], 4
          %s158 = int_to_ptr.vmem [resolvable:$true] %s157
          %160 = dma.hbm_to_vmem [thread:$0]  %s1, 256, %s158, [#allocation11]
        $region16: #{tpu_custom_call.1} parent=11 // pred_fallthru
          _
        // Predicated region
        $region17: #{tpu_custom_call.1} parent=11 // pred_check
          %p161 = pneg %p88
        $region18: #{tpu_custom_call.1} parent=11 // pred_check_branch
          %163 = sbr.rel (%p161) target = $region20
        $region19: #{tpu_custom_call.1} parent=11 // pred_region
          _
        $region20: #{tpu_custom_call.1} parent=11 // pred_fallthru
          _
      $region12: #{tpu_custom_call.1} parent=5 // pred_fallthru
        _
      %p164 = scmp.lt.s32.totalorder %s20, 2
      // Predicated region
      $region21: #{tpu_custom_call.1} parent=5 // pred_check
        %p165 = pneg %p164
      $region22: #{tpu_custom_call.1} parent=5 // pred_check_branch
        %167 = sbr.rel (%p165) target = $region24
      $region23: #{tpu_custom_call.1} parent=5 // pred_region
        // Predicated region
        $region25: #{tpu_custom_call.1} parent=23 // pred_check
          %p168 = pneg %p40
        $region26: #{tpu_custom_call.1} parent=23 // pred_check_branch
          %170 = sbr.rel (%p168) target = $region28
        $region27: #{tpu_custom_call.1} parent=23 // pred_region
          %s171 = sand.u32 %s30, 1
          %s172 = scalar_lea.sflag [#allocation8], %s171
          %s173 = sand.u32 %s30, 1
          %s174 = smul.addr %s173, 256
          %s175 = scalar_lea.vmem [#allocation7], %s174
          %s176 = smul.u32 32, %s20
          %s178 = ssub.s32 4096, 4096
          %179 = vsyncadd %s172, %s178
          %s180 = smul.addr %s176, 2
          %s181 = smul.addr %s180, 64
          %s182 = scalar_lea.hbm %s0, %s181
          %s183 = sshll.u32 %s175, 4
          %s184 = int_to_ptr.vmem [resolvable:$true] %s183
          %189 = dma.hbm_to_vmem [thread:$0]  %s182, 4096, %s184, %s172, 128, 128, 8
        $region28: #{tpu_custom_call.1} parent=23 // pred_fallthru
          _
      $region24: #{tpu_custom_call.1} parent=5 // pred_fallthru
        _
      %p190 = scmp.le.s32.totalorder 1, %s20
      %p191 = scmp.lt.s32.totalorder %s20, 3
      %p192 = pnand %p190, %p191
      %p193 = pneg %p192
      // Predicated region
      $region29: #{tpu_custom_call.1} parent=5 // pred_check
        _
      $region30: #{tpu_custom_call.1} parent=5 // pred_check_branch
        %195 = sbr.rel (%p192) target = $region32
      $region31: #{tpu_custom_call.1} parent=5 // pred_region
        %s196 = ssub.s32 %s20, 1
        %s197 = sand.u32 %s33, 1
        %s198 = scalar_lea.sflag [#allocation8], %s197
        %s199 = sand.u32 %s33, 1
        %s200 = smul.addr %s199, 256
        %s201 = scalar_lea.vmem [#allocation7], %s200
        // Predicated region
        $region33: #{tpu_custom_call.1} parent=31 // pred_check
          %p202 = pneg %p46
        $region34: #{tpu_custom_call.1} parent=31 // pred_check_branch
          %204 = sbr.rel (%p202) target = $region36
        $region35: #{tpu_custom_call.1} parent=31 // pred_region
          %205 = dma.done %s198, 4096
        $region36: #{tpu_custom_call.1} parent=31 // pred_fallthru
          _
        // Predicated region
        $region37: #{tpu_custom_call.1} parent=31 // pred_check
          %p206 = pneg %p67
        $region38: #{tpu_custom_call.1} parent=31 // pred_check_branch
          %208 = sbr.rel (%p206) target = $region40
        $region39: #{tpu_custom_call.1} parent=31 // pred_region
          %209 = dma.done [#allocation11], 256
        $region40: #{tpu_custom_call.1} parent=31 // pred_fallthru
          _
        %s210 = sand.u32 %s33, 1
        %s211 = scalar_lea.sflag [#allocation8], %s210
        %s212 = sand.u32 %s33, 1
        %s213 = smul.addr %s212, 256
        %s214 = scalar_lea.vmem [#allocation7], %s213
        %p215 = pneg %p46
        %p216 = pneg %p43
        %p217 = pneg %p67
        %p218 = pneg %p64
        %p219 = pneg %p88
        %p220 = pneg %p85
        %p221 = pneg %p114
        %p222 = pneg %p111
        %s223 = sand.u32 %s101, 1
        %s224 = scalar_lea.sflag [#allocation9], %s223
        %s225 = sand.u32 %s101, 1
        %s226 = smul.addr %s225, 256
        %s227 = scalar_lea.vmem [#allocation12], %s226
        %p228 = pneg %p135
        %p229 = pneg %p132
        %s230 = smul.u32 32, %s25
        %s231 = smul.u32 32, %s25
        %s232 = smul.u32 %s25, 32
        %p233 = scmp.eq.s32.totalorder %s25, 0
        // Predicated region
        $region41: #{tpu_custom_call.1} parent=31 // pred_check
          %p234 = pneg %p233
        $region42: #{tpu_custom_call.1} parent=31 // pred_check_branch
          %236 = sbr.rel (%p234) target = $region44
        $region43: #{tpu_custom_call.1} parent=31 // pred_region
          #allocation16 [shape = 'u32[9]{0}', space=smem, size = 0x24, scoped, tag = 'DMA stride descriptor']
          %s238 = sshll.u32 1, 14
          %s239 = sxor.u32 4294967295, %s238
          %s241 = sld [smem:[#allocation0]]
          %s242 = sadd.s32 2, %s241
          %s244 = sshll.u32 7, 26
          %s245 = sxor.u32 4294967295, %s244
          %s246 = sand.u32 0, %s245
          %s247 = sshll.u32 %s242, 26
          %s248 = sor.u32 %s246, %s247
          %s249 = sshll.u32 [#allocation2], 4
          %s250 = int_to_ptr.vmem [resolvable:$true] %s249
          %253 = sst [smem:[#allocation16]] 256
          %s254 = scalar_lea.smem [#allocation16], 1
          %255 = sst [smem:[%s254]] 256
          %s256 = scalar_lea.smem [#allocation16], 2
          %257 = sst [smem:[%s256]] 2
          %s258 = scalar_lea.smem [#allocation16], 3
          %259 = sst [smem:[%s258]] 64
          %s260 = scalar_lea.smem [#allocation16], 4
          %261 = sst [smem:[%s260]] 128
          %s262 = scalar_lea.smem [#allocation16], 5
          %263 = sst [smem:[%s262]] 2
          %s264 = scalar_lea.smem [#allocation16], 6
          %265 = sst [smem:[%s264]] 128
          %s266 = scalar_lea.smem [#allocation16], 7
          %267 = sst [smem:[%s266]] 64
          %s268 = scalar_lea.smem [#allocation16], 8
          %269 = sst [smem:[%s268]] 4
          %271 = dma.general %s2, 4096, %s250, [#allocation6], [#allocation15], [#allocation16], %s248, 0
          %s272 = smul.u32 4, 32
          %s273 = smul.u32 %s272, 2
          %s274 = sshll.u32 %s273, 4
          %275 = dma.done [#allocation6], %s274
          %v276 = vld [vmem:[#allocation10] sm:$0xff]
          %v277 = vld [vmem:[#allocation10 + $0x8] sm:$0xff]
          %278 = vst [vmem:[#allocation3] sm:$0xff] %v276
          %279 = vst [vmem:[#allocation3 + $0x8] sm:$0xff] %v277
          %v280 = vld [vmem:[#allocation10] sm:$0xff]
          %v281 = vld [vmem:[#allocation10 + $0x8] sm:$0xff]
          %282 = vst [vmem:[#allocation13] sm:$0xff] %v280
          %283 = vst [vmem:[#allocation13 + $0x8] sm:$0xff] %v281
        $region44: #{tpu_custom_call.1} parent=31 // pred_fallthru
          _
        %v284 = vld [vmem:[%s201] sm:$0xff]
        %v285 = vld [vmem:[%s201 + $0x8] sm:$0xff]
        %v286 = vld [vmem:[%s201 + $0x10] sm:$0xff]
        %v287 = vld [vmem:[%s201 + $0x18] sm:$0xff]
        %v288 = vld [vmem:[%s201 + $0x20] sm:$0xff]
        %v289 = vld [vmem:[%s201 + $0x28] sm:$0xff]
        %v290 = vld [vmem:[%s201 + $0x30] sm:$0xff]
        %v291 = vld [vmem:[%s201 + $0x38] sm:$0xff]
        %v292 = vld [vmem:[%s201 + $0x40] sm:$0xff]
        %v293 = vld [vmem:[%s201 + $0x48] sm:$0xff]
        %v294 = vld [vmem:[%s201 + $0x50] sm:$0xff]
        %v295 = vld [vmem:[%s201 + $0x58] sm:$0xff]
        %v296 = vld [vmem:[%s201 + $0x60] sm:$0xff]
        %v297 = vld [vmem:[%s201 + $0x68] sm:$0xff]
        %v298 = vld [vmem:[%s201 + $0x70] sm:$0xff]
        %v299 = vld [vmem:[%s201 + $0x78] sm:$0xff]
        %v300 = vld [vmem:[%s201 + $0x80] sm:$0xff]
        %v301 = vld [vmem:[%s201 + $0x88] sm:$0xff]
        %v302 = vld [vmem:[%s201 + $0x90] sm:$0xff]
        %v303 = vld [vmem:[%s201 + $0x98] sm:$0xff]
        %v304 = vld [vmem:[%s201 + $0xa0] sm:$0xff]
        %v305 = vld [vmem:[%s201 + $0xa8] sm:$0xff]
        %v306 = vld [vmem:[%s201 + $0xb0] sm:$0xff]
        %v307 = vld [vmem:[%s201 + $0xb8] sm:$0xff]
        %v308 = vld [vmem:[%s201 + $0xc0] sm:$0xff]
        %v309 = vld [vmem:[%s201 + $0xc8] sm:$0xff]
        %v310 = vld [vmem:[%s201 + $0xd0] sm:$0xff]
        %v311 = vld [vmem:[%s201 + $0xd8] sm:$0xff]
        %v312 = vld [vmem:[%s201 + $0xe0] sm:$0xff]
        %v313 = vld [vmem:[%s201 + $0xe8] sm:$0xff]
        %v314 = vld [vmem:[%s201 + $0xf0] sm:$0xff]
        %v315 = vld [vmem:[%s201 + $0xf8] sm:$0xff]
        %v316 = vunpack.c.l.bf16 %v284
        %v317 = vunpack.c.h.bf16 %v284
        %v318 = vunpack.c.l.bf16 %v285
        %v319 = vunpack.c.h.bf16 %v285
        %v320 = vunpack.c.l.bf16 %v286
        %v321 = vunpack.c.h.bf16 %v286
        %v322 = vunpack.c.l.bf16 %v287
        %v323 = vunpack.c.h.bf16 %v287
        %v324 = vunpack.c.l.bf16 %v288
        %v325 = vunpack.c.h.bf16 %v288
        %v326 = vunpack.c.l.bf16 %v289
        %v327 = vunpack.c.h.bf16 %v289
        %v328 = vunpack.c.l.bf16 %v290
        %v329 = vunpack.c.h.bf16 %v290
        %v330 = vunpack.c.l.bf16 %v291
        %v331 = vunpack.c.h.bf16 %v291
        %v332 = vunpack.c.l.bf16 %v292
        %v333 = vunpack.c.h.bf16 %v292
        %v334 = vunpack.c.l.bf16 %v293
        %v335 = vunpack.c.h.bf16 %v293
        %v336 = vunpack.c.l.bf16 %v294
        %v337 = vunpack.c.h.bf16 %v294
        %v338 = vunpack.c.l.bf16 %v295
        %v339 = vunpack.c.h.bf16 %v295
        %v340 = vunpack.c.l.bf16 %v296
        %v341 = vunpack.c.h.bf16 %v296
        %v342 = vunpack.c.l.bf16 %v297
        %v343 = vunpack.c.h.bf16 %v297
        %v344 = vunpack.c.l.bf16 %v298
        %v345 = vunpack.c.h.bf16 %v298
        %v346 = vunpack.c.l.bf16 %v299
        %v347 = vunpack.c.h.bf16 %v299
        %v348 = vunpack.c.l.bf16 %v300
        %v349 = vunpack.c.h.bf16 %v300
        %v350 = vunpack.c.l.bf16 %v301
        %v351 = vunpack.c.h.bf16 %v301
        %v352 = vunpack.c.l.bf16 %v302
        %v353 = vunpack.c.h.bf16 %v302
        %v354 = vunpack.c.l.bf16 %v303
        %v355 = vunpack.c.h.bf16 %v303
        %v356 = vunpack.c.l.bf16 %v304
        %v357 = vunpack.c.h.bf16 %v304
        %v358 = vunpack.c.l.bf16 %v305
        %v359 = vunpack.c.h.bf16 %v305
        %v360 = vunpack.c.l.bf16 %v306
        %v361 = vunpack.c.h.bf16 %v306
        %v362 = vunpack.c.l.bf16 %v307
        %v363 = vunpack.c.h.bf16 %v307
        %v364 = vunpack.c.l.bf16 %v308
        %v365 = vunpack.c.h.bf16 %v308
        %v366 = vunpack.c.l.bf16 %v309
        %v367 = vunpack.c.h.bf16 %v309
        %v368 = vunpack.c.l.bf16 %v310
        %v369 = vunpack.c.h.bf16 %v310
        %v370 = vunpack.c.l.bf16 %v311
        %v371 = vunpack.c.h.bf16 %v311
        %v372 = vunpack.c.l.bf16 %v312
        %v373 = vunpack.c.h.bf16 %v312
        %v374 = vunpack.c.l.bf16 %v313
        %v375 = vunpack.c.h.bf16 %v313
        %v376 = vunpack.c.l.bf16 %v314
        %v377 = vunpack.c.h.bf16 %v314
        %v378 = vunpack.c.l.bf16 %v315
        %v379 = vunpack.c.h.bf16 %v315
        %v380 = vld [vmem:[%s3] sm:$0x3]
        %v382 = vlaneseq
        %v383 = vshrl.u32 %v382, 7
        %v384 = vsub.s32 0, %v383
        %v385 = vrot.slane %v380, %v384
        %v386 = vlaneseq
        %v387 = vshrl.u32 %v386, 7
        %v388 = vsub.s32 1, %v387
        %v389 = vrot.slane %v380, %v388
        %v392 = vadd.f32 %v316, %v385
        %v393 = vadd.f32 %v317, %v389
        %v394 = vadd.f32 %v318, %v385
        %v395 = vadd.f32 %v319, %v389
        %v396 = vadd.f32 %v320, %v385
        %v397 = vadd.f32 %v321, %v389
        %v398 = vadd.f32 %v322, %v385
        %v399 = vadd.f32 %v323, %v389
        %v400 = vadd.f32 %v324, %v385
        %v401 = vadd.f32 %v325, %v389
        %v402 = vadd.f32 %v326, %v385
        %v403 = vadd.f32 %v327, %v389
        %v404 = vadd.f32 %v328, %v385
        %v405 = vadd.f32 %v329, %v389
        %v406 = vadd.f32 %v330, %v385
        %v407 = vadd.f32 %v331, %v389
        %v408 = vadd.f32 %v332, %v385
        %v409 = vadd.f32 %v333, %v389
        %v410 = vadd.f32 %v334, %v385
        %v411 = vadd.f32 %v335, %v389
        %v412 = vadd.f32 %v336, %v385
        %v413 = vadd.f32 %v337, %v389
        %v414 = vadd.f32 %v338, %v385
        %v415 = vadd.f32 %v339, %v389
        %v416 = vadd.f32 %v340, %v385
        %v417 = vadd.f32 %v341, %v389
        %v418 = vadd.f32 %v342, %v385
        %v419 = vadd.f32 %v343, %v389
        %v420 = vadd.f32 %v344, %v385
        %v421 = vadd.f32 %v345, %v389
        %v422 = vadd.f32 %v346, %v385
        %v423 = vadd.f32 %v347, %v389
        %v424 = vadd.f32 %v348, %v385
        %v425 = vadd.f32 %v349, %v389
        %v426 = vadd.f32 %v350, %v385
        %v427 = vadd.f32 %v351, %v389
        %v428 = vadd.f32 %v352, %v385
        %v429 = vadd.f32 %v353, %v389
        %v430 = vadd.f32 %v354, %v385
        %v431 = vadd.f32 %v355, %v389
        %v432 = vadd.f32 %v356, %v385
        %v433 = vadd.f32 %v357, %v389
        %v434 = vadd.f32 %v358, %v385
        %v435 = vadd.f32 %v359, %v389
        %v436 = vadd.f32 %v360, %v385
        %v437 = vadd.f32 %v361, %v389
        %v438 = vadd.f32 %v362, %v385
        %v439 = vadd.f32 %v363, %v389
        %v440 = vadd.f32 %v364, %v385
        %v441 = vadd.f32 %v365, %v389
        %v442 = vadd.f32 %v366, %v385
        %v443 = vadd.f32 %v367, %v389
        %v444 = vadd.f32 %v368, %v385
        %v445 = vadd.f32 %v369, %v389
        %v446 = vadd.f32 %v370, %v385
        %v447 = vadd.f32 %v371, %v389
        %v448 = vadd.f32 %v372, %v385
        %v449 = vadd.f32 %v373, %v389
        %v450 = vadd.f32 %v374, %v385
        %v451 = vadd.f32 %v375, %v389
        %v452 = vadd.f32 %v376, %v385
        %v453 = vadd.f32 %v377, %v389
        %v454 = vadd.f32 %v378, %v385
        %v455 = vadd.f32 %v379, %v389
        %456 = vst [vmem:[#allocation4] sm:$0xff] %v392
        %457 = vst [vmem:[#allocation4 + $0x8] sm:$0xff] %v393
        %458 = vst [vmem:[#allocation4 + $0x10] sm:$0xff] %v394
        %459 = vst [vmem:[#allocation4 + $0x18] sm:$0xff] %v395
        %460 = vst [vmem:[#allocation4 + $0x20] sm:$0xff] %v396
        %461 = vst [vmem:[#allocation4 + $0x28] sm:$0xff] %v397
        %462 = vst [vmem:[#allocation4 + $0x30] sm:$0xff] %v398
        %463 = vst [vmem:[#allocation4 + $0x38] sm:$0xff] %v399
        %464 = vst [vmem:[#allocation4 + $0x40] sm:$0xff] %v400
        %465 = vst [vmem:[#allocation4 + $0x48] sm:$0xff] %v401
        %466 = vst [vmem:[#allocation4 + $0x50] sm:$0xff] %v402
        %467 = vst [vmem:[#allocation4 + $0x58] sm:$0xff] %v403
        %468 = vst [vmem:[#allocation4 + $0x60] sm:$0xff] %v404
        %469 = vst [vmem:[#allocation4 + $0x68] sm:$0xff] %v405
        %470 = vst [vmem:[#allocation4 + $0x70] sm:$0xff] %v406
        %471 = vst [vmem:[#allocation4 + $0x78] sm:$0xff] %v407
        %472 = vst [vmem:[#allocation4 + $0x80] sm:$0xff] %v408
        %473 = vst [vmem:[#allocation4 + $0x88] sm:$0xff] %v409
        %474 = vst [vmem:[#allocation4 + $0x90] sm:$0xff] %v410
        %475 = vst [vmem:[#allocation4 + $0x98] sm:$0xff] %v411
        %476 = vst [vmem:[#allocation4 + $0xa0] sm:$0xff] %v412
        %477 = vst [vmem:[#allocation4 + $0xa8] sm:$0xff] %v413
        %478 = vst [vmem:[#allocation4 + $0xb0] sm:$0xff] %v414
        %479 = vst [vmem:[#allocation4 + $0xb8] sm:$0xff] %v415
        %480 = vst [vmem:[#allocation4 + $0xc0] sm:$0xff] %v416
        %481 = vst [vmem:[#allocation4 + $0xc8] sm:$0xff] %v417
        %482 = vst [vmem:[#allocation4 + $0xd0] sm:$0xff] %v418
        %483 = vst [vmem:[#allocation4 + $0xd8] sm:$0xff] %v419
        %484 = vst [vmem:[#allocation4 + $0xe0] sm:$0xff] %v420
        %485 = vst [vmem:[#allocation4 + $0xe8] sm:$0xff] %v421
        %486 = vst [vmem:[#allocation4 + $0xf0] sm:$0xff] %v422
        %487 = vst [vmem:[#allocation4 + $0xf8] sm:$0xff] %v423
        %488 = vst [vmem:[#allocation4 + $0x100] sm:$0xff] %v424
        %489 = vst [vmem:[#allocation4 + $0x108] sm:$0xff] %v425
        %490 = vst [vmem:[#allocation4 + $0x110] sm:$0xff] %v426
        %491 = vst [vmem:[#allocation4 + $0x118] sm:$0xff] %v427
        %492 = vst [vmem:[#allocation4 + $0x120] sm:$0xff] %v428
        %493 = vst [vmem:[#allocation4 + $0x128] sm:$0xff] %v429
        %494 = vst [vmem:[#allocation4 + $0x130] sm:$0xff] %v430
        %495 = vst [vmem:[#allocation4 + $0x138] sm:$0xff] %v431
        %496 = vst [vmem:[#allocation4 + $0x140] sm:$0xff] %v432
        %497 = vst [vmem:[#allocation4 + $0x148] sm:$0xff] %v433
        %498 = vst [vmem:[#allocation4 + $0x150] sm:$0xff] %v434
        %499 = vst [vmem:[#allocation4 + $0x158] sm:$0xff] %v435
        %500 = vst [vmem:[#allocation4 + $0x160] sm:$0xff] %v436
        %501 = vst [vmem:[#allocation4 + $0x168] sm:$0xff] %v437
        %502 = vst [vmem:[#allocation4 + $0x170] sm:$0xff] %v438
        %503 = vst [vmem:[#allocation4 + $0x178] sm:$0xff] %v439
        %504 = vst [vmem:[#allocation4 + $0x180] sm:$0xff] %v440
        %505 = vst [vmem:[#allocation4 + $0x188] sm:$0xff] %v441
        %506 = vst [vmem:[#allocation4 + $0x190] sm:$0xff] %v442
        %507 = vst [vmem:[#allocation4 + $0x198] sm:$0xff] %v443
        %508 = vst [vmem:[#allocation4 + $0x1a0] sm:$0xff] %v444
        %509 = vst [vmem:[#allocation4 + $0x1a8] sm:$0xff] %v445
        %510 = vst [vmem:[#allocation4 + $0x1b0] sm:$0xff] %v446
        %511 = vst [vmem:[#allocation4 + $0x1b8] sm:$0xff] %v447
        %512 = vst [vmem:[#allocation4 + $0x1c0] sm:$0xff] %v448
        %513 = vst [vmem:[#allocation4 + $0x1c8] sm:$0xff] %v449
        %514 = vst [vmem:[#allocation4 + $0x1d0] sm:$0xff] %v450
        %515 = vst [vmem:[#allocation4 + $0x1d8] sm:$0xff] %v451
        %516 = vst [vmem:[#allocation4 + $0x1e0] sm:$0xff] %v452
        %517 = vst [vmem:[#allocation4 + $0x1e8] sm:$0xff] %v453
        %518 = vst [vmem:[#allocation4 + $0x1f0] sm:$0xff] %v454
        %519 = vst [vmem:[#allocation4 + $0x1f8] sm:$0xff] %v455
        %v520 = vld [vmem:[#allocation3] sm:$0xff]
        %v521 = vld [vmem:[#allocation3 + $0x8] sm:$0xff]
        %v522 = vld [vmem:[#allocation4] sm:$0xff]
        %v523 = vld [vmem:[#allocation4 + $0x8] sm:$0xff]
        %v524 = vpack.c.bf16 %v520, %v520
        %v525 = vpack.c.bf16 %v521, %v521
        %v526 = vld [vmem:[#allocation2] sm:$0xff]
        %v527 = vld [vmem:[#allocation2 + $0x8] sm:$0xff]
        %v528 = vld [vmem:[#allocation2 + $0x10] sm:$0xff]
        %v529 = vld [vmem:[#allocation2 + $0x18] sm:$0xff]
        %v530 = vld [vmem:[#allocation2 + $0x20] sm:$0xff]
        %v531 = vld [vmem:[#allocation2 + $0x28] sm:$0xff]
        %v532 = vld [vmem:[#allocation2 + $0x30] sm:$0xff]
        %v533 = vld [vmem:[#allocation2 + $0x38] sm:$0xff]
        %v534 = vld [vmem:[#allocation2 + $0x40] sm:$0xff]
        %v535 = vld [vmem:[#allocation2 + $0x48] sm:$0xff]
        %v536 = vld [vmem:[#allocation2 + $0x50] sm:$0xff]
        %v537 = vld [vmem:[#allocation2 + $0x58] sm:$0xff]
        %v538 = vld [vmem:[#allocation2 + $0x60] sm:$0xff]
        %v539 = vld [vmem:[#allocation2 + $0x68] sm:$0xff]
        %v540 = vld [vmem:[#allocation2 + $0x70] sm:$0xff]
        %v541 = vld [vmem:[#allocation2 + $0x78] sm:$0xff]
        %v542 = vld [vmem:[#allocation2 + $0x80] sm:$0xff]
        %v543 = vld [vmem:[#allocation2 + $0x88] sm:$0xff]
        %v544 = vld [vmem:[#allocation2 + $0x90] sm:$0xff]
        %v545 = vld [vmem:[#allocation2 + $0x98] sm:$0xff]
        %v546 = vld [vmem:[#allocation2 + $0xa0] sm:$0xff]
        %v547 = vld [vmem:[#allocation2 + $0xa8] sm:$0xff]
        %v548 = vld [vmem:[#allocation2 + $0xb0] sm:$0xff]
        %v549 = vld [vmem:[#allocation2 + $0xb8] sm:$0xff]
        %v550 = vld [vmem:[#allocation2 + $0xc0] sm:$0xff]
        %v551 = vld [vmem:[#allocation2 + $0xc8] sm:$0xff]
        %v552 = vld [vmem:[#allocation2 + $0xd0] sm:$0xff]
        %v553 = vld [vmem:[#allocation2 + $0xd8] sm:$0xff]
        %v554 = vld [vmem:[#allocation2 + $0xe0] sm:$0xff]
        %v555 = vld [vmem:[#allocation2 + $0xe8] sm:$0xff]
        %v556 = vld [vmem:[#allocation2 + $0xf0] sm:$0xff]
        %v557 = vld [vmem:[#allocation2 + $0xf8] sm:$0xff]
        %558 = vmatprep.subr.bf16.mxu0 %v527
        %559 = vmatpush1.bf16.msra.mxu0 %v526
        %560 = vmatprep.subr.bf16.mxu0 %v529
        %561 = vmatpush1.bf16.msra.mxu0 %v528
        %562 = vmatprep.subr.bf16.mxu0 %v531
        %563 = vmatpush1.bf16.msra.mxu0 %v530
        %564 = vmatprep.subr.bf16.mxu0 %v533
        %565 = vmatpush1.bf16.msra.mxu0 %v532
        %566 = vmatprep.subr.bf16.mxu0 %v535
        %567 = vmatpush1.bf16.msra.mxu0 %v534
        %568 = vmatprep.subr.bf16.mxu0 %v537
        %569 = vmatpush1.bf16.msra.mxu0 %v536
        %570 = vmatprep.subr.bf16.mxu0 %v539
        %571 = vmatpush1.bf16.msra.mxu0 %v538
        %572 = vmatprep.subr.bf16.mxu0 %v541
        %573 = vmatpush1.bf16.msra.mxu0 %v540
        %574 = vmatprep.subr.bf16.mxu0 %v543
        %575 = vmatpush1.bf16.msra.mxu0 %v542
        %576 = vmatprep.subr.bf16.mxu0 %v545
        %577 = vmatpush1.bf16.msra.mxu0 %v544
        %578 = vmatprep.subr.bf16.mxu0 %v547
        %579 = vmatpush1.bf16.msra.mxu0 %v546
        %580 = vmatprep.subr.bf16.mxu0 %v549
        %581 = vmatpush1.bf16.msra.mxu0 %v548
        %582 = vmatprep.subr.bf16.mxu0 %v551
        %583 = vmatpush1.bf16.msra.mxu0 %v550
        %584 = vmatprep.subr.bf16.mxu0 %v553
        %585 = vmatpush1.bf16.msra.mxu0 %v552
        %586 = vmatprep.subr.bf16.mxu0 %v555
        %587 = vmatpush1.bf16.msra.mxu0 %v554
        %588 = vmatprep.subr.bf16.mxu0 %v557
        %589 = vmatpush1.bf16.msra.mxu0 %v556
        %590 = vmatprep.mubr.bf16.mxu0 %v525
        %591 = vmatmul.mubr.bf16.gmra.mrb[0].mxu0 %v524
        %v592 = vpop.f32.mrb[0].mxu0
        %v593 = vadd.f32 0.0, %v592
        %v594 = vpop.f32.mrb[0].mxu0
        %v595 = vadd.f32 0.0, %v594
        %v596 = vpop.f32.mrb[0].mxu0
        %v597 = vpop.f32.mrb[0].mxu0
        %598 = vdwg.mxu0
        %v599 = vadd.f32 %v522, %v593
        %v600 = vadd.f32 %v523, %v595
        %v601 = vtanh.pop %v599
        %v602 = vtanh.pop %v600
        %s603 = smul.u32 0, 2
        %s604 = smul.addr %s603, 8
        %s605 = scalar_lea.vmem [#allocation5], %s604
        %606 = vst [vmem:[%s605] sm:$0xff] %v601
        %607 = vst [vmem:[%s605 + $0x8] sm:$0xff] %v602
        %s608 = scalar_lea.vmem [#allocation4], 16
        %v609 = vld [vmem:[%s608] sm:$0xff]
        %v610 = vld [vmem:[%s608 + $0x8] sm:$0xff]
        %v611 = vpack.c.bf16 %v601, %v601
        %v612 = vpack.c.bf16 %v602, %v602
        %v613 = vld [vmem:[#allocation2] sm:$0xff]
        %v614 = vld [vmem:[#allocation2 + $0x8] sm:$0xff]
        %v615 = vld [vmem:[#allocation2 + $0x10] sm:$0xff]
        %v616 = vld [vmem:[#allocation2 + $0x18] sm:$0xff]
        %v617 = vld [vmem:[#allocation2 + $0x20] sm:$0xff]
        %v618 = vld [vmem:[#allocation2 + $0x28] sm:$0xff]
        %v619 = vld [vmem:[#allocation2 + $0x30] sm:$0xff]
        %v620 = vld [vmem:[#allocation2 + $0x38] sm:$0xff]
        %v621 = vld [vmem:[#allocation2 + $0x40] sm:$0xff]
        %v622 = vld [vmem:[#allocation2 + $0x48] sm:$0xff]
        %v623 = vld [vmem:[#allocation2 + $0x50] sm:$0xff]
        %v624 = vld [vmem:[#allocation2 + $0x58] sm:$0xff]
        %v625 = vld [vmem:[#allocation2 + $0x60] sm:$0xff]
        %v626 = vld [vmem:[#allocation2 + $0x68] sm:$0xff]
        %v627 = vld [vmem:[#allocation2 + $0x70] sm:$0xff]
        %v628 = vld [vmem:[#allocation2 + $0x78] sm:$0xff]
        %v629 = vld [vmem:[#allocation2 + $0x80] sm:$0xff]
        %v630 = vld [vmem:[#allocation2 + $0x88] sm:$0xff]
        %v631 = vld [vmem:[#allocation2 + $0x90] sm:$0xff]
        %v632 = vld [vmem:[#allocation2 + $0x98] sm:$0xff]
        %v633 = vld [vmem:[#allocation2 + $0xa0] sm:$0xff]
        %v634 = vld [vmem:[#allocation2 + $0xa8] sm:$0xff]
        %v635 = vld [vmem:[#allocation2 + $0xb0] sm:$0xff]
        %v636 = vld [vmem:[#allocation2 + $0xb8] sm:$0xff]
        %v637 = vld [vmem:[#allocation2 + $0xc0] sm:$0xff]
        %v638 = vld [vmem:[#allocation2 + $0xc8] sm:$0xff]
        %v639 = vld [vmem:[#allocation2 + $0xd0] sm:$0xff]
        %v640 = vld [vmem:[#allocation2 + $0xd8] sm:$0xff]
        %v641 = vld [vmem:[#allocation2 + $0xe0] sm:$0xff]
        %v642 = vld [vmem:[#allocation2 + $0xe8] sm:$0xff]
        %v643 = vld [vmem:[#allocation2 + $0xf0] sm:$0xff]
        %v644 = vld [vmem:[#allocation2 + $0xf8] sm:$0xff]
        %645 = vmatprep.subr.bf16.mxu0 %v614
        %646 = vmatpush1.bf16.msra.mxu0 %v613
        %647 = vmatprep.subr.bf16.mxu0 %v616
        %648 = vmatpush1.bf16.msra.mxu0 %v615
        %649 = vmatprep.subr.bf16.mxu0 %v618
        %650 = vmatpush1.bf16.msra.mxu0 %v617
        %651 = vmatprep.subr.bf16.mxu0 %v620
        %652 = vmatpush1.bf16.msra.mxu0 %v619
        %653 = vmatprep.subr.bf16.mxu0 %v622
        %654 = vmatpush1.bf16.msra.mxu0 %v621
        %655 = vmatprep.subr.bf16.mxu0 %v624
        %656 = vmatpush1.bf16.msra.mxu0 %v623
        %657 = vmatprep.subr.bf16.mxu0 %v626
        %658 = vmatpush1.bf16.msra.mxu0 %v625
        %659 = vmatprep.subr.bf16.mxu0 %v628
        %660 = vmatpush1.bf16.msra.mxu0 %v627
        %661 = vmatprep.subr.bf16.mxu0 %v630
        %662 = vmatpush1.bf16.msra.mxu0 %v629
        %663 = vmatprep.subr.bf16.mxu0 %v632
        %664 = vmatpush1.bf16.msra.mxu0 %v631
        %665 = vmatprep.subr.bf16.mxu0 %v634
        %666 = vmatpush1.bf16.msra.mxu0 %v633
        %667 = vmatprep.subr.bf16.mxu0 %v636
        %668 = vmatpush1.bf16.msra.mxu0 %v635
        %669 = vmatprep.subr.bf16.mxu0 %v638
        %670 = vmatpush1.bf16.msra.mxu0 %v637
        %671 = vmatprep.subr.bf16.mxu0 %v640
        %672 = vmatpush1.bf16.msra.mxu0 %v639
        %673 = vmatprep.subr.bf16.mxu0 %v642
        %674 = vmatpush1.bf16.msra.mxu0 %v641
        %675 = vmatprep.subr.bf16.mxu0 %v644
        %676 = vmatpush1.bf16.msra.mxu0 %v643
        %677 = vmatprep.mubr.bf16.mxu0 %v612
        %678 = vmatmul.mubr.bf16.gmra.mrb[0].mxu0 %v611
        %v679 = vpop.f32.mrb[0].mxu0
        %v680 = vadd.f32 0.0, %v679
        %v681 = vpop.f32.mrb[0].mxu0
        %v682 = vadd.f32 0.0, %v681
        %v683 = vpop.f32.mrb[0].mxu0
        %v684 = vpop.f32.mrb[0].mxu0
        %685 = vdwg.mxu0
        %v686 = vadd.f32 %v609, %v680
        %v687 = vadd.f32 %v610, %v682
        %v688 = vtanh.pop %v686
        %v689 = vtanh.pop %v687
        %s690 = smul.u32 1, 2
        %s691 = smul.addr %s690, 8
        %s692 = scalar_lea.vmem [#allocation5], %s691
        %693 = vst [vmem:[%s692] sm:$0xff] %v688
        %694 = vst [vmem:[%s692 + $0x8] sm:$0xff] %v689
        %s695 = scalar_lea.vmem [#allocation4], 32
        %v696 = vld [vmem:[%s695] sm:$0xff]
        %v697 = vld [vmem:[%s695 + $0x8] sm:$0xff]
        %v698 = vpack.c.bf16 %v688, %v688
        %v699 = vpack.c.bf16 %v689, %v689
        %v700 = vld [vmem:[#allocation2] sm:$0xff]
        %v701 = vld [vmem:[#allocation2 + $0x8] sm:$0xff]
        %v702 = vld [vmem:[#allocation2 + $0x10] sm:$0xff]
        %v703 = vld [vmem:[#allocation2 + $0x18] sm:$0xff]
        %v704 = vld [vmem:[#allocation2 + $0x20] sm:$0xff]
        %v705 = vld [vmem:[#allocation2 + $0x28] sm:$0xff]
        %v706 = vld [vmem:[#allocation2 + $0x30] sm:$0xff]
        %v707 = vld [vmem:[#allocation2 + $0x38] sm:$0xff]
        %v708 = vld [vmem:[#allocation2 + $0x40] sm:$0xff]
        %v709 = vld [vmem:[#allocation2 + $0x48] sm:$0xff]
        %v710 = vld [vmem:[#allocation2 + $0x50] sm:$0xff]
        %v711 = vld [vmem:[#allocation2 + $0x58] sm:$0xff]
        %v712 = vld [vmem:[#allocation2 + $0x60] sm:$0xff]
        %v713 = vld [vmem:[#allocation2 + $0x68] sm:$0xff]
        %v714 = vld [vmem:[#allocation2 + $0x70] sm:$0xff]
        %v715 = vld [vmem:[#allocation2 + $0x78] sm:$0xff]
        %v716 = vld [vmem:[#allocation2 + $0x80] sm:$0xff]
        %v717 = vld [vmem:[#allocation2 + $0x88] sm:$0xff]
        %v718 = vld [vmem:[#allocation2 + $0x90] sm:$0xff]
        %v719 = vld [vmem:[#allocation2 + $0x98] sm:$0xff]
        %v720 = vld [vmem:[#allocation2 + $0xa0] sm:$0xff]
        %v721 = vld [vmem:[#allocation2 + $0xa8] sm:$0xff]
        %v722 = vld [vmem:[#allocation2 + $0xb0] sm:$0xff]
        %v723 = vld [vmem:[#allocation2 + $0xb8] sm:$0xff]
        %v724 = vld [vmem:[#allocation2 + $0xc0] sm:$0xff]
        %v725 = vld [vmem:[#allocation2 + $0xc8] sm:$0xff]
        %v726 = vld [vmem:[#allocation2 + $0xd0] sm:$0xff]
        %v727 = vld [vmem:[#allocation2 + $0xd8] sm:$0xff]
        %v728 = vld [vmem:[#allocation2 + $0xe0] sm:$0xff]
        %v729 = vld [vmem:[#allocation2 + $0xe8] sm:$0xff]
        %v730 = vld [vmem:[#allocation2 + $0xf0] sm:$0xff]
        %v731 = vld [vmem:[#allocation2 + $0xf8] sm:$0xff]
        %732 = vmatprep.subr.bf16.mxu0 %v701
        %733 = vmatpush1.bf16.msra.mxu0 %v700
        %734 = vmatprep.subr.bf16.mxu0 %v703
        %735 = vmatpush1.bf16.msra.mxu0 %v702
        %736 = vmatprep.subr.bf16.mxu0 %v705
        %737 = vmatpush1.bf16.msra.mxu0 %v704
        %738 = vmatprep.subr.bf16.mxu0 %v707
        %739 = vmatpush1.bf16.msra.mxu0 %v706
        %740 = vmatprep.subr.bf16.mxu0 %v709
        %741 = vmatpush1.bf16.msra.mxu0 %v708
        %742 = vmatprep.subr.bf16.mxu0 %v711
        %743 = vmatpush1.bf16.msra.mxu0 %v710
        %744 = vmatprep.subr.bf16.mxu0 %v713
        %745 = vmatpush1.bf16.msra.mxu0 %v712
        %746 = vmatprep.subr.bf16.mxu0 %v715
        %747 = vmatpush1.bf16.msra.mxu0 %v714
        %748 = vmatprep.subr.bf16.mxu0 %v717
        %749 = vmatpush1.bf16.msra.mxu0 %v716
        %750 = vmatprep.subr.bf16.mxu0 %v719
        %751 = vmatpush1.bf16.msra.mxu0 %v718
        %752 = vmatprep.subr.bf16.mxu0 %v721
        %753 = vmatpush1.bf16.msra.mxu0 %v720
        %754 = vmatprep.subr.bf16.mxu0 %v723
        %755 = vmatpush1.bf16.msra.mxu0 %v722
        %756 = vmatprep.subr.bf16.mxu0 %v725
        %757 = vmatpush1.bf16.msra.mxu0 %v724
        %758 = vmatprep.subr.bf16.mxu0 %v727
        %759 = vmatpush1.bf16.msra.mxu0 %v726
        %760 = vmatprep.subr.bf16.mxu0 %v729
        %761 = vmatpush1.bf16.msra.mxu0 %v728
        %762 = vmatprep.subr.bf16.mxu0 %v731
        %763 = vmatpush1.bf16.msra.mxu0 %v730
        %764 = vmatprep.mubr.bf16.mxu0 %v699
        %765 = vmatmul.mubr.bf16.gmra.mrb[0].mxu0 %v698
        %v766 = vpop.f32.mrb[0].mxu0
        %v767 = vadd.f32 0.0, %v766
        %v768 = vpop.f32.mrb[0].mxu0
        %v769 = vadd.f32 0.0, %v768
        %v770 = vpop.f32.mrb[0].mxu0
        %v771 = vpop.f32.mrb[0].mxu0
        %772 = vdwg.mxu0
        %v773 = vadd.f32 %v696, %v767
        %v774 = vadd.f32 %v697, %v769
        %v775 = vtanh.pop %v773
        %v776 = vtanh.pop %v774
        %s777 = smul.u32 2, 2
        %s778 = smul.addr %s777, 8
        %s779 = scalar_lea.vmem [#allocation5], %s778
        %780 = vst [vmem:[%s779] sm:$0xff] %v775
        %781 = vst [vmem:[%s779 + $0x8] sm:$0xff] %v776
        %s782 = scalar_lea.vmem [#allocation4], 48
        %v783 = vld [vmem:[%s782] sm:$0xff]
        %v784 = vld [vmem:[%s782 + $0x8] sm:$0xff]
        %v785 = vpack.c.bf16 %v775, %v775
        %v786 = vpack.c.bf16 %v776, %v776
        %v787 = vld [vmem:[#allocation2] sm:$0xff]
        %v788 = vld [vmem:[#allocation2 + $0x8] sm:$0xff]
        %v789 = vld [vmem:[#allocation2 + $0x10] sm:$0xff]
        %v790 = vld [vmem:[#allocation2 + $0x18] sm:$0xff]
        %v791 = vld [vmem:[#allocation2 + $0x20] sm:$0xff]
        %v792 = vld [vmem:[#allocation2 + $0x28] sm:$0xff]
        %v793 = vld [vmem:[#allocation2 + $0x30] sm:$0xff]
        %v794 = vld [vmem:[#allocation2 + $0x38] sm:$0xff]
        %v795 = vld [vmem:[#allocation2 + $0x40] sm:$0xff]
        %v796 = vld [vmem:[#allocation2 + $0x48] sm:$0xff]
        %v797 = vld [vmem:[#allocation2 + $0x50] sm:$0xff]
        %v798 = vld [vmem:[#allocation2 + $0x58] sm:$0xff]
        %v799 = vld [vmem:[#allocation2 + $0x60] sm:$0xff]
        %v800 = vld [vmem:[#allocation2 + $0x68] sm:$0xff]
        %v801 = vld [vmem:[#allocation2 + $0x70] sm:$0xff]
        %v802 = vld [vmem:[#allocation2 + $0x78] sm:$0xff]
        %v803 = vld [vmem:[#allocation2 + $0x80] sm:$0xff]
        %v804 = vld [vmem:[#allocation2 + $0x88] sm:$0xff]
        %v805 = vld [vmem:[#allocation2 + $0x90] sm:$0xff]
        %v806 = vld [vmem:[#allocation2 + $0x98] sm:$0xff]
        %v807 = vld [vmem:[#allocation2 + $0xa0] sm:$0xff]
        %v808 = vld [vmem:[#allocation2 + $0xa8] sm:$0xff]
        %v809 = vld [vmem:[#allocation2 + $0xb0] sm:$0xff]
        %v810 = vld [vmem:[#allocation2 + $0xb8] sm:$0xff]
        %v811 = vld [vmem:[#allocation2 + $0xc0] sm:$0xff]
        %v812 = vld [vmem:[#allocation2 + $0xc8] sm:$0xff]
        %v813 = vld [vmem:[#allocation2 + $0xd0] sm:$0xff]
        %v814 = vld [vmem:[#allocation2 + $0xd8] sm:$0xff]
        %v815 = vld [vmem:[#allocation2 + $0xe0] sm:$0xff]
        %v816 = vld [vmem:[#allocation2 + $0xe8] sm:$0xff]
        %v817 = vld [vmem:[#allocation2 + $0xf0] sm:$0xff]
        %v818 = vld [vmem:[#allocation2 + $0xf8] sm:$0xff]
        %819 = vmatprep.subr.bf16.mxu0 %v788
        %820 = vmatpush1.bf16.msra.mxu0 %v787
        %821 = vmatprep.subr.bf16.mxu0 %v790
        %822 = vmatpush1.bf16.msra.mxu0 %v789
        %823 = vmatprep.subr.bf16.mxu0 %v792
        %824 = vmatpush1.bf16.msra.mxu0 %v791
        %825 = vmatprep.subr.bf16.mxu0 %v794
        %826 = vmatpush1.bf16.msra.mxu0 %v793
        %827 = vmatprep.subr.bf16.mxu0 %v796
        %828 = vmatpush1.bf16.msra.mxu0 %v795
        %829 = vmatprep.subr.bf16.mxu0 %v798
        %830 = vmatpush1.bf16.msra.mxu0 %v797
        %831 = vmatprep.subr.bf16.mxu0 %v800
        %832 = vmatpush1.bf16.msra.mxu0 %v799
        %833 = vmatprep.subr.bf16.mxu0 %v802
        %834 = vmatpush1.bf16.msra.mxu0 %v801
        %835 = vmatprep.subr.bf16.mxu0 %v804
        %836 = vmatpush1.bf16.msra.mxu0 %v803
        %837 = vmatprep.subr.bf16.mxu0 %v806
        %838 = vmatpush1.bf16.msra.mxu0 %v805
        %839 = vmatprep.subr.bf16.mxu0 %v808
        %840 = vmatpush1.bf16.msra.mxu0 %v807
        %841 = vmatprep.subr.bf16.mxu0 %v810
        %842 = vmatpush1.bf16.msra.mxu0 %v809
        %843 = vmatprep.subr.bf16.mxu0 %v812
        %844 = vmatpush1.bf16.msra.mxu0 %v811
        %845 = vmatprep.subr.bf16.mxu0 %v814
        %846 = vmatpush1.bf16.msra.mxu0 %v813
        %847 = vmatprep.subr.bf16.mxu0 %v816
        %848 = vmatpush1.bf16.msra.mxu0 %v815
        %849 = vmatprep.subr.bf16.mxu0 %v818
        %850 = vmatpush1.bf16.msra.mxu0 %v817
        %851 = vmatprep.mubr.bf16.mxu0 %v786
        %852 = vmatmul.mubr.bf16.gmra.mrb[0].mxu0 %v785
        %v853 = vpop.f32.mrb[0].mxu0
        %v854 = vadd.f32 0.0, %v853
        %v855 = vpop.f32.mrb[0].mxu0
        %v856 = vadd.f32 0.0, %v855
        %v857 = vpop.f32.mrb[0].mxu0
        %v858 = vpop.f32.mrb[0].mxu0
        %859 = vdwg.mxu0
        %v860 = vadd.f32 %v783, %v854
        %v861 = vadd.f32 %v784, %v856
        %v862 = vtanh.pop %v860
        %v863 = vtanh.pop %v861
        %s864 = smul.u32 3, 2
        %s865 = smul.addr %s864, 8
        %s866 = scalar_lea.vmem [#allocation5], %s865
        %867 = vst [vmem:[%s866] sm:$0xff] %v862
        %868 = vst [vmem:[%s866 + $0x8] sm:$0xff] %v863
        %s869 = scalar_lea.vmem [#allocation4], 64
        %v870 = vld [vmem:[%s869] sm:$0xff]
        %v871 = vld [vmem:[%s869 + $0x8] sm:$0xff]
        %v872 = vpack.c.bf16 %v862, %v862
        %v873 = vpack.c.bf16 %v863, %v863
        %v874 = vld [vmem:[#allocation2] sm:$0xff]
        %v875 = vld [vmem:[#allocation2 + $0x8] sm:$0xff]
        %v876 = vld [vmem:[#allocation2 + $0x10] sm:$0xff]
        %v877 = vld [vmem:[#allocation2 + $0x18] sm:$0xff]
        %v878 = vld [vmem:[#allocation2 + $0x20] sm:$0xff]
        %v879 = vld [vmem:[#allocation2 + $0x28] sm:$0xff]
        %v880 = vld [vmem:[#allocation2 + $0x30] sm:$0xff]
        %v881 = vld [vmem:[#allocation2 + $0x38] sm:$0xff]
        %v882 = vld [vmem:[#allocation2 + $0x40] sm:$0xff]
        %v883 = vld [vmem:[#allocation2 + $0x48] sm:$0xff]
        %v884 = vld [vmem:[#allocation2 + $0x50] sm:$0xff]
        %v885 = vld [vmem:[#allocation2 + $0x58] sm:$0xff]
        %v886 = vld [vmem:[#allocation2 + $0x60] sm:$0xff]
        %v887 = vld [vmem:[#allocation2 + $0x68] sm:$0xff]
        %v888 = vld [vmem:[#allocation2 + $0x70] sm:$0xff]
        %v889 = vld [vmem:[#allocation2 + $0x78] sm:$0xff]
        %v890 = vld [vmem:[#allocation2 + $0x80] sm:$0xff]
        %v891 = vld [vmem:[#allocation2 + $0x88] sm:$0xff]
        %v892 = vld [vmem:[#allocation2 + $0x90] sm:$0xff]
        %v893 = vld [vmem:[#allocation2 + $0x98] sm:$0xff]
        %v894 = vld [vmem:[#allocation2 + $0xa0] sm:$0xff]
        %v895 = vld [vmem:[#allocation2 + $0xa8] sm:$0xff]
        %v896 = vld [vmem:[#allocation2 + $0xb0] sm:$0xff]
        %v897 = vld [vmem:[#allocation2 + $0xb8] sm:$0xff]
        %v898 = vld [vmem:[#allocation2 + $0xc0] sm:$0xff]
        %v899 = vld [vmem:[#allocation2 + $0xc8] sm:$0xff]
        %v900 = vld [vmem:[#allocation2 + $0xd0] sm:$0xff]
        %v901 = vld [vmem:[#allocation2 + $0xd8] sm:$0xff]
        %v902 = vld [vmem:[#allocation2 + $0xe0] sm:$0xff]
        %v903 = vld [vmem:[#allocation2 + $0xe8] sm:$0xff]
        %v904 = vld [vmem:[#allocation2 + $0xf0] sm:$0xff]
        %v905 = vld [vmem:[#allocation2 + $0xf8] sm:$0xff]
        %906 = vmatprep.subr.bf16.mxu0 %v875
        %907 = vmatpush1.bf16.msra.mxu0 %v874
        %908 = vmatprep.subr.bf16.mxu0 %v877
        %909 = vmatpush1.bf16.msra.mxu0 %v876
        %910 = vmatprep.subr.bf16.mxu0 %v879
        %911 = vmatpush1.bf16.msra.mxu0 %v878
        %912 = vmatprep.subr.bf16.mxu0 %v881
        %913 = vmatpush1.bf16.msra.mxu0 %v880
        %914 = vmatprep.subr.bf16.mxu0 %v883
        %915 = vmatpush1.bf16.msra.mxu0 %v882
        %916 = vmatprep.subr.bf16.mxu0 %v885
        %917 = vmatpush1.bf16.msra.mxu0 %v884
        %918 = vmatprep.subr.bf16.mxu0 %v887
        %919 = vmatpush1.bf16.msra.mxu0 %v886
        %920 = vmatprep.subr.bf16.mxu0 %v889
        %921 = vmatpush1.bf16.msra.mxu0 %v888
        %922 = vmatprep.subr.bf16.mxu0 %v891
        %923 = vmatpush1.bf16.msra.mxu0 %v890
        %924 = vmatprep.subr.bf16.mxu0 %v893
        %925 = vmatpush1.bf16.msra.mxu0 %v892
        %926 = vmatprep.subr.bf16.mxu0 %v895
        %927 = vmatpush1.bf16.msra.mxu0 %v894
        %928 = vmatprep.subr.bf16.mxu0 %v897
        %929 = vmatpush1.bf16.msra.mxu0 %v896
        %930 = vmatprep.subr.bf16.mxu0 %v899
        %931 = vmatpush1.bf16.msra.mxu0 %v898
        %932 = vmatprep.subr.bf16.mxu0 %v901
        %933 = vmatpush1.bf16.msra.mxu0 %v900
        %934 = vmatprep.subr.bf16.mxu0 %v903
        %935 = vmatpush1.bf16.msra.mxu0 %v902
        %936 = vmatprep.subr.bf16.mxu0 %v905
        %937 = vmatpush1.bf16.msra.mxu0 %v904
        %938 = vmatprep.mubr.bf16.mxu0 %v873
        %939 = vmatmul.mubr.bf16.gmra.mrb[0].mxu0 %v872
        %v940 = vpop.f32.mrb[0].mxu0
        %v941 = vadd.f32 0.0, %v940
        %v942 = vpop.f32.mrb[0].mxu0
        %v943 = vadd.f32 0.0, %v942
        %v944 = vpop.f32.mrb[0].mxu0
        %v945 = vpop.f32.mrb[0].mxu0
        %946 = vdwg.mxu0
        %v947 = vadd.f32 %v870, %v941
        %v948 = vadd.f32 %v871, %v943
        %v949 = vtanh.pop %v947
        %v950 = vtanh.pop %v948
        %s951 = smul.u32 4, 2
        %s952 = smul.addr %s951, 8
        %s953 = scalar_lea.vmem [#allocation5], %s952
        %954 = vst [vmem:[%s953] sm:$0xff] %v949
        %955 = vst [vmem:[%s953 + $0x8] sm:$0xff] %v950
        %s956 = scalar_lea.vmem [#allocation4], 80
        %v957 = vld [vmem:[%s956] sm:$0xff]
        %v958 = vld [vmem:[%s956 + $0x8] sm:$0xff]
        %v959 = vpack.c.bf16 %v949, %v949
        %v960 = vpack.c.bf16 %v950, %v950
        %v961 = vld [vmem:[#allocation2] sm:$0xff]
        %v962 = vld [vmem:[#allocation2 + $0x8] sm:$0xff]
        %v963 = vld [vmem:[#allocation2 + $0x10] sm:$0xff]
        %v964 = vld [vmem:[#allocation2 + $0x18] sm:$0xff]
        %v965 = vld [vmem:[#allocation2 + $0x20] sm:$0xff]
        %v966 = vld [vmem:[#allocation2 + $0x28] sm:$0xff]
        %v967 = vld [vmem:[#allocation2 + $0x30] sm:$0xff]
        %v968 = vld [vmem:[#allocation2 + $0x38] sm:$0xff]
        %v969 = vld [vmem:[#allocation2 + $0x40] sm:$0xff]
        %v970 = vld [vmem:[#allocation2 + $0x48] sm:$0xff]
        %v971 = vld [vmem:[#allocation2 + $0x50] sm:$0xff]
        %v972 = vld [vmem:[#allocation2 + $0x58] sm:$0xff]
        %v973 = vld [vmem:[#allocation2 + $0x60] sm:$0xff]
        %v974 = vld [vmem:[#allocation2 + $0x68] sm:$0xff]
        %v975 = vld [vmem:[#allocation2 + $0x70] sm:$0xff]
        %v976 = vld [vmem:[#allocation2 + $0x78] sm:$0xff]
        %v977 = vld [vmem:[#allocation2 + $0x80] sm:$0xff]
        %v978 = vld [vmem:[#allocation2 + $0x88] sm:$0xff]
        %v979 = vld [vmem:[#allocation2 + $0x90] sm:$0xff]
        %v980 = vld [vmem:[#allocation2 + $0x98] sm:$0xff]
        %v981 = vld [vmem:[#allocation2 + $0xa0] sm:$0xff]
        %v982 = vld [vmem:[#allocation2 + $0xa8] sm:$0xff]
        %v983 = vld [vmem:[#allocation2 + $0xb0] sm:$0xff]
        %v984 = vld [vmem:[#allocation2 + $0xb8] sm:$0xff]
        %v985 = vld [vmem:[#allocation2 + $0xc0] sm:$0xff]
        %v986 = vld [vmem:[#allocation2 + $0xc8] sm:$0xff]
        %v987 = vld [vmem:[#allocation2 + $0xd0] sm:$0xff]
        %v988 = vld [vmem:[#allocation2 + $0xd8] sm:$0xff]
        %v989 = vld [vmem:[#allocation2 + $0xe0] sm:$0xff]
        %v990 = vld [vmem:[#allocation2 + $0xe8] sm:$0xff]
        %v991 = vld [vmem:[#allocation2 + $0xf0] sm:$0xff]
        %v992 = vld [vmem:[#allocation2 + $0xf8] sm:$0xff]
        %993 = vmatprep.subr.bf16.mxu0 %v962
        %994 = vmatpush1.bf16.msra.mxu0 %v961
        %995 = vmatprep.subr.bf16.mxu0 %v964
        %996 = vmatpush1.bf16.msra.mxu0 %v963
        %997 = vmatprep.subr.bf16.mxu0 %v966
        %998 = vmatpush1.bf16.msra.mxu0 %v965
        %999 = vmatprep.subr.bf16.mxu0 %v968
        %1000 = vmatpush1.bf16.msra.mxu0 %v967
        %1001 = vmatprep.subr.bf16.mxu0 %v970
        %1002 = vmatpush1.bf16.msra.mxu0 %v969
        %1003 = vmatprep.subr.bf16.mxu0 %v972
        %1004 = vmatpush1.bf16.msra.mxu0 %v971
        %1005 = vmatprep.subr.bf16.mxu0 %v974
        %1006 = vmatpush1.bf16.msra.mxu0 %v973
        %1007 = vmatprep.subr.bf16.mxu0 %v976
        %1008 = vmatpush1.bf16.msra.mxu0 %v975
        %1009 = vmatprep.subr.bf16.mxu0 %v978
        %1010 = vmatpush1.bf16.msra.mxu0 %v977
        %1011 = vmatprep.subr.bf16.mxu0 %v980
        %1012 = vmatpush1.bf16.msra.mxu0 %v979
        %1013 = vmatprep.subr.bf16.mxu0 %v982
        %1014 = vmatpush1.bf16.msra.mxu0 %v981
        %1015 = vmatprep.subr.bf16.mxu0 %v984
        %1016 = vmatpush1.bf16.msra.mxu0 %v983
        %1017 = vmatprep.subr.bf16.mxu0 %v986
        %1018 = vmatpush1.bf16.msra.mxu0 %v985
        %1019 = vmatprep.subr.bf16.mxu0 %v988
        %1020 = vmatpush1.bf16.msra.mxu0 %v987
        %1021 = vmatprep.subr.bf16.mxu0 %v990
        %1022 = vmatpush1.bf16.msra.mxu0 %v989
        %1023 = vmatprep.subr.bf16.mxu0 %v992
        %1024 = vmatpush1.bf16.msra.mxu0 %v991
        %1025 = vmatprep.mubr.bf16.mxu0 %v960
        %1026 = vmatmul.mubr.bf16.gmra.mrb[0].mxu0 %v959
        %v1027 = vpop.f32.mrb[0].mxu0
        %v1028 = vadd.f32 0.0, %v1027
        %v1029 = vpop.f32.mrb[0].mxu0
        %v1030 = vadd.f32 0.0, %v1029
        %v1031 = vpop.f32.mrb[0].mxu0
        %v1032 = vpop.f32.mrb[0].mxu0
        %1033 = vdwg.mxu0
        %v1034 = vadd.f32 %v957, %v1028
        %v1035 = vadd.f32 %v958, %v1030
        %v1036 = vtanh.pop %v1034
        %v1037 = vtanh.pop %v1035
        %s1038 = smul.u32 5, 2
        %s1039 = smul.addr %s1038, 8
        %s1040 = scalar_lea.vmem [#allocation5], %s1039
        %1041 = vst [vmem:[%s1040] sm:$0xff] %v1036
        %1042 = vst [vmem:[%s1040 + $0x8] sm:$0xff] %v1037
        %s1043 = scalar_lea.vmem [#allocation4], 96
        %v1044 = vld [vmem:[%s1043] sm:$0xff]
        %v1045 = vld [vmem:[%s1043 + $0x8] sm:$0xff]
        %v1046 = vpack.c.bf16 %v1036, %v1036
        %v1047 = vpack.c.bf16 %v1037, %v1037
        %v1048 = vld [vmem:[#allocation2] sm:$0xff]
        %v1049 = vld [vmem:[#allocation2 + $0x8] sm:$0xff]
        %v1050 = vld [vmem:[#allocation2 + $0x10] sm:$0xff]
        %v1051 = vld [vmem:[#allocation2 + $0x18] sm:$0xff]
        %v1052 = vld [vmem:[#allocation2 + $0x20] sm:$0xff]
        %v1053 = vld [vmem:[#allocation2 + $0x28] sm:$0xff]
        %v1054 = vld [vmem:[#allocation2 + $0x30] sm:$0xff]
        %v1055 = vld [vmem:[#allocation2 + $0x38] sm:$0xff]
        %v1056 = vld [vmem:[#allocation2 + $0x40] sm:$0xff]
        %v1057 = vld [vmem:[#allocation2 + $0x48] sm:$0xff]
        %v1058 = vld [vmem:[#allocation2 + $0x50] sm:$0xff]
        %v1059 = vld [vmem:[#allocation2 + $0x58] sm:$0xff]
        %v1060 = vld [vmem:[#allocation2 + $0x60] sm:$0xff]
        %v1061 = vld [vmem:[#allocation2 + $0x68] sm:$0xff]
        %v1062 = vld [vmem:[#allocation2 + $0x70] sm:$0xff]
        %v1063 = vld [vmem:[#allocation2 + $0x78] sm:$0xff]
        %v1064 = vld [vmem:[#allocation2 + $0x80] sm:$0xff]
        %v1065 = vld [vmem:[#allocation2 + $0x88] sm:$0xff]
        %v1066 = vld [vmem:[#allocation2 + $0x90] sm:$0xff]
        %v1067 = vld [vmem:[#allocation2 + $0x98] sm:$0xff]
        %v1068 = vld [vmem:[#allocation2 + $0xa0] sm:$0xff]
        %v1069 = vld [vmem:[#allocation2 + $0xa8] sm:$0xff]
        %v1070 = vld [vmem:[#allocation2 + $0xb0] sm:$0xff]
        %v1071 = vld [vmem:[#allocation2 + $0xb8] sm:$0xff]
        %v1072 = vld [vmem:[#allocation2 + $0xc0] sm:$0xff]
        %v1073 = vld [vmem:[#allocation2 + $0xc8] sm:$0xff]
        %v1074 = vld [vmem:[#allocation2 + $0xd0] sm:$0xff]
        %v1075 = vld [vmem:[#allocation2 + $0xd8] sm:$0xff]
        %v1076 = vld [vmem:[#allocation2 + $0xe0] sm:$0xff]
        %v1077 = vld [vmem:[#allocation2 + $0xe8] sm:$0xff]
        %v1078 = vld [vmem:[#allocation2 + $0xf0] sm:$0xff]
        %v1079 = vld [vmem:[#allocation2 + $0xf8] sm:$0xff]
        %1080 = vmatprep.subr.bf16.mxu0 %v1049
        %1081 = vmatpush1.bf16.msra.mxu0 %v1048
        %1082 = vmatprep.subr.bf16.mxu0 %v1051
        %1083 = vmatpush1.bf16.msra.mxu0 %v1050
        %1084 = vmatprep.subr.bf16.mxu0 %v1053
        %1085 = vmatpush1.bf16.msra.mxu0 %v1052
        %1086 = vmatprep.subr.bf16.mxu0 %v1055
        %1087 = vmatpush1.bf16.msra.mxu0 %v1054
        %1088 = vmatprep.subr.bf16.mxu0 %v1057
        %1089 = vmatpush1.bf16.msra.mxu0 %v1056
        %1090 = vmatprep.subr.bf16.mxu0 %v1059
        %1091 = vmatpush1.bf16.msra.mxu0 %v1058
        %1092 = vmatprep.subr.bf16.mxu0 %v1061
        %1093 = vmatpush1.bf16.msra.mxu0 %v1060
        %1094 = vmatprep.subr.bf16.mxu0 %v1063
        %1095 = vmatpush1.bf16.msra.mxu0 %v1062
        %1096 = vmatprep.subr.bf16.mxu0 %v1065
        %1097 = vmatpush1.bf16.msra.mxu0 %v1064
        %1098 = vmatprep.subr.bf16.mxu0 %v1067
        %1099 = vmatpush1.bf16.msra.mxu0 %v1066
        %1100 = vmatprep.subr.bf16.mxu0 %v1069
        %1101 = vmatpush1.bf16.msra.mxu0 %v1068
        %1102 = vmatprep.subr.bf16.mxu0 %v1071
        %1103 = vmatpush1.bf16.msra.mxu0 %v1070
        %1104 = vmatprep.subr.bf16.mxu0 %v1073
        %1105 = vmatpush1.bf16.msra.mxu0 %v1072
        %1106 = vmatprep.subr.bf16.mxu0 %v1075
        %1107 = vmatpush1.bf16.msra.mxu0 %v1074
        %1108 = vmatprep.subr.bf16.mxu0 %v1077
        %1109 = vmatpush1.bf16.msra.mxu0 %v1076
        %1110 = vmatprep.subr.bf16.mxu0 %v1079
        %1111 = vmatpush1.bf16.msra.mxu0 %v1078
        %1112 = vmatprep.mubr.bf16.mxu0 %v1047
        %1113 = vmatmul.mubr.bf16.gmra.mrb[0].mxu0 %v1046
        %v1114 = vpop.f32.mrb[0].mxu0
        %v1115 = vadd.f32 0.0, %v1114
        %v1116 = vpop.f32.mrb[0].mxu0
        %v1117 = vadd.f32 0.0, %v1116
        %v1118 = vpop.f32.mrb[0].mxu0
        %v1119 = vpop.f32.mrb[0].mxu0
        %1120 = vdwg.mxu0
        %v1121 = vadd.f32 %v1044, %v1115
        %v1122 = vadd.f32 %v1045, %v1117
        %v1123 = vtanh.pop %v1121
        %v1124 = vtanh.pop %v1122
        %s1125 = smul.u32 6, 2
        %s1126 = smul.addr %s1125, 8
        %s1127 = scalar_lea.vmem [#allocation5], %s1126
        %1128 = vst [vmem:[%s1127] sm:$0xff] %v1123
        %1129 = vst [vmem:[%s1127 + $0x8] sm:$0xff] %v1124
        %s1130 = scalar_lea.vmem [#allocation4], 112
        %v1131 = vld [vmem:[%s1130] sm:$0xff]
        %v1132 = vld [vmem:[%s1130 + $0x8] sm:$0xff]
        %v1133 = vpack.c.bf16 %v1123, %v1123
        %v1134 = vpack.c.bf16 %v1124, %v1124
        %v1135 = vld [vmem:[#allocation2] sm:$0xff]
        %v1136 = vld [vmem:[#allocation2 + $0x8] sm:$0xff]
        %v1137 = vld [vmem:[#allocation2 + $0x10] sm:$0xff]
        %v1138 = vld [vmem:[#allocation2 + $0x18] sm:$0xff]
        %v1139 = vld [vmem:[#allocation2 + $0x20] sm:$0xff]
        %v1140 = vld [vmem:[#allocation2 + $0x28] sm:$0xff]
        %v1141 = vld [vmem:[#allocation2 + $0x30] sm:$0xff]
        %v1142 = vld [vmem:[#allocation2 + $0x38] sm:$0xff]
        %v1143 = vld [vmem:[#allocation2 + $0x40] sm:$0xff]
        %v1144 = vld [vmem:[#allocation2 + $0x48] sm:$0xff]
        %v1145 = vld [vmem:[#allocation2 + $0x50] sm:$0xff]
        %v1146 = vld [vmem:[#allocation2 + $0x58] sm:$0xff]
        %v1147 = vld [vmem:[#allocation2 + $0x60] sm:$0xff]
        %v1148 = vld [vmem:[#allocation2 + $0x68] sm:$0xff]
        %v1149 = vld [vmem:[#allocation2 + $0x70] sm:$0xff]
        %v1150 = vld [vmem:[#allocation2 + $0x78] sm:$0xff]
        %v1151 = vld [vmem:[#allocation2 + $0x80] sm:$0xff]
        %v1152 = vld [vmem:[#allocation2 + $0x88] sm:$0xff]
        %v1153 = vld [vmem:[#allocation2 + $0x90] sm:$0xff]
        %v1154 = vld [vmem:[#allocation2 + $0x98] sm:$0xff]
        %v1155 = vld [vmem:[#allocation2 + $0xa0] sm:$0xff]
        %v1156 = vld [vmem:[#allocation2 + $0xa8] sm:$0xff]
        %v1157 = vld [vmem:[#allocation2 + $0xb0] sm:$0xff]
        %v1158 = vld [vmem:[#allocation2 + $0xb8] sm:$0xff]
        %v1159 = vld [vmem:[#allocation2 + $0xc0] sm:$0xff]
        %v1160 = vld [vmem:[#allocation2 + $0xc8] sm:$0xff]
        %v1161 = vld [vmem:[#allocation2 + $0xd0] sm:$0xff]
        %v1162 = vld [vmem:[#allocation2 + $0xd8] sm:$0xff]
        %v1163 = vld [vmem:[#allocation2 + $0xe0] sm:$0xff]
        %v1164 = vld [vmem:[#allocation2 + $0xe8] sm:$0xff]
        %v1165 = vld [vmem:[#allocation2 + $0xf0] sm:$0xff]
        %v1166 = vld [vmem:[#allocation2 + $0xf8] sm:$0xff]
        %1167 = vmatprep.subr.bf16.mxu0 %v1136
        %1168 = vmatpush1.bf16.msra.mxu0 %v1135
        %1169 = vmatprep.subr.bf16.mxu0 %v1138
        %1170 = vmatpush1.bf16.msra.mxu0 %v1137
        %1171 = vmatprep.subr.bf16.mxu0 %v1140
        %1172 = vmatpush1.bf16.msra.mxu0 %v1139
        %1173 = vmatprep.subr.bf16.mxu0 %v1142
        %1174 = vmatpush1.bf16.msra.mxu0 %v1141
        %1175 = vmatprep.subr.bf16.mxu0 %v1144
        %1176 = vmatpush1.bf16.msra.mxu0 %v1143
        %1177 = vmatprep.subr.bf16.mxu0 %v1146
        %1178 = vmatpush1.bf16.msra.mxu0 %v1145
        %1179 = vmatprep.subr.bf16.mxu0 %v1148
        %1180 = vmatpush1.bf16.msra.mxu0 %v1147
        %1181 = vmatprep.subr.bf16.mxu0 %v1150
        %1182 = vmatpush1.bf16.msra.mxu0 %v1149
        %1183 = vmatprep.subr.bf16.mxu0 %v1152
        %1184 = vmatpush1.bf16.msra.mxu0 %v1151
        %1185 = vmatprep.subr.bf16.mxu0 %v1154
        %1186 = vmatpush1.bf16.msra.mxu0 %v1153
        %1187 = vmatprep.subr.bf16.mxu0 %v1156
        %1188 = vmatpush1.bf16.msra.mxu0 %v1155
        %1189 = vmatprep.subr.bf16.mxu0 %v1158
        %1190 = vmatpush1.bf16.msra.mxu0 %v1157
        %1191 = vmatprep.subr.bf16.mxu0 %v1160
        %1192 = vmatpush1.bf16.msra.mxu0 %v1159
        %1193 = vmatprep.subr.bf16.mxu0 %v1162
        %1194 = vmatpush1.bf16.msra.mxu0 %v1161
        %1195 = vmatprep.subr.bf16.mxu0 %v1164
        %1196 = vmatpush1.bf16.msra.mxu0 %v1163
        %1197 = vmatprep.subr.bf16.mxu0 %v1166
        %1198 = vmatpush1.bf16.msra.mxu0 %v1165
        %1199 = vmatprep.mubr.bf16.mxu0 %v1134
        %1200 = vmatmul.mubr.bf16.gmra.mrb[0].mxu0 %v1133
        %v1201 = vpop.f32.mrb[0].mxu0
        %v1202 = vadd.f32 0.0, %v1201
        %v1203 = vpop.f32.mrb[0].mxu0
        %v1204 = vadd.f32 0.0, %v1203
        %v1205 = vpop.f32.mrb[0].mxu0
        %v1206 = vpop.f32.mrb[0].mxu0
        %1207 = vdwg.mxu0
        %v1208 = vadd.f32 %v1131, %v1202
        %v1209 = vadd.f32 %v1132, %v1204
        %v1210 = vtanh.pop %v1208
        %v1211 = vtanh.pop %v1209
        %s1212 = smul.u32 7, 2
        %s1213 = smul.addr %s1212, 8
        %s1214 = scalar_lea.vmem [#allocation5], %s1213
        %1215 = vst [vmem:[%s1214] sm:$0xff] %v1210
        %1216 = vst [vmem:[%s1214 + $0x8] sm:$0xff] %v1211
        %s1217 = scalar_lea.vmem [#allocation4], 128
        %v1218 = vld [vmem:[%s1217] sm:$0xff]
        %v1219 = vld [vmem:[%s1217 + $0x8] sm:$0xff]
        %v1220 = vpack.c.bf16 %v1210, %v1210
        %v1221 = vpack.c.bf16 %v1211, %v1211
        %v1222 = vld [vmem:[#allocation2] sm:$0xff]
        %v1223 = vld [vmem:[#allocation2 + $0x8] sm:$0xff]
        %v1224 = vld [vmem:[#allocation2 + $0x10] sm:$0xff]
        %v1225 = vld [vmem:[#allocation2 + $0x18] sm:$0xff]
        %v1226 = vld [vmem:[#allocation2 + $0x20] sm:$0xff]
        %v1227 = vld [vmem:[#allocation2 + $0x28] sm:$0xff]
        %v1228 = vld [vmem:[#allocation2 + $0x30] sm:$0xff]
        %v1229 = vld [vmem:[#allocation2 + $0x38] sm:$0xff]
        %v1230 = vld [vmem:[#allocation2 + $0x40] sm:$0xff]
        %v1231 = vld [vmem:[#allocation2 + $0x48] sm:$0xff]
        %v1232 = vld [vmem:[#allocation2 + $0x50] sm:$0xff]
        %v1233 = vld [vmem:[#allocation2 + $0x58] sm:$0xff]
        %v1234 = vld [vmem:[#allocation2 + $0x60] sm:$0xff]
        %v1235 = vld [vmem:[#allocation2 + $0x68] sm:$0xff]
        %v1236 = vld [vmem:[#allocation2 + $0x70] sm:$0xff]
        %v1237 = vld [vmem:[#allocation2 + $0x78] sm:$0xff]
        %v1238 = vld [vmem:[#allocation2 + $0x80] sm:$0xff]
        %v1239 = vld [vmem:[#allocation2 + $0x88] sm:$0xff]
        %v1240 = vld [vmem:[#allocation2 + $0x90] sm:$0xff]
        %v1241 = vld [vmem:[#allocation2 + $0x98] sm:$0xff]
        %v1242 = vld [vmem:[#allocation2 + $0xa0] sm:$0xff]
        %v1243 = vld [vmem:[#allocation2 + $0xa8] sm:$0xff]
        %v1244 = vld [vmem:[#allocation2 + $0xb0] sm:$0xff]
        %v1245 = vld [vmem:[#allocation2 + $0xb8] sm:$0xff]
        %v1246 = vld [vmem:[#allocation2 + $0xc0] sm:$0xff]
        %v1247 = vld [vmem:[#allocation2 + $0xc8] sm:$0xff]
        %v1248 = vld [vmem:[#allocation2 + $0xd0] sm:$0xff]
        %v1249 = vld [vmem:[#allocation2 + $0xd8] sm:$0xff]
        %v1250 = vld [vmem:[#allocation2 + $0xe0] sm:$0xff]
        %v1251 = vld [vmem:[#allocation2 + $0xe8] sm:$0xff]
        %v1252 = vld [vmem:[#allocation2 + $0xf0] sm:$0xff]
        %v1253 = vld [vmem:[#allocation2 + $0xf8] sm:$0xff]
        %1254 = vmatprep.subr.bf16.mxu0 %v1223
        %1255 = vmatpush1.bf16.msra.mxu0 %v1222
        %1256 = vmatprep.subr.bf16.mxu0 %v1225
        %1257 = vmatpush1.bf16.msra.mxu0 %v1224
        %1258 = vmatprep.subr.bf16.mxu0 %v1227
        %1259 = vmatpush1.bf16.msra.mxu0 %v1226
        %1260 = vmatprep.subr.bf16.mxu0 %v1229
        %1261 = vmatpush1.bf16.msra.mxu0 %v1228
        %1262 = vmatprep.subr.bf16.mxu0 %v1231
        %1263 = vmatpush1.bf16.msra.mxu0 %v1230
        %1264 = vmatprep.subr.bf16.mxu0 %v1233
        %1265 = vmatpush1.bf16.msra.mxu0 %v1232
        %1266 = vmatprep.subr.bf16.mxu0 %v1235
        %1267 = vmatpush1.bf16.msra.mxu0 %v1234
        %1268 = vmatprep.subr.bf16.mxu0 %v1237
        %1269 = vmatpush1.bf16.msra.mxu0 %v1236
        %1270 = vmatprep.subr.bf16.mxu0 %v1239
        %1271 = vmatpush1.bf16.msra.mxu0 %v1238
        %1272 = vmatprep.subr.bf16.mxu0 %v1241
        %1273 = vmatpush1.bf16.msra.mxu0 %v1240
        %1274 = vmatprep.subr.bf16.mxu0 %v1243
        %1275 = vmatpush1.bf16.msra.mxu0 %v1242
        %1276 = vmatprep.subr.bf16.mxu0 %v1245
        %1277 = vmatpush1.bf16.msra.mxu0 %v1244
        %1278 = vmatprep.subr.bf16.mxu0 %v1247
        %1279 = vmatpush1.bf16.msra.mxu0 %v1246
        %1280 = vmatprep.subr.bf16.mxu0 %v1249
        %1281 = vmatpush1.bf16.msra.mxu0 %v1248
        %1282 = vmatprep.subr.bf16.mxu0 %v1251
        %1283 = vmatpush1.bf16.msra.mxu0 %v1250
        %1284 = vmatprep.subr.bf16.mxu0 %v1253
        %1285 = vmatpush1.bf16.msra.mxu0 %v1252
        %1286 = vmatprep.mubr.bf16.mxu0 %v1221
        %1287 = vmatmul.mubr.bf16.gmra.mrb[0].mxu0 %v1220
        %v1288 = vpop.f32.mrb[0].mxu0
        %v1289 = vadd.f32 0.0, %v1288
        %v1290 = vpop.f32.mrb[0].mxu0
        %v1291 = vadd.f32 0.0, %v1290
        %v1292 = vpop.f32.mrb[0].mxu0
        %v1293 = vpop.f32.mrb[0].mxu0
        %1294 = vdwg.mxu0
        %v1295 = vadd.f32 %v1218, %v1289
        %v1296 = vadd.f32 %v1219, %v1291
        %v1297 = vtanh.pop %v1295
        %v1298 = vtanh.pop %v1296
        %s1299 = smul.u32 8, 2
        %s1300 = smul.addr %s1299, 8
        %s1301 = scalar_lea.vmem [#allocation5], %s1300
        %1302 = vst [vmem:[%s1301] sm:$0xff] %v1297
        %1303 = vst [vmem:[%s1301 + $0x8] sm:$0xff] %v1298
        %s1304 = scalar_lea.vmem [#allocation4], 144
        %v1305 = vld [vmem:[%s1304] sm:$0xff]
        %v1306 = vld [vmem:[%s1304 + $0x8] sm:$0xff]
        %v1307 = vpack.c.bf16 %v1297, %v1297
        %v1308 = vpack.c.bf16 %v1298, %v1298
        %v1309 = vld [vmem:[#allocation2] sm:$0xff]
        %v1310 = vld [vmem:[#allocation2 + $0x8] sm:$0xff]
        %v1311 = vld [vmem:[#allocation2 + $0x10] sm:$0xff]
        %v1312 = vld [vmem:[#allocation2 + $0x18] sm:$0xff]
        %v1313 = vld [vmem:[#allocation2 + $0x20] sm:$0xff]
        %v1314 = vld [vmem:[#allocation2 + $0x28] sm:$0xff]
        %v1315 = vld [vmem:[#allocation2 + $0x30] sm:$0xff]
        %v1316 = vld [vmem:[#allocation2 + $0x38] sm:$0xff]
        %v1317 = vld [vmem:[#allocation2 + $0x40] sm:$0xff]
        %v1318 = vld [vmem:[#allocation2 + $0x48] sm:$0xff]
        %v1319 = vld [vmem:[#allocation2 + $0x50] sm:$0xff]
        %v1320 = vld [vmem:[#allocation2 + $0x58] sm:$0xff]
        %v1321 = vld [vmem:[#allocation2 + $0x60] sm:$0xff]
        %v1322 = vld [vmem:[#allocation2 + $0x68] sm:$0xff]
        %v1323 = vld [vmem:[#allocation2 + $0x70] sm:$0xff]
        %v1324 = vld [vmem:[#allocation2 + $0x78] sm:$0xff]
        %v1325 = vld [vmem:[#allocation2 + $0x80] sm:$0xff]
        %v1326 = vld [vmem:[#allocation2 + $0x88] sm:$0xff]
        %v1327 = vld [vmem:[#allocation2 + $0x90] sm:$0xff]
        %v1328 = vld [vmem:[#allocation2 + $0x98] sm:$0xff]
        %v1329 = vld [vmem:[#allocation2 + $0xa0] sm:$0xff]
        %v1330 = vld [vmem:[#allocation2 + $0xa8] sm:$0xff]
        %v1331 = vld [vmem:[#allocation2 + $0xb0] sm:$0xff]
        %v1332 = vld [vmem:[#allocation2 + $0xb8] sm:$0xff]
        %v1333 = vld [vmem:[#allocation2 + $0xc0] sm:$0xff]
        %v1334 = vld [vmem:[#allocation2 + $0xc8] sm:$0xff]
        %v1335 = vld [vmem:[#allocation2 + $0xd0] sm:$0xff]
        %v1336 = vld [vmem:[#allocation2 + $0xd8] sm:$0xff]
        %v1337 = vld [vmem:[#allocation2 + $0xe0] sm:$0xff]
        %v1338 = vld [vmem:[#allocation2 + $0xe8] sm:$0xff]
        %v1339 = vld [vmem:[#allocation2 + $0xf0] sm:$0xff]
        %v1340 = vld [vmem:[#allocation2 + $0xf8] sm:$0xff]
        %1341 = vmatprep.subr.bf16.mxu0 %v1310
        %1342 = vmatpush1.bf16.msra.mxu0 %v1309
        %1343 = vmatprep.subr.bf16.mxu0 %v1312
        %1344 = vmatpush1.bf16.msra.mxu0 %v1311
        %1345 = vmatprep.subr.bf16.mxu0 %v1314
        %1346 = vmatpush1.bf16.msra.mxu0 %v1313
        %1347 = vmatprep.subr.bf16.mxu0 %v1316
        %1348 = vmatpush1.bf16.msra.mxu0 %v1315
        %1349 = vmatprep.subr.bf16.mxu0 %v1318
        %1350 = vmatpush1.bf16.msra.mxu0 %v1317
        %1351 = vmatprep.subr.bf16.mxu0 %v1320
        %1352 = vmatpush1.bf16.msra.mxu0 %v1319
        %1353 = vmatprep.subr.bf16.mxu0 %v1322
        %1354 = vmatpush1.bf16.msra.mxu0 %v1321
        %1355 = vmatprep.subr.bf16.mxu0 %v1324
        %1356 = vmatpush1.bf16.msra.mxu0 %v1323
        %1357 = vmatprep.subr.bf16.mxu0 %v1326
        %1358 = vmatpush1.bf16.msra.mxu0 %v1325
        %1359 = vmatprep.subr.bf16.mxu0 %v1328
        %1360 = vmatpush1.bf16.msra.mxu0 %v1327
        %1361 = vmatprep.subr.bf16.mxu0 %v1330
        %1362 = vmatpush1.bf16.msra.mxu0 %v1329
        %1363 = vmatprep.subr.bf16.mxu0 %v1332
        %1364 = vmatpush1.bf16.msra.mxu0 %v1331
        %1365 = vmatprep.subr.bf16.mxu0 %v1334
        %1366 = vmatpush1.bf16.msra.mxu0 %v1333
        %1367 = vmatprep.subr.bf16.mxu0 %v1336
        %1368 = vmatpush1.bf16.msra.mxu0 %v1335
        %1369 = vmatprep.subr.bf16.mxu0 %v1338
        %1370 = vmatpush1.bf16.msra.mxu0 %v1337
        %1371 = vmatprep.subr.bf16.mxu0 %v1340
        %1372 = vmatpush1.bf16.msra.mxu0 %v1339
        %1373 = vmatprep.mubr.bf16.mxu0 %v1308
        %1374 = vmatmul.mubr.bf16.gmra.mrb[0].mxu0 %v1307
        %v1375 = vpop.f32.mrb[0].mxu0
        %v1376 = vadd.f32 0.0, %v1375
        %v1377 = vpop.f32.mrb[0].mxu0
        %v1378 = vadd.f32 0.0, %v1377
        %v1379 = vpop.f32.mrb[0].mxu0
        %v1380 = vpop.f32.mrb[0].mxu0
        %1381 = vdwg.mxu0
        %v1382 = vadd.f32 %v1305, %v1376
        %v1383 = vadd.f32 %v1306, %v1378
        %v1384 = vtanh.pop %v1382
        %v1385 = vtanh.pop %v1383
        %s1386 = smul.u32 9, 2
        %s1387 = smul.addr %s1386, 8
        %s1388 = scalar_lea.vmem [#allocation5], %s1387
        %1389 = vst [vmem:[%s1388] sm:$0xff] %v1384
        %1390 = vst [vmem:[%s1388 + $0x8] sm:$0xff] %v1385
        %s1391 = scalar_lea.vmem [#allocation4], 160
        %v1392 = vld [vmem:[%s1391] sm:$0xff]
        %v1393 = vld [vmem:[%s1391 + $0x8] sm:$0xff]
        %v1394 = vpack.c.bf16 %v1384, %v1384
        %v1395 = vpack.c.bf16 %v1385, %v1385
        %v1396 = vld [vmem:[#allocation2] sm:$0xff]
        %v1397 = vld [vmem:[#allocation2 + $0x8] sm:$0xff]
        %v1398 = vld [vmem:[#allocation2 + $0x10] sm:$0xff]
        %v1399 = vld [vmem:[#allocation2 + $0x18] sm:$0xff]
        %v1400 = vld [vmem:[#allocation2 + $0x20] sm:$0xff]
        %v1401 = vld [vmem:[#allocation2 + $0x28] sm:$0xff]
        %v1402 = vld [vmem:[#allocation2 + $0x30] sm:$0xff]
        %v1403 = vld [vmem:[#allocation2 + $0x38] sm:$0xff]
        %v1404 = vld [vmem:[#allocation2 + $0x40] sm:$0xff]
        %v1405 = vld [vmem:[#allocation2 + $0x48] sm:$0xff]
        %v1406 = vld [vmem:[#allocation2 + $0x50] sm:$0xff]
        %v1407 = vld [vmem:[#allocation2 + $0x58] sm:$0xff]
        %v1408 = vld [vmem:[#allocation2 + $0x60] sm:$0xff]
        %v1409 = vld [vmem:[#allocation2 + $0x68] sm:$0xff]
        %v1410 = vld [vmem:[#allocation2 + $0x70] sm:$0xff]
        %v1411 = vld [vmem:[#allocation2 + $0x78] sm:$0xff]
        %v1412 = vld [vmem:[#allocation2 + $0x80] sm:$0xff]
        %v1413 = vld [vmem:[#allocation2 + $0x88] sm:$0xff]
        %v1414 = vld [vmem:[#allocation2 + $0x90] sm:$0xff]
        %v1415 = vld [vmem:[#allocation2 + $0x98] sm:$0xff]
        %v1416 = vld [vmem:[#allocation2 + $0xa0] sm:$0xff]
        %v1417 = vld [vmem:[#allocation2 + $0xa8] sm:$0xff]
        %v1418 = vld [vmem:[#allocation2 + $0xb0] sm:$0xff]
        %v1419 = vld [vmem:[#allocation2 + $0xb8] sm:$0xff]
        %v1420 = vld [vmem:[#allocation2 + $0xc0] sm:$0xff]
        %v1421 = vld [vmem:[#allocation2 + $0xc8] sm:$0xff]
        %v1422 = vld [vmem:[#allocation2 + $0xd0] sm:$0xff]
        %v1423 = vld [vmem:[#allocation2 + $0xd8] sm:$0xff]
        %v1424 = vld [vmem:[#allocation2 + $0xe0] sm:$0xff]
        %v1425 = vld [vmem:[#allocation2 + $0xe8] sm:$0xff]
        %v1426 = vld [vmem:[#allocation2 + $0xf0] sm:$0xff]
        %v1427 = vld [vmem:[#allocation2 + $0xf8] sm:$0xff]
        %1428 = vmatprep.subr.bf16.mxu0 %v1397
        %1429 = vmatpush1.bf16.msra.mxu0 %v1396
        %1430 = vmatprep.subr.bf16.mxu0 %v1399
        %1431 = vmatpush1.bf16.msra.mxu0 %v1398
        %1432 = vmatprep.subr.bf16.mxu0 %v1401
        %1433 = vmatpush1.bf16.msra.mxu0 %v1400
        %1434 = vmatprep.subr.bf16.mxu0 %v1403
        %1435 = vmatpush1.bf16.msra.mxu0 %v1402
        %1436 = vmatprep.subr.bf16.mxu0 %v1405
        %1437 = vmatpush1.bf16.msra.mxu0 %v1404
        %1438 = vmatprep.subr.bf16.mxu0 %v1407
        %1439 = vmatpush1.bf16.msra.mxu0 %v1406
        %1440 = vmatprep.subr.bf16.mxu0 %v1409
        %1441 = vmatpush1.bf16.msra.mxu0 %v1408
        %1442 = vmatprep.subr.bf16.mxu0 %v1411
        %1443 = vmatpush1.bf16.msra.mxu0 %v1410
        %1444 = vmatprep.subr.bf16.mxu0 %v1413
        %1445 = vmatpush1.bf16.msra.mxu0 %v1412
        %1446 = vmatprep.subr.bf16.mxu0 %v1415
        %1447 = vmatpush1.bf16.msra.mxu0 %v1414
        %1448 = vmatprep.subr.bf16.mxu0 %v1417
        %1449 = vmatpush1.bf16.msra.mxu0 %v1416
        %1450 = vmatprep.subr.bf16.mxu0 %v1419
        %1451 = vmatpush1.bf16.msra.mxu0 %v1418
        %1452 = vmatprep.subr.bf16.mxu0 %v1421
        %1453 = vmatpush1.bf16.msra.mxu0 %v1420
        %1454 = vmatprep.subr.bf16.mxu0 %v1423
        %1455 = vmatpush1.bf16.msra.mxu0 %v1422
        %1456 = vmatprep.subr.bf16.mxu0 %v1425
        %1457 = vmatpush1.bf16.msra.mxu0 %v1424
        %1458 = vmatprep.subr.bf16.mxu0 %v1427
        %1459 = vmatpush1.bf16.msra.mxu0 %v1426
        %1460 = vmatprep.mubr.bf16.mxu0 %v1395
        %1461 = vmatmul.mubr.bf16.gmra.mrb[0].mxu0 %v1394
        %v1462 = vpop.f32.mrb[0].mxu0
        %v1463 = vadd.f32 0.0, %v1462
        %v1464 = vpop.f32.mrb[0].mxu0
        %v1465 = vadd.f32 0.0, %v1464
        %v1466 = vpop.f32.mrb[0].mxu0
        %v1467 = vpop.f32.mrb[0].mxu0
        %1468 = vdwg.mxu0
        %v1469 = vadd.f32 %v1392, %v1463
        %v1470 = vadd.f32 %v1393, %v1465
        %v1471 = vtanh.pop %v1469
        %v1472 = vtanh.pop %v1470
        %s1473 = smul.u32 10, 2
        %s1474 = smul.addr %s1473, 8
        %s1475 = scalar_lea.vmem [#allocation5], %s1474
        %1476 = vst [vmem:[%s1475] sm:$0xff] %v1471
        %1477 = vst [vmem:[%s1475 + $0x8] sm:$0xff] %v1472
        %s1478 = scalar_lea.vmem [#allocation4], 176
        %v1479 = vld [vmem:[%s1478] sm:$0xff]
        %v1480 = vld [vmem:[%s1478 + $0x8] sm:$0xff]
        %v1481 = vpack.c.bf16 %v1471, %v1471
        %v1482 = vpack.c.bf16 %v1472, %v1472
        %v1483 = vld [vmem:[#allocation2] sm:$0xff]
        %v1484 = vld [vmem:[#allocation2 + $0x8] sm:$0xff]
        %v1485 = vld [vmem:[#allocation2 + $0x10] sm:$0xff]
        %v1486 = vld [vmem:[#allocation2 + $0x18] sm:$0xff]
        %v1487 = vld [vmem:[#allocation2 + $0x20] sm:$0xff]
        %v1488 = vld [vmem:[#allocation2 + $0x28] sm:$0xff]
        %v1489 = vld [vmem:[#allocation2 + $0x30] sm:$0xff]
        %v1490 = vld [vmem:[#allocation2 + $0x38] sm:$0xff]
        %v1491 = vld [vmem:[#allocation2 + $0x40] sm:$0xff]
        %v1492 = vld [vmem:[#allocation2 + $0x48] sm:$0xff]
        %v1493 = vld [vmem:[#allocation2 + $0x50] sm:$0xff]
        %v1494 = vld [vmem:[#allocation2 + $0x58] sm:$0xff]
        %v1495 = vld [vmem:[#allocation2 + $0x60] sm:$0xff]
        %v1496 = vld [vmem:[#allocation2 + $0x68] sm:$0xff]
        %v1497 = vld [vmem:[#allocation2 + $0x70] sm:$0xff]
        %v1498 = vld [vmem:[#allocation2 + $0x78] sm:$0xff]
        %v1499 = vld [vmem:[#allocation2 + $0x80] sm:$0xff]
        %v1500 = vld [vmem:[#allocation2 + $0x88] sm:$0xff]
        %v1501 = vld [vmem:[#allocation2 + $0x90] sm:$0xff]
        %v1502 = vld [vmem:[#allocation2 + $0x98] sm:$0xff]
        %v1503 = vld [vmem:[#allocation2 + $0xa0] sm:$0xff]
        %v1504 = vld [vmem:[#allocation2 + $0xa8] sm:$0xff]
        %v1505 = vld [vmem:[#allocation2 + $0xb0] sm:$0xff]
        %v1506 = vld [vmem:[#allocation2 + $0xb8] sm:$0xff]
        %v1507 = vld [vmem:[#allocation2 + $0xc0] sm:$0xff]
        %v1508 = vld [vmem:[#allocation2 + $0xc8] sm:$0xff]
        %v1509 = vld [vmem:[#allocation2 + $0xd0] sm:$0xff]
        %v1510 = vld [vmem:[#allocation2 + $0xd8] sm:$0xff]
        %v1511 = vld [vmem:[#allocation2 + $0xe0] sm:$0xff]
        %v1512 = vld [vmem:[#allocation2 + $0xe8] sm:$0xff]
        %v1513 = vld [vmem:[#allocation2 + $0xf0] sm:$0xff]
        %v1514 = vld [vmem:[#allocation2 + $0xf8] sm:$0xff]
        %1515 = vmatprep.subr.bf16.mxu0 %v1484
        %1516 = vmatpush1.bf16.msra.mxu0 %v1483
        %1517 = vmatprep.subr.bf16.mxu0 %v1486
        %1518 = vmatpush1.bf16.msra.mxu0 %v1485
        %1519 = vmatprep.subr.bf16.mxu0 %v1488
        %1520 = vmatpush1.bf16.msra.mxu0 %v1487
        %1521 = vmatprep.subr.bf16.mxu0 %v1490
        %1522 = vmatpush1.bf16.msra.mxu0 %v1489
        %1523 = vmatprep.subr.bf16.mxu0 %v1492
        %1524 = vmatpush1.bf16.msra.mxu0 %v1491
        %1525 = vmatprep.subr.bf16.mxu0 %v1494
        %1526 = vmatpush1.bf16.msra.mxu0 %v1493
        %1527 = vmatprep.subr.bf16.mxu0 %v1496
        %1528 = vmatpush1.bf16.msra.mxu0 %v1495
        %1529 = vmatprep.subr.bf16.mxu0 %v1498
        %1530 = vmatpush1.bf16.msra.mxu0 %v1497
        %1531 = vmatprep.subr.bf16.mxu0 %v1500
        %1532 = vmatpush1.bf16.msra.mxu0 %v1499
        %1533 = vmatprep.subr.bf16.mxu0 %v1502
        %1534 = vmatpush1.bf16.msra.mxu0 %v1501
        %1535 = vmatprep.subr.bf16.mxu0 %v1504
        %1536 = vmatpush1.bf16.msra.mxu0 %v1503
        %1537 = vmatprep.subr.bf16.mxu0 %v1506
        %1538 = vmatpush1.bf16.msra.mxu0 %v1505
        %1539 = vmatprep.subr.bf16.mxu0 %v1508
        %1540 = vmatpush1.bf16.msra.mxu0 %v1507
        %1541 = vmatprep.subr.bf16.mxu0 %v1510
        %1542 = vmatpush1.bf16.msra.mxu0 %v1509
        %1543 = vmatprep.subr.bf16.mxu0 %v1512
        %1544 = vmatpush1.bf16.msra.mxu0 %v1511
        %1545 = vmatprep.subr.bf16.mxu0 %v1514
        %1546 = vmatpush1.bf16.msra.mxu0 %v1513
        %1547 = vmatprep.mubr.bf16.mxu0 %v1482
        %1548 = vmatmul.mubr.bf16.gmra.mrb[0].mxu0 %v1481
        %v1549 = vpop.f32.mrb[0].mxu0
        %v1550 = vadd.f32 0.0, %v1549
        %v1551 = vpop.f32.mrb[0].mxu0
        %v1552 = vadd.f32 0.0, %v1551
        %v1553 = vpop.f32.mrb[0].mxu0
        %v1554 = vpop.f32.mrb[0].mxu0
        %1555 = vdwg.mxu0
        %v1556 = vadd.f32 %v1479, %v1550
        %v1557 = vadd.f32 %v1480, %v1552
        %v1558 = vtanh.pop %v1556
        %v1559 = vtanh.pop %v1557
        %s1560 = smul.u32 11, 2
        %s1561 = smul.addr %s1560, 8
        %s1562 = scalar_lea.vmem [#allocation5], %s1561
        %1563 = vst [vmem:[%s1562] sm:$0xff] %v1558
        %1564 = vst [vmem:[%s1562 + $0x8] sm:$0xff] %v1559
        %s1565 = scalar_lea.vmem [#allocation4], 192
        %v1566 = vld [vmem:[%s1565] sm:$0xff]
        %v1567 = vld [vmem:[%s1565 + $0x8] sm:$0xff]
        %v1568 = vpack.c.bf16 %v1558, %v1558
        %v1569 = vpack.c.bf16 %v1559, %v1559
        %v1570 = vld [vmem:[#allocation2] sm:$0xff]
        %v1571 = vld [vmem:[#allocation2 + $0x8] sm:$0xff]
        %v1572 = vld [vmem:[#allocation2 + $0x10] sm:$0xff]
        %v1573 = vld [vmem:[#allocation2 + $0x18] sm:$0xff]
        %v1574 = vld [vmem:[#allocation2 + $0x20] sm:$0xff]
        %v1575 = vld [vmem:[#allocation2 + $0x28] sm:$0xff]
        %v1576 = vld [vmem:[#allocation2 + $0x30] sm:$0xff]
        %v1577 = vld [vmem:[#allocation2 + $0x38] sm:$0xff]
        %v1578 = vld [vmem:[#allocation2 + $0x40] sm:$0xff]
        %v1579 = vld [vmem:[#allocation2 + $0x48] sm:$0xff]
        %v1580 = vld [vmem:[#allocation2 + $0x50] sm:$0xff]
        %v1581 = vld [vmem:[#allocation2 + $0x58] sm:$0xff]
        %v1582 = vld [vmem:[#allocation2 + $0x60] sm:$0xff]
        %v1583 = vld [vmem:[#allocation2 + $0x68] sm:$0xff]
        %v1584 = vld [vmem:[#allocation2 + $0x70] sm:$0xff]
        %v1585 = vld [vmem:[#allocation2 + $0x78] sm:$0xff]
        %v1586 = vld [vmem:[#allocation2 + $0x80] sm:$0xff]
        %v1587 = vld [vmem:[#allocation2 + $0x88] sm:$0xff]
        %v1588 = vld [vmem:[#allocation2 + $0x90] sm:$0xff]
        %v1589 = vld [vmem:[#allocation2 + $0x98] sm:$0xff]
        %v1590 = vld [vmem:[#allocation2 + $0xa0] sm:$0xff]
        %v1591 = vld [vmem:[#allocation2 + $0xa8] sm:$0xff]
        %v1592 = vld [vmem:[#allocation2 + $0xb0] sm:$0xff]
        %v1593 = vld [vmem:[#allocation2 + $0xb8] sm:$0xff]
        %v1594 = vld [vmem:[#allocation2 + $0xc0] sm:$0xff]
        %v1595 = vld [vmem:[#allocation2 + $0xc8] sm:$0xff]
        %v1596 = vld [vmem:[#allocation2 + $0xd0] sm:$0xff]
        %v1597 = vld [vmem:[#allocation2 + $0xd8] sm:$0xff]
        %v1598 = vld [vmem:[#allocation2 + $0xe0] sm:$0xff]
        %v1599 = vld [vmem:[#allocation2 + $0xe8] sm:$0xff]
        %v1600 = vld [vmem:[#allocation2 + $0xf0] sm:$0xff]
        %v1601 = vld [vmem:[#allocation2 + $0xf8] sm:$0xff]
        %1602 = vmatprep.subr.bf16.mxu0 %v1571
        %1603 = vmatpush1.bf16.msra.mxu0 %v1570
        %1604 = vmatprep.subr.bf16.mxu0 %v1573
        %1605 = vmatpush1.bf16.msra.mxu0 %v1572
        %1606 = vmatprep.subr.bf16.mxu0 %v1575
        %1607 = vmatpush1.bf16.msra.mxu0 %v1574
        %1608 = vmatprep.subr.bf16.mxu0 %v1577
        %1609 = vmatpush1.bf16.msra.mxu0 %v1576
        %1610 = vmatprep.subr.bf16.mxu0 %v1579
        %1611 = vmatpush1.bf16.msra.mxu0 %v1578
        %1612 = vmatprep.subr.bf16.mxu0 %v1581
        %1613 = vmatpush1.bf16.msra.mxu0 %v1580
        %1614 = vmatprep.subr.bf16.mxu0 %v1583
        %1615 = vmatpush1.bf16.msra.mxu0 %v1582
        %1616 = vmatprep.subr.bf16.mxu0 %v1585
        %1617 = vmatpush1.bf16.msra.mxu0 %v1584
        %1618 = vmatprep.subr.bf16.mxu0 %v1587
        %1619 = vmatpush1.bf16.msra.mxu0 %v1586
        %1620 = vmatprep.subr.bf16.mxu0 %v1589
        %1621 = vmatpush1.bf16.msra.mxu0 %v1588
        %1622 = vmatprep.subr.bf16.mxu0 %v1591
        %1623 = vmatpush1.bf16.msra.mxu0 %v1590
        %1624 = vmatprep.subr.bf16.mxu0 %v1593
        %1625 = vmatpush1.bf16.msra.mxu0 %v1592
        %1626 = vmatprep.subr.bf16.mxu0 %v1595
        %1627 = vmatpush1.bf16.msra.mxu0 %v1594
        %1628 = vmatprep.subr.bf16.mxu0 %v1597
        %1629 = vmatpush1.bf16.msra.mxu0 %v1596
        %1630 = vmatprep.subr.bf16.mxu0 %v1599
        %1631 = vmatpush1.bf16.msra.mxu0 %v1598
        %1632 = vmatprep.subr.bf16.mxu0 %v1601
        %1633 = vmatpush1.bf16.msra.mxu0 %v1600
        %1634 = vmatprep.mubr.bf16.mxu0 %v1569
        %1635 = vmatmul.mubr.bf16.gmra.mrb[0].mxu0 %v1568
        %v1636 = vpop.f32.mrb[0].mxu0
        %v1637 = vadd.f32 0.0, %v1636
        %v1638 = vpop.f32.mrb[0].mxu0
        %v1639 = vadd.f32 0.0, %v1638
        %v1640 = vpop.f32.mrb[0].mxu0
        %v1641 = vpop.f32.mrb[0].mxu0
        %1642 = vdwg.mxu0
        %v1643 = vadd.f32 %v1566, %v1637
        %v1644 = vadd.f32 %v1567, %v1639
        %v1645 = vtanh.pop %v1643
        %v1646 = vtanh.pop %v1644
        %s1647 = smul.u32 12, 2
        %s1648 = smul.addr %s1647, 8
        %s1649 = scalar_lea.vmem [#allocation5], %s1648
        %1650 = vst [vmem:[%s1649] sm:$0xff] %v1645
        %1651 = vst [vmem:[%s1649 + $0x8] sm:$0xff] %v1646
        %s1652 = scalar_lea.vmem [#allocation4], 208
        %v1653 = vld [vmem:[%s1652] sm:$0xff]
        %v1654 = vld [vmem:[%s1652 + $0x8] sm:$0xff]
        %v1655 = vpack.c.bf16 %v1645, %v1645
        %v1656 = vpack.c.bf16 %v1646, %v1646
        %v1657 = vld [vmem:[#allocation2] sm:$0xff]
        %v1658 = vld [vmem:[#allocation2 + $0x8] sm:$0xff]
        %v1659 = vld [vmem:[#allocation2 + $0x10] sm:$0xff]
        %v1660 = vld [vmem:[#allocation2 + $0x18] sm:$0xff]
        %v1661 = vld [vmem:[#allocation2 + $0x20] sm:$0xff]
        %v1662 = vld [vmem:[#allocation2 + $0x28] sm:$0xff]
        %v1663 = vld [vmem:[#allocation2 + $0x30] sm:$0xff]
        %v1664 = vld [vmem:[#allocation2 + $0x38] sm:$0xff]
        %v1665 = vld [vmem:[#allocation2 + $0x40] sm:$0xff]
        %v1666 = vld [vmem:[#allocation2 + $0x48] sm:$0xff]
        %v1667 = vld [vmem:[#allocation2 + $0x50] sm:$0xff]
        %v1668 = vld [vmem:[#allocation2 + $0x58] sm:$0xff]
        %v1669 = vld [vmem:[#allocation2 + $0x60] sm:$0xff]
        %v1670 = vld [vmem:[#allocation2 + $0x68] sm:$0xff]
        %v1671 = vld [vmem:[#allocation2 + $0x70] sm:$0xff]
        %v1672 = vld [vmem:[#allocation2 + $0x78] sm:$0xff]
        %v1673 = vld [vmem:[#allocation2 + $0x80] sm:$0xff]
        %v1674 = vld [vmem:[#allocation2 + $0x88] sm:$0xff]
        %v1675 = vld [vmem:[#allocation2 + $0x90] sm:$0xff]
        %v1676 = vld [vmem:[#allocation2 + $0x98] sm:$0xff]
        %v1677 = vld [vmem:[#allocation2 + $0xa0] sm:$0xff]
        %v1678 = vld [vmem:[#allocation2 + $0xa8] sm:$0xff]
        %v1679 = vld [vmem:[#allocation2 + $0xb0] sm:$0xff]
        %v1680 = vld [vmem:[#allocation2 + $0xb8] sm:$0xff]
        %v1681 = vld [vmem:[#allocation2 + $0xc0] sm:$0xff]
        %v1682 = vld [vmem:[#allocation2 + $0xc8] sm:$0xff]
        %v1683 = vld [vmem:[#allocation2 + $0xd0] sm:$0xff]
        %v1684 = vld [vmem:[#allocation2 + $0xd8] sm:$0xff]
        %v1685 = vld [vmem:[#allocation2 + $0xe0] sm:$0xff]
        %v1686 = vld [vmem:[#allocation2 + $0xe8] sm:$0xff]
        %v1687 = vld [vmem:[#allocation2 + $0xf0] sm:$0xff]
        %v1688 = vld [vmem:[#allocation2 + $0xf8] sm:$0xff]
        %1689 = vmatprep.subr.bf16.mxu0 %v1658
        %1690 = vmatpush1.bf16.msra.mxu0 %v1657
        %1691 = vmatprep.subr.bf16.mxu0 %v1660
        %1692 = vmatpush1.bf16.msra.mxu0 %v1659
        %1693 = vmatprep.subr.bf16.mxu0 %v1662
        %1694 = vmatpush1.bf16.msra.mxu0 %v1661
        %1695 = vmatprep.subr.bf16.mxu0 %v1664
        %1696 = vmatpush1.bf16.msra.mxu0 %v1663
        %1697 = vmatprep.subr.bf16.mxu0 %v1666
        %1698 = vmatpush1.bf16.msra.mxu0 %v1665
        %1699 = vmatprep.subr.bf16.mxu0 %v1668
        %1700 = vmatpush1.bf16.msra.mxu0 %v1667
        %1701 = vmatprep.subr.bf16.mxu0 %v1670
        %1702 = vmatpush1.bf16.msra.mxu0 %v1669
        %1703 = vmatprep.subr.bf16.mxu0 %v1672
        %1704 = vmatpush1.bf16.msra.mxu0 %v1671
        %1705 = vmatprep.subr.bf16.mxu0 %v1674
        %1706 = vmatpush1.bf16.msra.mxu0 %v1673
        %1707 = vmatprep.subr.bf16.mxu0 %v1676
        %1708 = vmatpush1.bf16.msra.mxu0 %v1675
        %1709 = vmatprep.subr.bf16.mxu0 %v1678
        %1710 = vmatpush1.bf16.msra.mxu0 %v1677
        %1711 = vmatprep.subr.bf16.mxu0 %v1680
        %1712 = vmatpush1.bf16.msra.mxu0 %v1679
        %1713 = vmatprep.subr.bf16.mxu0 %v1682
        %1714 = vmatpush1.bf16.msra.mxu0 %v1681
        %1715 = vmatprep.subr.bf16.mxu0 %v1684
        %1716 = vmatpush1.bf16.msra.mxu0 %v1683
        %1717 = vmatprep.subr.bf16.mxu0 %v1686
        %1718 = vmatpush1.bf16.msra.mxu0 %v1685
        %1719 = vmatprep.subr.bf16.mxu0 %v1688
        %1720 = vmatpush1.bf16.msra.mxu0 %v1687
        %1721 = vmatprep.mubr.bf16.mxu0 %v1656
        %1722 = vmatmul.mubr.bf16.gmra.mrb[0].mxu0 %v1655
        %v1723 = vpop.f32.mrb[0].mxu0
        %v1724 = vadd.f32 0.0, %v1723
        %v1725 = vpop.f32.mrb[0].mxu0
        %v1726 = vadd.f32 0.0, %v1725
        %v1727 = vpop.f32.mrb[0].mxu0
        %v1728 = vpop.f32.mrb[0].mxu0
        %1729 = vdwg.mxu0
        %v1730 = vadd.f32 %v1653, %v1724
        %v1731 = vadd.f32 %v1654, %v1726
        %v1732 = vtanh.pop %v1730
        %v1733 = vtanh.pop %v1731
        %s1734 = smul.u32 13, 2
        %s1735 = smul.addr %s1734, 8
        %s1736 = scalar_lea.vmem [#allocation5], %s1735
        %1737 = vst [vmem:[%s1736] sm:$0xff] %v1732
        %1738 = vst [vmem:[%s1736 + $0x8] sm:$0xff] %v1733
        %s1739 = scalar_lea.vmem [#allocation4], 224
        %v1740 = vld [vmem:[%s1739] sm:$0xff]
        %v1741 = vld [vmem:[%s1739 + $0x8] sm:$0xff]
        %v1742 = vpack.c.bf16 %v1732, %v1732
        %v1743 = vpack.c.bf16 %v1733, %v1733
        %v1744 = vld [vmem:[#allocation2] sm:$0xff]
        %v1745 = vld [vmem:[#allocation2 + $0x8] sm:$0xff]
        %v1746 = vld [vmem:[#allocation2 + $0x10] sm:$0xff]
        %v1747 = vld [vmem:[#allocation2 + $0x18] sm:$0xff]
        %v1748 = vld [vmem:[#allocation2 + $0x20] sm:$0xff]
        %v1749 = vld [vmem:[#allocation2 + $0x28] sm:$0xff]
        %v1750 = vld [vmem:[#allocation2 + $0x30] sm:$0xff]
        %v1751 = vld [vmem:[#allocation2 + $0x38] sm:$0xff]
        %v1752 = vld [vmem:[#allocation2 + $0x40] sm:$0xff]
        %v1753 = vld [vmem:[#allocation2 + $0x48] sm:$0xff]
        %v1754 = vld [vmem:[#allocation2 + $0x50] sm:$0xff]
        %v1755 = vld [vmem:[#allocation2 + $0x58] sm:$0xff]
        %v1756 = vld [vmem:[#allocation2 + $0x60] sm:$0xff]
        %v1757 = vld [vmem:[#allocation2 + $0x68] sm:$0xff]
        %v1758 = vld [vmem:[#allocation2 + $0x70] sm:$0xff]
        %v1759 = vld [vmem:[#allocation2 + $0x78] sm:$0xff]
        %v1760 = vld [vmem:[#allocation2 + $0x80] sm:$0xff]
        %v1761 = vld [vmem:[#allocation2 + $0x88] sm:$0xff]
        %v1762 = vld [vmem:[#allocation2 + $0x90] sm:$0xff]
        %v1763 = vld [vmem:[#allocation2 + $0x98] sm:$0xff]
        %v1764 = vld [vmem:[#allocation2 + $0xa0] sm:$0xff]
        %v1765 = vld [vmem:[#allocation2 + $0xa8] sm:$0xff]
        %v1766 = vld [vmem:[#allocation2 + $0xb0] sm:$0xff]
        %v1767 = vld [vmem:[#allocation2 + $0xb8] sm:$0xff]
        %v1768 = vld [vmem:[#allocation2 + $0xc0] sm:$0xff]
        %v1769 = vld [vmem:[#allocation2 + $0xc8] sm:$0xff]
        %v1770 = vld [vmem:[#allocation2 + $0xd0] sm:$0xff]
        %v1771 = vld [vmem:[#allocation2 + $0xd8] sm:$0xff]
        %v1772 = vld [vmem:[#allocation2 + $0xe0] sm:$0xff]
        %v1773 = vld [vmem:[#allocation2 + $0xe8] sm:$0xff]
        %v1774 = vld [vmem:[#allocation2 + $0xf0] sm:$0xff]
        %v1775 = vld [vmem:[#allocation2 + $0xf8] sm:$0xff]
        %1776 = vmatprep.subr.bf16.mxu0 %v1745
        %1777 = vmatpush1.bf16.msra.mxu0 %v1744
        %1778 = vmatprep.subr.bf16.mxu0 %v1747
        %1779 = vmatpush1.bf16.msra.mxu0 %v1746
        %1780 = vmatprep.subr.bf16.mxu0 %v1749
        %1781 = vmatpush1.bf16.msra.mxu0 %v1748
        %1782 = vmatprep.subr.bf16.mxu0 %v1751
        %1783 = vmatpush1.bf16.msra.mxu0 %v1750
        %1784 = vmatprep.subr.bf16.mxu0 %v1753
        %1785 = vmatpush1.bf16.msra.mxu0 %v1752
        %1786 = vmatprep.subr.bf16.mxu0 %v1755
        %1787 = vmatpush1.bf16.msra.mxu0 %v1754
        %1788 = vmatprep.subr.bf16.mxu0 %v1757
        %1789 = vmatpush1.bf16.msra.mxu0 %v1756
        %1790 = vmatprep.subr.bf16.mxu0 %v1759
        %1791 = vmatpush1.bf16.msra.mxu0 %v1758
        %1792 = vmatprep.subr.bf16.mxu0 %v1761
        %1793 = vmatpush1.bf16.msra.mxu0 %v1760
        %1794 = vmatprep.subr.bf16.mxu0 %v1763
        %1795 = vmatpush1.bf16.msra.mxu0 %v1762
        %1796 = vmatprep.subr.bf16.mxu0 %v1765
        %1797 = vmatpush1.bf16.msra.mxu0 %v1764
        %1798 = vmatprep.subr.bf16.mxu0 %v1767
        %1799 = vmatpush1.bf16.msra.mxu0 %v1766
        %1800 = vmatprep.subr.bf16.mxu0 %v1769
        %1801 = vmatpush1.bf16.msra.mxu0 %v1768
        %1802 = vmatprep.subr.bf16.mxu0 %v1771
        %1803 = vmatpush1.bf16.msra.mxu0 %v1770
        %1804 = vmatprep.subr.bf16.mxu0 %v1773
        %1805 = vmatpush1.bf16.msra.mxu0 %v1772
        %1806 = vmatprep.subr.bf16.mxu0 %v1775
        %1807 = vmatpush1.bf16.msra.mxu0 %v1774
        %1808 = vmatprep.mubr.bf16.mxu0 %v1743
        %1809 = vmatmul.mubr.bf16.gmra.mrb[0].mxu0 %v1742
        %v1810 = vpop.f32.mrb[0].mxu0
        %v1811 = vadd.f32 0.0, %v1810
        %v1812 = vpop.f32.mrb[0].mxu0
        %v1813 = vadd.f32 0.0, %v1812
        %v1814 = vpop.f32.mrb[0].mxu0
        %v1815 = vpop.f32.mrb[0].mxu0
        %1816 = vdwg.mxu0
        %v1817 = vadd.f32 %v1740, %v1811
        %v1818 = vadd.f32 %v1741, %v1813
        %v1819 = vtanh.pop %v1817
        %v1820 = vtanh.pop %v1818
        %s1821 = smul.u32 14, 2
        %s1822 = smul.addr %s1821, 8
        %s1823 = scalar_lea.vmem [#allocation5], %s1822
        %1824 = vst [vmem:[%s1823] sm:$0xff] %v1819
        %1825 = vst [vmem:[%s1823 + $0x8] sm:$0xff] %v1820
        %s1826 = scalar_lea.vmem [#allocation4], 240
        %v1827 = vld [vmem:[%s1826] sm:$0xff]
        %v1828 = vld [vmem:[%s1826 + $0x8] sm:$0xff]
        %v1829 = vpack.c.bf16 %v1819, %v1819
        %v1830 = vpack.c.bf16 %v1820, %v1820
        %v1831 = vld [vmem:[#allocation2] sm:$0xff]
        %v1832 = vld [vmem:[#allocation2 + $0x8] sm:$0xff]
        %v1833 = vld [vmem:[#allocation2 + $0x10] sm:$0xff]
        %v1834 = vld [vmem:[#allocation2 + $0x18] sm:$0xff]
        %v1835 = vld [vmem:[#allocation2 + $0x20] sm:$0xff]
        %v1836 = vld [vmem:[#allocation2 + $0x28] sm:$0xff]
        %v1837 = vld [vmem:[#allocation2 + $0x30] sm:$0xff]
        %v1838 = vld [vmem:[#allocation2 + $0x38] sm:$0xff]
        %v1839 = vld [vmem:[#allocation2 + $0x40] sm:$0xff]
        %v1840 = vld [vmem:[#allocation2 + $0x48] sm:$0xff]
        %v1841 = vld [vmem:[#allocation2 + $0x50] sm:$0xff]
        %v1842 = vld [vmem:[#allocation2 + $0x58] sm:$0xff]
        %v1843 = vld [vmem:[#allocation2 + $0x60] sm:$0xff]
        %v1844 = vld [vmem:[#allocation2 + $0x68] sm:$0xff]
        %v1845 = vld [vmem:[#allocation2 + $0x70] sm:$0xff]
        %v1846 = vld [vmem:[#allocation2 + $0x78] sm:$0xff]
        %v1847 = vld [vmem:[#allocation2 + $0x80] sm:$0xff]
        %v1848 = vld [vmem:[#allocation2 + $0x88] sm:$0xff]
        %v1849 = vld [vmem:[#allocation2 + $0x90] sm:$0xff]
        %v1850 = vld [vmem:[#allocation2 + $0x98] sm:$0xff]
        %v1851 = vld [vmem:[#allocation2 + $0xa0] sm:$0xff]
        %v1852 = vld [vmem:[#allocation2 + $0xa8] sm:$0xff]
        %v1853 = vld [vmem:[#allocation2 + $0xb0] sm:$0xff]
        %v1854 = vld [vmem:[#allocation2 + $0xb8] sm:$0xff]
        %v1855 = vld [vmem:[#allocation2 + $0xc0] sm:$0xff]
        %v1856 = vld [vmem:[#allocation2 + $0xc8] sm:$0xff]
        %v1857 = vld [vmem:[#allocation2 + $0xd0] sm:$0xff]
        %v1858 = vld [vmem:[#allocation2 + $0xd8] sm:$0xff]
        %v1859 = vld [vmem:[#allocation2 + $0xe0] sm:$0xff]
        %v1860 = vld [vmem:[#allocation2 + $0xe8] sm:$0xff]
        %v1861 = vld [vmem:[#allocation2 + $0xf0] sm:$0xff]
        %v1862 = vld [vmem:[#allocation2 + $0xf8] sm:$0xff]
        %1863 = vmatprep.subr.bf16.mxu0 %v1832
        %1864 = vmatpush1.bf16.msra.mxu0 %v1831
        %1865 = vmatprep.subr.bf16.mxu0 %v1834
        %1866 = vmatpush1.bf16.msra.mxu0 %v1833
        %1867 = vmatprep.subr.bf16.mxu0 %v1836
        %1868 = vmatpush1.bf16.msra.mxu0 %v1835
        %1869 = vmatprep.subr.bf16.mxu0 %v1838
        %1870 = vmatpush1.bf16.msra.mxu0 %v1837
        %1871 = vmatprep.subr.bf16.mxu0 %v1840
        %1872 = vmatpush1.bf16.msra.mxu0 %v1839
        %1873 = vmatprep.subr.bf16.mxu0 %v1842
        %1874 = vmatpush1.bf16.msra.mxu0 %v1841
        %1875 = vmatprep.subr.bf16.mxu0 %v1844
        %1876 = vmatpush1.bf16.msra.mxu0 %v1843
        %1877 = vmatprep.subr.bf16.mxu0 %v1846
        %1878 = vmatpush1.bf16.msra.mxu0 %v1845
        %1879 = vmatprep.subr.bf16.mxu0 %v1848
        %1880 = vmatpush1.bf16.msra.mxu0 %v1847
        %1881 = vmatprep.subr.bf16.mxu0 %v1850
        %1882 = vmatpush1.bf16.msra.mxu0 %v1849
        %1883 = vmatprep.subr.bf16.mxu0 %v1852
        %1884 = vmatpush1.bf16.msra.mxu0 %v1851
        %1885 = vmatprep.subr.bf16.mxu0 %v1854
        %1886 = vmatpush1.bf16.msra.mxu0 %v1853
        %1887 = vmatprep.subr.bf16.mxu0 %v1856
        %1888 = vmatpush1.bf16.msra.mxu0 %v1855
        %1889 = vmatprep.subr.bf16.mxu0 %v1858
        %1890 = vmatpush1.bf16.msra.mxu0 %v1857
        %1891 = vmatprep.subr.bf16.mxu0 %v1860
        %1892 = vmatpush1.bf16.msra.mxu0 %v1859
        %1893 = vmatprep.subr.bf16.mxu0 %v1862
        %1894 = vmatpush1.bf16.msra.mxu0 %v1861
        %1895 = vmatprep.mubr.bf16.mxu0 %v1830
        %1896 = vmatmul.mubr.bf16.gmra.mrb[0].mxu0 %v1829
        %v1897 = vpop.f32.mrb[0].mxu0
        %v1898 = vadd.f32 0.0, %v1897
        %v1899 = vpop.f32.mrb[0].mxu0
        %v1900 = vadd.f32 0.0, %v1899
        %v1901 = vpop.f32.mrb[0].mxu0
        %v1902 = vpop.f32.mrb[0].mxu0
        %1903 = vdwg.mxu0
        %v1904 = vadd.f32 %v1827, %v1898
        %v1905 = vadd.f32 %v1828, %v1900
        %v1906 = vtanh.pop %v1904
        %v1907 = vtanh.pop %v1905
        %s1908 = smul.u32 15, 2
        %s1909 = smul.addr %s1908, 8
        %s1910 = scalar_lea.vmem [#allocation5], %s1909
        %1911 = vst [vmem:[%s1910] sm:$0xff] %v1906
        %1912 = vst [vmem:[%s1910 + $0x8] sm:$0xff] %v1907
        %s1913 = scalar_lea.vmem [#allocation4], 256
        %v1914 = vld [vmem:[%s1913] sm:$0xff]
        %v1915 = vld [vmem:[%s1913 + $0x8] sm:$0xff]
        %v1916 = vpack.c.bf16 %v1906, %v1906
        %v1917 = vpack.c.bf16 %v1907, %v1907
        %v1918 = vld [vmem:[#allocation2] sm:$0xff]
        %v1919 = vld [vmem:[#allocation2 + $0x8] sm:$0xff]
        %v1920 = vld [vmem:[#allocation2 + $0x10] sm:$0xff]
        %v1921 = vld [vmem:[#allocation2 + $0x18] sm:$0xff]
        %v1922 = vld [vmem:[#allocation2 + $0x20] sm:$0xff]
        %v1923 = vld [vmem:[#allocation2 + $0x28] sm:$0xff]
        %v1924 = vld [vmem:[#allocation2 + $0x30] sm:$0xff]
        %v1925 = vld [vmem:[#allocation2 + $0x38] sm:$0xff]
        %v1926 = vld [vmem:[#allocation2 + $0x40] sm:$0xff]
        %v1927 = vld [vmem:[#allocation2 + $0x48] sm:$0xff]
        %v1928 = vld [vmem:[#allocation2 + $0x50] sm:$0xff]
        %v1929 = vld [vmem:[#allocation2 + $0x58] sm:$0xff]
        %v1930 = vld [vmem:[#allocation2 + $0x60] sm:$0xff]
        %v1931 = vld [vmem:[#allocation2 + $0x68] sm:$0xff]
        %v1932 = vld [vmem:[#allocation2 + $0x70] sm:$0xff]
        %v1933 = vld [vmem:[#allocation2 + $0x78] sm:$0xff]
        %v1934 = vld [vmem:[#allocation2 + $0x80] sm:$0xff]
        %v1935 = vld [vmem:[#allocation2 + $0x88] sm:$0xff]
        %v1936 = vld [vmem:[#allocation2 + $0x90] sm:$0xff]
        %v1937 = vld [vmem:[#allocation2 + $0x98] sm:$0xff]
        %v1938 = vld [vmem:[#allocation2 + $0xa0] sm:$0xff]
        %v1939 = vld [vmem:[#allocation2 + $0xa8] sm:$0xff]
        %v1940 = vld [vmem:[#allocation2 + $0xb0] sm:$0xff]
        %v1941 = vld [vmem:[#allocation2 + $0xb8] sm:$0xff]
        %v1942 = vld [vmem:[#allocation2 + $0xc0] sm:$0xff]
        %v1943 = vld [vmem:[#allocation2 + $0xc8] sm:$0xff]
        %v1944 = vld [vmem:[#allocation2 + $0xd0] sm:$0xff]
        %v1945 = vld [vmem:[#allocation2 + $0xd8] sm:$0xff]
        %v1946 = vld [vmem:[#allocation2 + $0xe0] sm:$0xff]
        %v1947 = vld [vmem:[#allocation2 + $0xe8] sm:$0xff]
        %v1948 = vld [vmem:[#allocation2 + $0xf0] sm:$0xff]
        %v1949 = vld [vmem:[#allocation2 + $0xf8] sm:$0xff]
        %1950 = vmatprep.subr.bf16.mxu0 %v1919
        %1951 = vmatpush1.bf16.msra.mxu0 %v1918
        %1952 = vmatprep.subr.bf16.mxu0 %v1921
        %1953 = vmatpush1.bf16.msra.mxu0 %v1920
        %1954 = vmatprep.subr.bf16.mxu0 %v1923
        %1955 = vmatpush1.bf16.msra.mxu0 %v1922
        %1956 = vmatprep.subr.bf16.mxu0 %v1925
        %1957 = vmatpush1.bf16.msra.mxu0 %v1924
        %1958 = vmatprep.subr.bf16.mxu0 %v1927
        %1959 = vmatpush1.bf16.msra.mxu0 %v1926
        %1960 = vmatprep.subr.bf16.mxu0 %v1929
        %1961 = vmatpush1.bf16.msra.mxu0 %v1928
        %1962 = vmatprep.subr.bf16.mxu0 %v1931
        %1963 = vmatpush1.bf16.msra.mxu0 %v1930
        %1964 = vmatprep.subr.bf16.mxu0 %v1933
        %1965 = vmatpush1.bf16.msra.mxu0 %v1932
        %1966 = vmatprep.subr.bf16.mxu0 %v1935
        %1967 = vmatpush1.bf16.msra.mxu0 %v1934
        %1968 = vmatprep.subr.bf16.mxu0 %v1937
        %1969 = vmatpush1.bf16.msra.mxu0 %v1936
        %1970 = vmatprep.subr.bf16.mxu0 %v1939
        %1971 = vmatpush1.bf16.msra.mxu0 %v1938
        %1972 = vmatprep.subr.bf16.mxu0 %v1941
        %1973 = vmatpush1.bf16.msra.mxu0 %v1940
        %1974 = vmatprep.subr.bf16.mxu0 %v1943
        %1975 = vmatpush1.bf16.msra.mxu0 %v1942
        %1976 = vmatprep.subr.bf16.mxu0 %v1945
        %1977 = vmatpush1.bf16.msra.mxu0 %v1944
        %1978 = vmatprep.subr.bf16.mxu0 %v1947
        %1979 = vmatpush1.bf16.msra.mxu0 %v1946
        %1980 = vmatprep.subr.bf16.mxu0 %v1949
        %1981 = vmatpush1.bf16.msra.mxu0 %v1948
        %1982 = vmatprep.mubr.bf16.mxu0 %v1917
        %1983 = vmatmul.mubr.bf16.gmra.mrb[0].mxu0 %v1916
        %v1984 = vpop.f32.mrb[0].mxu0
        %v1985 = vadd.f32 0.0, %v1984
        %v1986 = vpop.f32.mrb[0].mxu0
        %v1987 = vadd.f32 0.0, %v1986
        %v1988 = vpop.f32.mrb[0].mxu0
        %v1989 = vpop.f32.mrb[0].mxu0
        %1990 = vdwg.mxu0
        %v1991 = vadd.f32 %v1914, %v1985
        %v1992 = vadd.f32 %v1915, %v1987
        %v1993 = vtanh.pop %v1991
        %v1994 = vtanh.pop %v1992
        %s1995 = smul.u32 16, 2
        %s1996 = smul.addr %s1995, 8
        %s1997 = scalar_lea.vmem [#allocation5], %s1996
        %1998 = vst [vmem:[%s1997] sm:$0xff] %v1993
        %1999 = vst [vmem:[%s1997 + $0x8] sm:$0xff] %v1994
        %s2000 = scalar_lea.vmem [#allocation4], 272
        %v2001 = vld [vmem:[%s2000] sm:$0xff]
        %v2002 = vld [vmem:[%s2000 + $0x8] sm:$0xff]
        %v2003 = vpack.c.bf16 %v1993, %v1993
        %v2004 = vpack.c.bf16 %v1994, %v1994
        %v2005 = vld [vmem:[#allocation2] sm:$0xff]
        %v2006 = vld [vmem:[#allocation2 + $0x8] sm:$0xff]
        %v2007 = vld [vmem:[#allocation2 + $0x10] sm:$0xff]
        %v2008 = vld [vmem:[#allocation2 + $0x18] sm:$0xff]
        %v2009 = vld [vmem:[#allocation2 + $0x20] sm:$0xff]
        %v2010 = vld [vmem:[#allocation2 + $0x28] sm:$0xff]
        %v2011 = vld [vmem:[#allocation2 + $0x30] sm:$0xff]
        %v2012 = vld [vmem:[#allocation2 + $0x38] sm:$0xff]
        %v2013 = vld [vmem:[#allocation2 + $0x40] sm:$0xff]
        %v2014 = vld [vmem:[#allocation2 + $0x48] sm:$0xff]
        %v2015 = vld [vmem:[#allocation2 + $0x50] sm:$0xff]
        %v2016 = vld [vmem:[#allocation2 + $0x58] sm:$0xff]
        %v2017 = vld [vmem:[#allocation2 + $0x60] sm:$0xff]
        %v2018 = vld [vmem:[#allocation2 + $0x68] sm:$0xff]
        %v2019 = vld [vmem:[#allocation2 + $0x70] sm:$0xff]
        %v2020 = vld [vmem:[#allocation2 + $0x78] sm:$0xff]
        %v2021 = vld [vmem:[#allocation2 + $0x80] sm:$0xff]
        %v2022 = vld [vmem:[#allocation2 + $0x88] sm:$0xff]
        %v2023 = vld [vmem:[#allocation2 + $0x90] sm:$0xff]
        %v2024 = vld [vmem:[#allocation2 + $0x98] sm:$0xff]
        %v2025 = vld [vmem:[#allocation2 + $0xa0] sm:$0xff]
        %v2026 = vld [vmem:[#allocation2 + $0xa8] sm:$0xff]
        %v2027 = vld [vmem:[#allocation2 + $0xb0] sm:$0xff]
        %v2028 = vld [vmem:[#allocation2 + $0xb8] sm:$0xff]
        %v2029 = vld [vmem:[#allocation2 + $0xc0] sm:$0xff]
        %v2030 = vld [vmem:[#allocation2 + $0xc8] sm:$0xff]
        %v2031 = vld [vmem:[#allocation2 + $0xd0] sm:$0xff]
        %v2032 = vld [vmem:[#allocation2 + $0xd8] sm:$0xff]
        %v2033 = vld [vmem:[#allocation2 + $0xe0] sm:$0xff]
        %v2034 = vld [vmem:[#allocation2 + $0xe8] sm:$0xff]
        %v2035 = vld [vmem:[#allocation2 + $0xf0] sm:$0xff]
        %v2036 = vld [vmem:[#allocation2 + $0xf8] sm:$0xff]
        %2037 = vmatprep.subr.bf16.mxu0 %v2006
        %2038 = vmatpush1.bf16.msra.mxu0 %v2005
        %2039 = vmatprep.subr.bf16.mxu0 %v2008
        %2040 = vmatpush1.bf16.msra.mxu0 %v2007
        %2041 = vmatprep.subr.bf16.mxu0 %v2010
        %2042 = vmatpush1.bf16.msra.mxu0 %v2009
        %2043 = vmatprep.subr.bf16.mxu0 %v2012
        %2044 = vmatpush1.bf16.msra.mxu0 %v2011
        %2045 = vmatprep.subr.bf16.mxu0 %v2014
        %2046 = vmatpush1.bf16.msra.mxu0 %v2013
        %2047 = vmatprep.subr.bf16.mxu0 %v2016
        %2048 = vmatpush1.bf16.msra.mxu0 %v2015
        %2049 = vmatprep.subr.bf16.mxu0 %v2018
        %2050 = vmatpush1.bf16.msra.mxu0 %v2017
        %2051 = vmatprep.subr.bf16.mxu0 %v2020
        %2052 = vmatpush1.bf16.msra.mxu0 %v2019
        %2053 = vmatprep.subr.bf16.mxu0 %v2022
        %2054 = vmatpush1.bf16.msra.mxu0 %v2021
        %2055 = vmatprep.subr.bf16.mxu0 %v2024
        %2056 = vmatpush1.bf16.msra.mxu0 %v2023
        %2057 = vmatprep.subr.bf16.mxu0 %v2026
        %2058 = vmatpush1.bf16.msra.mxu0 %v2025
        %2059 = vmatprep.subr.bf16.mxu0 %v2028
        %2060 = vmatpush1.bf16.msra.mxu0 %v2027
        %2061 = vmatprep.subr.bf16.mxu0 %v2030
        %2062 = vmatpush1.bf16.msra.mxu0 %v2029
        %2063 = vmatprep.subr.bf16.mxu0 %v2032
        %2064 = vmatpush1.bf16.msra.mxu0 %v2031
        %2065 = vmatprep.subr.bf16.mxu0 %v2034
        %2066 = vmatpush1.bf16.msra.mxu0 %v2033
        %2067 = vmatprep.subr.bf16.mxu0 %v2036
        %2068 = vmatpush1.bf16.msra.mxu0 %v2035
        %2069 = vmatprep.mubr.bf16.mxu0 %v2004
        %2070 = vmatmul.mubr.bf16.gmra.mrb[0].mxu0 %v2003
        %v2071 = vpop.f32.mrb[0].mxu0
        %v2072 = vadd.f32 0.0, %v2071
        %v2073 = vpop.f32.mrb[0].mxu0
        %v2074 = vadd.f32 0.0, %v2073
        %v2075 = vpop.f32.mrb[0].mxu0
        %v2076 = vpop.f32.mrb[0].mxu0
        %2077 = vdwg.mxu0
        %v2078 = vadd.f32 %v2001, %v2072
        %v2079 = vadd.f32 %v2002, %v2074
        %v2080 = vtanh.pop %v2078
        %v2081 = vtanh.pop %v2079
        %s2082 = smul.u32 17, 2
        %s2083 = smul.addr %s2082, 8
        %s2084 = scalar_lea.vmem [#allocation5], %s2083
        %2085 = vst [vmem:[%s2084] sm:$0xff] %v2080
        %2086 = vst [vmem:[%s2084 + $0x8] sm:$0xff] %v2081
        %s2087 = scalar_lea.vmem [#allocation4], 288
        %v2088 = vld [vmem:[%s2087] sm:$0xff]
        %v2089 = vld [vmem:[%s2087 + $0x8] sm:$0xff]
        %v2090 = vpack.c.bf16 %v2080, %v2080
        %v2091 = vpack.c.bf16 %v2081, %v2081
        %v2092 = vld [vmem:[#allocation2] sm:$0xff]
        %v2093 = vld [vmem:[#allocation2 + $0x8] sm:$0xff]
        %v2094 = vld [vmem:[#allocation2 + $0x10] sm:$0xff]
        %v2095 = vld [vmem:[#allocation2 + $0x18] sm:$0xff]
        %v2096 = vld [vmem:[#allocation2 + $0x20] sm:$0xff]
        %v2097 = vld [vmem:[#allocation2 + $0x28] sm:$0xff]
        %v2098 = vld [vmem:[#allocation2 + $0x30] sm:$0xff]
        %v2099 = vld [vmem:[#allocation2 + $0x38] sm:$0xff]
        %v2100 = vld [vmem:[#allocation2 + $0x40] sm:$0xff]
        %v2101 = vld [vmem:[#allocation2 + $0x48] sm:$0xff]
        %v2102 = vld [vmem:[#allocation2 + $0x50] sm:$0xff]
        %v2103 = vld [vmem:[#allocation2 + $0x58] sm:$0xff]
        %v2104 = vld [vmem:[#allocation2 + $0x60] sm:$0xff]
        %v2105 = vld [vmem:[#allocation2 + $0x68] sm:$0xff]
        %v2106 = vld [vmem:[#allocation2 + $0x70] sm:$0xff]
        %v2107 = vld [vmem:[#allocation2 + $0x78] sm:$0xff]
        %v2108 = vld [vmem:[#allocation2 + $0x80] sm:$0xff]
        %v2109 = vld [vmem:[#allocation2 + $0x88] sm:$0xff]
        %v2110 = vld [vmem:[#allocation2 + $0x90] sm:$0xff]
        %v2111 = vld [vmem:[#allocation2 + $0x98] sm:$0xff]
        %v2112 = vld [vmem:[#allocation2 + $0xa0] sm:$0xff]
        %v2113 = vld [vmem:[#allocation2 + $0xa8] sm:$0xff]
        %v2114 = vld [vmem:[#allocation2 + $0xb0] sm:$0xff]
        %v2115 = vld [vmem:[#allocation2 + $0xb8] sm:$0xff]
        %v2116 = vld [vmem:[#allocation2 + $0xc0] sm:$0xff]
        %v2117 = vld [vmem:[#allocation2 + $0xc8] sm:$0xff]
        %v2118 = vld [vmem:[#allocation2 + $0xd0] sm:$0xff]
        %v2119 = vld [vmem:[#allocation2 + $0xd8] sm:$0xff]
        %v2120 = vld [vmem:[#allocation2 + $0xe0] sm:$0xff]
        %v2121 = vld [vmem:[#allocation2 + $0xe8] sm:$0xff]
        %v2122 = vld [vmem:[#allocation2 + $0xf0] sm:$0xff]
        %v2123 = vld [vmem:[#allocation2 + $0xf8] sm:$0xff]
        %2124 = vmatprep.subr.bf16.mxu0 %v2093
        %2125 = vmatpush1.bf16.msra.mxu0 %v2092
        %2126 = vmatprep.subr.bf16.mxu0 %v2095
        %2127 = vmatpush1.bf16.msra.mxu0 %v2094
        %2128 = vmatprep.subr.bf16.mxu0 %v2097
        %2129 = vmatpush1.bf16.msra.mxu0 %v2096
        %2130 = vmatprep.subr.bf16.mxu0 %v2099
        %2131 = vmatpush1.bf16.msra.mxu0 %v2098
        %2132 = vmatprep.subr.bf16.mxu0 %v2101
        %2133 = vmatpush1.bf16.msra.mxu0 %v2100
        %2134 = vmatprep.subr.bf16.mxu0 %v2103
        %2135 = vmatpush1.bf16.msra.mxu0 %v2102
        %2136 = vmatprep.subr.bf16.mxu0 %v2105
        %2137 = vmatpush1.bf16.msra.mxu0 %v2104
        %2138 = vmatprep.subr.bf16.mxu0 %v2107
        %2139 = vmatpush1.bf16.msra.mxu0 %v2106
        %2140 = vmatprep.subr.bf16.mxu0 %v2109
        %2141 = vmatpush1.bf16.msra.mxu0 %v2108
        %2142 = vmatprep.subr.bf16.mxu0 %v2111
        %2143 = vmatpush1.bf16.msra.mxu0 %v2110
        %2144 = vmatprep.subr.bf16.mxu0 %v2113
        %2145 = vmatpush1.bf16.msra.mxu0 %v2112
        %2146 = vmatprep.subr.bf16.mxu0 %v2115
        %2147 = vmatpush1.bf16.msra.mxu0 %v2114
        %2148 = vmatprep.subr.bf16.mxu0 %v2117
        %2149 = vmatpush1.bf16.msra.mxu0 %v2116
        %2150 = vmatprep.subr.bf16.mxu0 %v2119
        %2151 = vmatpush1.bf16.msra.mxu0 %v2118
        %2152 = vmatprep.subr.bf16.mxu0 %v2121
        %2153 = vmatpush1.bf16.msra.mxu0 %v2120
        %2154 = vmatprep.subr.bf16.mxu0 %v2123
        %2155 = vmatpush1.bf16.msra.mxu0 %v2122
        %2156 = vmatprep.mubr.bf16.mxu0 %v2091
        %2157 = vmatmul.mubr.bf16.gmra.mrb[0].mxu0 %v2090
        %v2158 = vpop.f32.mrb[0].mxu0
        %v2159 = vadd.f32 0.0, %v2158
        %v2160 = vpop.f32.mrb[0].mxu0
        %v2161 = vadd.f32 0.0, %v2160
        %v2162 = vpop.f32.mrb[0].mxu0
        %v2163 = vpop.f32.mrb[0].mxu0
        %2164 = vdwg.mxu0
        %v2165 = vadd.f32 %v2088, %v2159
        %v2166 = vadd.f32 %v2089, %v2161
        %v2167 = vtanh.pop %v2165
        %v2168 = vtanh.pop %v2166
        %s2169 = smul.u32 18, 2
        %s2170 = smul.addr %s2169, 8
        %s2171 = scalar_lea.vmem [#allocation5], %s2170
        %2172 = vst [vmem:[%s2171] sm:$0xff] %v2167
        %2173 = vst [vmem:[%s2171 + $0x8] sm:$0xff] %v2168
        %s2174 = scalar_lea.vmem [#allocation4], 304
        %v2175 = vld [vmem:[%s2174] sm:$0xff]
        %v2176 = vld [vmem:[%s2174 + $0x8] sm:$0xff]
        %v2177 = vpack.c.bf16 %v2167, %v2167
        %v2178 = vpack.c.bf16 %v2168, %v2168
        %v2179 = vld [vmem:[#allocation2] sm:$0xff]
        %v2180 = vld [vmem:[#allocation2 + $0x8] sm:$0xff]
        %v2181 = vld [vmem:[#allocation2 + $0x10] sm:$0xff]
        %v2182 = vld [vmem:[#allocation2 + $0x18] sm:$0xff]
        %v2183 = vld [vmem:[#allocation2 + $0x20] sm:$0xff]
        %v2184 = vld [vmem:[#allocation2 + $0x28] sm:$0xff]
        %v2185 = vld [vmem:[#allocation2 + $0x30] sm:$0xff]
        %v2186 = vld [vmem:[#allocation2 + $0x38] sm:$0xff]
        %v2187 = vld [vmem:[#allocation2 + $0x40] sm:$0xff]
        %v2188 = vld [vmem:[#allocation2 + $0x48] sm:$0xff]
        %v2189 = vld [vmem:[#allocation2 + $0x50] sm:$0xff]
        %v2190 = vld [vmem:[#allocation2 + $0x58] sm:$0xff]
        %v2191 = vld [vmem:[#allocation2 + $0x60] sm:$0xff]
        %v2192 = vld [vmem:[#allocation2 + $0x68] sm:$0xff]
        %v2193 = vld [vmem:[#allocation2 + $0x70] sm:$0xff]
        %v2194 = vld [vmem:[#allocation2 + $0x78] sm:$0xff]
        %v2195 = vld [vmem:[#allocation2 + $0x80] sm:$0xff]
        %v2196 = vld [vmem:[#allocation2 + $0x88] sm:$0xff]
        %v2197 = vld [vmem:[#allocation2 + $0x90] sm:$0xff]
        %v2198 = vld [vmem:[#allocation2 + $0x98] sm:$0xff]
        %v2199 = vld [vmem:[#allocation2 + $0xa0] sm:$0xff]
        %v2200 = vld [vmem:[#allocation2 + $0xa8] sm:$0xff]
        %v2201 = vld [vmem:[#allocation2 + $0xb0] sm:$0xff]
        %v2202 = vld [vmem:[#allocation2 + $0xb8] sm:$0xff]
        %v2203 = vld [vmem:[#allocation2 + $0xc0] sm:$0xff]
        %v2204 = vld [vmem:[#allocation2 + $0xc8] sm:$0xff]
        %v2205 = vld [vmem:[#allocation2 + $0xd0] sm:$0xff]
        %v2206 = vld [vmem:[#allocation2 + $0xd8] sm:$0xff]
        %v2207 = vld [vmem:[#allocation2 + $0xe0] sm:$0xff]
        %v2208 = vld [vmem:[#allocation2 + $0xe8] sm:$0xff]
        %v2209 = vld [vmem:[#allocation2 + $0xf0] sm:$0xff]
        %v2210 = vld [vmem:[#allocation2 + $0xf8] sm:$0xff]
        %2211 = vmatprep.subr.bf16.mxu0 %v2180
        %2212 = vmatpush1.bf16.msra.mxu0 %v2179
        %2213 = vmatprep.subr.bf16.mxu0 %v2182
        %2214 = vmatpush1.bf16.msra.mxu0 %v2181
        %2215 = vmatprep.subr.bf16.mxu0 %v2184
        %2216 = vmatpush1.bf16.msra.mxu0 %v2183
        %2217 = vmatprep.subr.bf16.mxu0 %v2186
        %2218 = vmatpush1.bf16.msra.mxu0 %v2185
        %2219 = vmatprep.subr.bf16.mxu0 %v2188
        %2220 = vmatpush1.bf16.msra.mxu0 %v2187
        %2221 = vmatprep.subr.bf16.mxu0 %v2190
        %2222 = vmatpush1.bf16.msra.mxu0 %v2189
        %2223 = vmatprep.subr.bf16.mxu0 %v2192
        %2224 = vmatpush1.bf16.msra.mxu0 %v2191
        %2225 = vmatprep.subr.bf16.mxu0 %v2194
        %2226 = vmatpush1.bf16.msra.mxu0 %v2193
        %2227 = vmatprep.subr.bf16.mxu0 %v2196
        %2228 = vmatpush1.bf16.msra.mxu0 %v2195
        %2229 = vmatprep.subr.bf16.mxu0 %v2198
        %2230 = vmatpush1.bf16.msra.mxu0 %v2197
        %2231 = vmatprep.subr.bf16.mxu0 %v2200
        %2232 = vmatpush1.bf16.msra.mxu0 %v2199
        %2233 = vmatprep.subr.bf16.mxu0 %v2202
        %2234 = vmatpush1.bf16.msra.mxu0 %v2201
        %2235 = vmatprep.subr.bf16.mxu0 %v2204
        %2236 = vmatpush1.bf16.msra.mxu0 %v2203
        %2237 = vmatprep.subr.bf16.mxu0 %v2206
        %2238 = vmatpush1.bf16.msra.mxu0 %v2205
        %2239 = vmatprep.subr.bf16.mxu0 %v2208
        %2240 = vmatpush1.bf16.msra.mxu0 %v2207
        %2241 = vmatprep.subr.bf16.mxu0 %v2210
        %2242 = vmatpush1.bf16.msra.mxu0 %v2209
        %2243 = vmatprep.mubr.bf16.mxu0 %v2178
        %2244 = vmatmul.mubr.bf16.gmra.mrb[0].mxu0 %v2177
        %v2245 = vpop.f32.mrb[0].mxu0
        %v2246 = vadd.f32 0.0, %v2245
        %v2247 = vpop.f32.mrb[0].mxu0
        %v2248 = vadd.f32 0.0, %v2247
        %v2249 = vpop.f32.mrb[0].mxu0
        %v2250 = vpop.f32.mrb[0].mxu0
        %2251 = vdwg.mxu0
        %v2252 = vadd.f32 %v2175, %v2246
        %v2253 = vadd.f32 %v2176, %v2248
        %v2254 = vtanh.pop %v2252
        %v2255 = vtanh.pop %v2253
        %s2256 = smul.u32 19, 2
        %s2257 = smul.addr %s2256, 8
        %s2258 = scalar_lea.vmem [#allocation5], %s2257
        %2259 = vst [vmem:[%s2258] sm:$0xff] %v2254
        %2260 = vst [vmem:[%s2258 + $0x8] sm:$0xff] %v2255
        %s2261 = scalar_lea.vmem [#allocation4], 320
        %v2262 = vld [vmem:[%s2261] sm:$0xff]
        %v2263 = vld [vmem:[%s2261 + $0x8] sm:$0xff]
        %v2264 = vpack.c.bf16 %v2254, %v2254
        %v2265 = vpack.c.bf16 %v2255, %v2255
        %v2266 = vld [vmem:[#allocation2] sm:$0xff]
        %v2267 = vld [vmem:[#allocation2 + $0x8] sm:$0xff]
        %v2268 = vld [vmem:[#allocation2 + $0x10] sm:$0xff]
        %v2269 = vld [vmem:[#allocation2 + $0x18] sm:$0xff]
        %v2270 = vld [vmem:[#allocation2 + $0x20] sm:$0xff]
        %v2271 = vld [vmem:[#allocation2 + $0x28] sm:$0xff]
        %v2272 = vld [vmem:[#allocation2 + $0x30] sm:$0xff]
        %v2273 = vld [vmem:[#allocation2 + $0x38] sm:$0xff]
        %v2274 = vld [vmem:[#allocation2 + $0x40] sm:$0xff]
        %v2275 = vld [vmem:[#allocation2 + $0x48] sm:$0xff]
        %v2276 = vld [vmem:[#allocation2 + $0x50] sm:$0xff]
        %v2277 = vld [vmem:[#allocation2 + $0x58] sm:$0xff]
        %v2278 = vld [vmem:[#allocation2 + $0x60] sm:$0xff]
        %v2279 = vld [vmem:[#allocation2 + $0x68] sm:$0xff]
        %v2280 = vld [vmem:[#allocation2 + $0x70] sm:$0xff]
        %v2281 = vld [vmem:[#allocation2 + $0x78] sm:$0xff]
        %v2282 = vld [vmem:[#allocation2 + $0x80] sm:$0xff]
        %v2283 = vld [vmem:[#allocation2 + $0x88] sm:$0xff]
        %v2284 = vld [vmem:[#allocation2 + $0x90] sm:$0xff]
        %v2285 = vld [vmem:[#allocation2 + $0x98] sm:$0xff]
        %v2286 = vld [vmem:[#allocation2 + $0xa0] sm:$0xff]
        %v2287 = vld [vmem:[#allocation2 + $0xa8] sm:$0xff]
        %v2288 = vld [vmem:[#allocation2 + $0xb0] sm:$0xff]
        %v2289 = vld [vmem:[#allocation2 + $0xb8] sm:$0xff]
        %v2290 = vld [vmem:[#allocation2 + $0xc0] sm:$0xff]
        %v2291 = vld [vmem:[#allocation2 + $0xc8] sm:$0xff]
        %v2292 = vld [vmem:[#allocation2 + $0xd0] sm:$0xff]
        %v2293 = vld [vmem:[#allocation2 + $0xd8] sm:$0xff]
        %v2294 = vld [vmem:[#allocation2 + $0xe0] sm:$0xff]
        %v2295 = vld [vmem:[#allocation2 + $0xe8] sm:$0xff]
        %v2296 = vld [vmem:[#allocation2 + $0xf0] sm:$0xff]
        %v2297 = vld [vmem:[#allocation2 + $0xf8] sm:$0xff]
        %2298 = vmatprep.subr.bf16.mxu0 %v2267
        %2299 = vmatpush1.bf16.msra.mxu0 %v2266
        %2300 = vmatprep.subr.bf16.mxu0 %v2269
        %2301 = vmatpush1.bf16.msra.mxu0 %v2268
        %2302 = vmatprep.subr.bf16.mxu0 %v2271
        %2303 = vmatpush1.bf16.msra.mxu0 %v2270
        %2304 = vmatprep.subr.bf16.mxu0 %v2273
        %2305 = vmatpush1.bf16.msra.mxu0 %v2272
        %2306 = vmatprep.subr.bf16.mxu0 %v2275
        %2307 = vmatpush1.bf16.msra.mxu0 %v2274
        %2308 = vmatprep.subr.bf16.mxu0 %v2277
        %2309 = vmatpush1.bf16.msra.mxu0 %v2276
        %2310 = vmatprep.subr.bf16.mxu0 %v2279
        %2311 = vmatpush1.bf16.msra.mxu0 %v2278
        %2312 = vmatprep.subr.bf16.mxu0 %v2281
        %2313 = vmatpush1.bf16.msra.mxu0 %v2280
        %2314 = vmatprep.subr.bf16.mxu0 %v2283
        %2315 = vmatpush1.bf16.msra.mxu0 %v2282
        %2316 = vmatprep.subr.bf16.mxu0 %v2285
        %2317 = vmatpush1.bf16.msra.mxu0 %v2284
        %2318 = vmatprep.subr.bf16.mxu0 %v2287
        %2319 = vmatpush1.bf16.msra.mxu0 %v2286
        %2320 = vmatprep.subr.bf16.mxu0 %v2289
        %2321 = vmatpush1.bf16.msra.mxu0 %v2288
        %2322 = vmatprep.subr.bf16.mxu0 %v2291
        %2323 = vmatpush1.bf16.msra.mxu0 %v2290
        %2324 = vmatprep.subr.bf16.mxu0 %v2293
        %2325 = vmatpush1.bf16.msra.mxu0 %v2292
        %2326 = vmatprep.subr.bf16.mxu0 %v2295
        %2327 = vmatpush1.bf16.msra.mxu0 %v2294
        %2328 = vmatprep.subr.bf16.mxu0 %v2297
        %2329 = vmatpush1.bf16.msra.mxu0 %v2296
        %2330 = vmatprep.mubr.bf16.mxu0 %v2265
        %2331 = vmatmul.mubr.bf16.gmra.mrb[0].mxu0 %v2264
        %v2332 = vpop.f32.mrb[0].mxu0
        %v2333 = vadd.f32 0.0, %v2332
        %v2334 = vpop.f32.mrb[0].mxu0
        %v2335 = vadd.f32 0.0, %v2334
        %v2336 = vpop.f32.mrb[0].mxu0
        %v2337 = vpop.f32.mrb[0].mxu0
        %2338 = vdwg.mxu0
        %v2339 = vadd.f32 %v2262, %v2333
        %v2340 = vadd.f32 %v2263, %v2335
        %v2341 = vtanh.pop %v2339
        %v2342 = vtanh.pop %v2340
        %s2343 = smul.u32 20, 2
        %s2344 = smul.addr %s2343, 8
        %s2345 = scalar_lea.vmem [#allocation5], %s2344
        %2346 = vst [vmem:[%s2345] sm:$0xff] %v2341
        %2347 = vst [vmem:[%s2345 + $0x8] sm:$0xff] %v2342
        %s2348 = scalar_lea.vmem [#allocation4], 336
        %v2349 = vld [vmem:[%s2348] sm:$0xff]
        %v2350 = vld [vmem:[%s2348 + $0x8] sm:$0xff]
        %v2351 = vpack.c.bf16 %v2341, %v2341
        %v2352 = vpack.c.bf16 %v2342, %v2342
        %v2353 = vld [vmem:[#allocation2] sm:$0xff]
        %v2354 = vld [vmem:[#allocation2 + $0x8] sm:$0xff]
        %v2355 = vld [vmem:[#allocation2 + $0x10] sm:$0xff]
        %v2356 = vld [vmem:[#allocation2 + $0x18] sm:$0xff]
        %v2357 = vld [vmem:[#allocation2 + $0x20] sm:$0xff]
        %v2358 = vld [vmem:[#allocation2 + $0x28] sm:$0xff]
        %v2359 = vld [vmem:[#allocation2 + $0x30] sm:$0xff]
        %v2360 = vld [vmem:[#allocation2 + $0x38] sm:$0xff]
        %v2361 = vld [vmem:[#allocation2 + $0x40] sm:$0xff]
        %v2362 = vld [vmem:[#allocation2 + $0x48] sm:$0xff]
        %v2363 = vld [vmem:[#allocation2 + $0x50] sm:$0xff]
        %v2364 = vld [vmem:[#allocation2 + $0x58] sm:$0xff]
        %v2365 = vld [vmem:[#allocation2 + $0x60] sm:$0xff]
        %v2366 = vld [vmem:[#allocation2 + $0x68] sm:$0xff]
        %v2367 = vld [vmem:[#allocation2 + $0x70] sm:$0xff]
        %v2368 = vld [vmem:[#allocation2 + $0x78] sm:$0xff]
        %v2369 = vld [vmem:[#allocation2 + $0x80] sm:$0xff]
        %v2370 = vld [vmem:[#allocation2 + $0x88] sm:$0xff]
        %v2371 = vld [vmem:[#allocation2 + $0x90] sm:$0xff]
        %v2372 = vld [vmem:[#allocation2 + $0x98] sm:$0xff]
        %v2373 = vld [vmem:[#allocation2 + $0xa0] sm:$0xff]
        %v2374 = vld [vmem:[#allocation2 + $0xa8] sm:$0xff]
        %v2375 = vld [vmem:[#allocation2 + $0xb0] sm:$0xff]
        %v2376 = vld [vmem:[#allocation2 + $0xb8] sm:$0xff]
        %v2377 = vld [vmem:[#allocation2 + $0xc0] sm:$0xff]
        %v2378 = vld [vmem:[#allocation2 + $0xc8] sm:$0xff]
        %v2379 = vld [vmem:[#allocation2 + $0xd0] sm:$0xff]
        %v2380 = vld [vmem:[#allocation2 + $0xd8] sm:$0xff]
        %v2381 = vld [vmem:[#allocation2 + $0xe0] sm:$0xff]
        %v2382 = vld [vmem:[#allocation2 + $0xe8] sm:$0xff]
        %v2383 = vld [vmem:[#allocation2 + $0xf0] sm:$0xff]
        %v2384 = vld [vmem:[#allocation2 + $0xf8] sm:$0xff]
        %2385 = vmatprep.subr.bf16.mxu0 %v2354
        %2386 = vmatpush1.bf16.msra.mxu0 %v2353
        %2387 = vmatprep.subr.bf16.mxu0 %v2356
        %2388 = vmatpush1.bf16.msra.mxu0 %v2355
        %2389 = vmatprep.subr.bf16.mxu0 %v2358
        %2390 = vmatpush1.bf16.msra.mxu0 %v2357
        %2391 = vmatprep.subr.bf16.mxu0 %v2360
        %2392 = vmatpush1.bf16.msra.mxu0 %v2359
        %2393 = vmatprep.subr.bf16.mxu0 %v2362
        %2394 = vmatpush1.bf16.msra.mxu0 %v2361
        %2395 = vmatprep.subr.bf16.mxu0 %v2364
        %2396 = vmatpush1.bf16.msra.mxu0 %v2363
        %2397 = vmatprep.subr.bf16.mxu0 %v2366
        %2398 = vmatpush1.bf16.msra.mxu0 %v2365
        %2399 = vmatprep.subr.bf16.mxu0 %v2368
        %2400 = vmatpush1.bf16.msra.mxu0 %v2367
        %2401 = vmatprep.subr.bf16.mxu0 %v2370
        %2402 = vmatpush1.bf16.msra.mxu0 %v2369
        %2403 = vmatprep.subr.bf16.mxu0 %v2372
        %2404 = vmatpush1.bf16.msra.mxu0 %v2371
        %2405 = vmatprep.subr.bf16.mxu0 %v2374
        %2406 = vmatpush1.bf16.msra.mxu0 %v2373
        %2407 = vmatprep.subr.bf16.mxu0 %v2376
        %2408 = vmatpush1.bf16.msra.mxu0 %v2375
        %2409 = vmatprep.subr.bf16.mxu0 %v2378
        %2410 = vmatpush1.bf16.msra.mxu0 %v2377
        %2411 = vmatprep.subr.bf16.mxu0 %v2380
        %2412 = vmatpush1.bf16.msra.mxu0 %v2379
        %2413 = vmatprep.subr.bf16.mxu0 %v2382
        %2414 = vmatpush1.bf16.msra.mxu0 %v2381
        %2415 = vmatprep.subr.bf16.mxu0 %v2384
        %2416 = vmatpush1.bf16.msra.mxu0 %v2383
        %2417 = vmatprep.mubr.bf16.mxu0 %v2352
        %2418 = vmatmul.mubr.bf16.gmra.mrb[0].mxu0 %v2351
        %v2419 = vpop.f32.mrb[0].mxu0
        %v2420 = vadd.f32 0.0, %v2419
        %v2421 = vpop.f32.mrb[0].mxu0
        %v2422 = vadd.f32 0.0, %v2421
        %v2423 = vpop.f32.mrb[0].mxu0
        %v2424 = vpop.f32.mrb[0].mxu0
        %2425 = vdwg.mxu0
        %v2426 = vadd.f32 %v2349, %v2420
        %v2427 = vadd.f32 %v2350, %v2422
        %v2428 = vtanh.pop %v2426
        %v2429 = vtanh.pop %v2427
        %s2430 = smul.u32 21, 2
        %s2431 = smul.addr %s2430, 8
        %s2432 = scalar_lea.vmem [#allocation5], %s2431
        %2433 = vst [vmem:[%s2432] sm:$0xff] %v2428
        %2434 = vst [vmem:[%s2432 + $0x8] sm:$0xff] %v2429
        %s2435 = scalar_lea.vmem [#allocation4], 352
        %v2436 = vld [vmem:[%s2435] sm:$0xff]
        %v2437 = vld [vmem:[%s2435 + $0x8] sm:$0xff]
        %v2438 = vpack.c.bf16 %v2428, %v2428
        %v2439 = vpack.c.bf16 %v2429, %v2429
        %v2440 = vld [vmem:[#allocation2] sm:$0xff]
        %v2441 = vld [vmem:[#allocation2 + $0x8] sm:$0xff]
        %v2442 = vld [vmem:[#allocation2 + $0x10] sm:$0xff]
        %v2443 = vld [vmem:[#allocation2 + $0x18] sm:$0xff]
        %v2444 = vld [vmem:[#allocation2 + $0x20] sm:$0xff]
        %v2445 = vld [vmem:[#allocation2 + $0x28] sm:$0xff]
        %v2446 = vld [vmem:[#allocation2 + $0x30] sm:$0xff]
        %v2447 = vld [vmem:[#allocation2 + $0x38] sm:$0xff]
        %v2448 = vld [vmem:[#allocation2 + $0x40] sm:$0xff]
        %v2449 = vld [vmem:[#allocation2 + $0x48] sm:$0xff]
        %v2450 = vld [vmem:[#allocation2 + $0x50] sm:$0xff]
        %v2451 = vld [vmem:[#allocation2 + $0x58] sm:$0xff]
        %v2452 = vld [vmem:[#allocation2 + $0x60] sm:$0xff]
        %v2453 = vld [vmem:[#allocation2 + $0x68] sm:$0xff]
        %v2454 = vld [vmem:[#allocation2 + $0x70] sm:$0xff]
        %v2455 = vld [vmem:[#allocation2 + $0x78] sm:$0xff]
        %v2456 = vld [vmem:[#allocation2 + $0x80] sm:$0xff]
        %v2457 = vld [vmem:[#allocation2 + $0x88] sm:$0xff]
        %v2458 = vld [vmem:[#allocation2 + $0x90] sm:$0xff]
        %v2459 = vld [vmem:[#allocation2 + $0x98] sm:$0xff]
        %v2460 = vld [vmem:[#allocation2 + $0xa0] sm:$0xff]
        %v2461 = vld [vmem:[#allocation2 + $0xa8] sm:$0xff]
        %v2462 = vld [vmem:[#allocation2 + $0xb0] sm:$0xff]
        %v2463 = vld [vmem:[#allocation2 + $0xb8] sm:$0xff]
        %v2464 = vld [vmem:[#allocation2 + $0xc0] sm:$0xff]
        %v2465 = vld [vmem:[#allocation2 + $0xc8] sm:$0xff]
        %v2466 = vld [vmem:[#allocation2 + $0xd0] sm:$0xff]
        %v2467 = vld [vmem:[#allocation2 + $0xd8] sm:$0xff]
        %v2468 = vld [vmem:[#allocation2 + $0xe0] sm:$0xff]
        %v2469 = vld [vmem:[#allocation2 + $0xe8] sm:$0xff]
        %v2470 = vld [vmem:[#allocation2 + $0xf0] sm:$0xff]
        %v2471 = vld [vmem:[#allocation2 + $0xf8] sm:$0xff]
        %2472 = vmatprep.subr.bf16.mxu0 %v2441
        %2473 = vmatpush1.bf16.msra.mxu0 %v2440
        %2474 = vmatprep.subr.bf16.mxu0 %v2443
        %2475 = vmatpush1.bf16.msra.mxu0 %v2442
        %2476 = vmatprep.subr.bf16.mxu0 %v2445
        %2477 = vmatpush1.bf16.msra.mxu0 %v2444
        %2478 = vmatprep.subr.bf16.mxu0 %v2447
        %2479 = vmatpush1.bf16.msra.mxu0 %v2446
        %2480 = vmatprep.subr.bf16.mxu0 %v2449
        %2481 = vmatpush1.bf16.msra.mxu0 %v2448
        %2482 = vmatprep.subr.bf16.mxu0 %v2451
        %2483 = vmatpush1.bf16.msra.mxu0 %v2450
        %2484 = vmatprep.subr.bf16.mxu0 %v2453
        %2485 = vmatpush1.bf16.msra.mxu0 %v2452
        %2486 = vmatprep.subr.bf16.mxu0 %v2455
        %2487 = vmatpush1.bf16.msra.mxu0 %v2454
        %2488 = vmatprep.subr.bf16.mxu0 %v2457
        %2489 = vmatpush1.bf16.msra.mxu0 %v2456
        %2490 = vmatprep.subr.bf16.mxu0 %v2459
        %2491 = vmatpush1.bf16.msra.mxu0 %v2458
        %2492 = vmatprep.subr.bf16.mxu0 %v2461
        %2493 = vmatpush1.bf16.msra.mxu0 %v2460
        %2494 = vmatprep.subr.bf16.mxu0 %v2463
        %2495 = vmatpush1.bf16.msra.mxu0 %v2462
        %2496 = vmatprep.subr.bf16.mxu0 %v2465
        %2497 = vmatpush1.bf16.msra.mxu0 %v2464
        %2498 = vmatprep.subr.bf16.mxu0 %v2467
        %2499 = vmatpush1.bf16.msra.mxu0 %v2466
        %2500 = vmatprep.subr.bf16.mxu0 %v2469
        %2501 = vmatpush1.bf16.msra.mxu0 %v2468
        %2502 = vmatprep.subr.bf16.mxu0 %v2471
        %2503 = vmatpush1.bf16.msra.mxu0 %v2470
        %2504 = vmatprep.mubr.bf16.mxu0 %v2439
        %2505 = vmatmul.mubr.bf16.gmra.mrb[0].mxu0 %v2438
        %v2506 = vpop.f32.mrb[0].mxu0
        %v2507 = vadd.f32 0.0, %v2506
        %v2508 = vpop.f32.mrb[0].mxu0
        %v2509 = vadd.f32 0.0, %v2508
        %v2510 = vpop.f32.mrb[0].mxu0
        %v2511 = vpop.f32.mrb[0].mxu0
        %2512 = vdwg.mxu0
        %v2513 = vadd.f32 %v2436, %v2507
        %v2514 = vadd.f32 %v2437, %v2509
        %v2515 = vtanh.pop %v2513
        %v2516 = vtanh.pop %v2514
        %s2517 = smul.u32 22, 2
        %s2518 = smul.addr %s2517, 8
        %s2519 = scalar_lea.vmem [#allocation5], %s2518
        %2520 = vst [vmem:[%s2519] sm:$0xff] %v2515
        %2521 = vst [vmem:[%s2519 + $0x8] sm:$0xff] %v2516
        %s2522 = scalar_lea.vmem [#allocation4], 368
        %v2523 = vld [vmem:[%s2522] sm:$0xff]
        %v2524 = vld [vmem:[%s2522 + $0x8] sm:$0xff]
        %v2525 = vpack.c.bf16 %v2515, %v2515
        %v2526 = vpack.c.bf16 %v2516, %v2516
        %v2527 = vld [vmem:[#allocation2] sm:$0xff]
        %v2528 = vld [vmem:[#allocation2 + $0x8] sm:$0xff]
        %v2529 = vld [vmem:[#allocation2 + $0x10] sm:$0xff]
        %v2530 = vld [vmem:[#allocation2 + $0x18] sm:$0xff]
        %v2531 = vld [vmem:[#allocation2 + $0x20] sm:$0xff]
        %v2532 = vld [vmem:[#allocation2 + $0x28] sm:$0xff]
        %v2533 = vld [vmem:[#allocation2 + $0x30] sm:$0xff]
        %v2534 = vld [vmem:[#allocation2 + $0x38] sm:$0xff]
        %v2535 = vld [vmem:[#allocation2 + $0x40] sm:$0xff]
        %v2536 = vld [vmem:[#allocation2 + $0x48] sm:$0xff]
        %v2537 = vld [vmem:[#allocation2 + $0x50] sm:$0xff]
        %v2538 = vld [vmem:[#allocation2 + $0x58] sm:$0xff]
        %v2539 = vld [vmem:[#allocation2 + $0x60] sm:$0xff]
        %v2540 = vld [vmem:[#allocation2 + $0x68] sm:$0xff]
        %v2541 = vld [vmem:[#allocation2 + $0x70] sm:$0xff]
        %v2542 = vld [vmem:[#allocation2 + $0x78] sm:$0xff]
        %v2543 = vld [vmem:[#allocation2 + $0x80] sm:$0xff]
        %v2544 = vld [vmem:[#allocation2 + $0x88] sm:$0xff]
        %v2545 = vld [vmem:[#allocation2 + $0x90] sm:$0xff]
        %v2546 = vld [vmem:[#allocation2 + $0x98] sm:$0xff]
        %v2547 = vld [vmem:[#allocation2 + $0xa0] sm:$0xff]
        %v2548 = vld [vmem:[#allocation2 + $0xa8] sm:$0xff]
        %v2549 = vld [vmem:[#allocation2 + $0xb0] sm:$0xff]
        %v2550 = vld [vmem:[#allocation2 + $0xb8] sm:$0xff]
        %v2551 = vld [vmem:[#allocation2 + $0xc0] sm:$0xff]
        %v2552 = vld [vmem:[#allocation2 + $0xc8] sm:$0xff]
        %v2553 = vld [vmem:[#allocation2 + $0xd0] sm:$0xff]
        %v2554 = vld [vmem:[#allocation2 + $0xd8] sm:$0xff]
        %v2555 = vld [vmem:[#allocation2 + $0xe0] sm:$0xff]
        %v2556 = vld [vmem:[#allocation2 + $0xe8] sm:$0xff]
        %v2557 = vld [vmem:[#allocation2 + $0xf0] sm:$0xff]
        %v2558 = vld [vmem:[#allocation2 + $0xf8] sm:$0xff]
        %2559 = vmatprep.subr.bf16.mxu0 %v2528
        %2560 = vmatpush1.bf16.msra.mxu0 %v2527
        %2561 = vmatprep.subr.bf16.mxu0 %v2530
        %2562 = vmatpush1.bf16.msra.mxu0 %v2529
        %2563 = vmatprep.subr.bf16.mxu0 %v2532
        %2564 = vmatpush1.bf16.msra.mxu0 %v2531
        %2565 = vmatprep.subr.bf16.mxu0 %v2534
        %2566 = vmatpush1.bf16.msra.mxu0 %v2533
        %2567 = vmatprep.subr.bf16.mxu0 %v2536
        %2568 = vmatpush1.bf16.msra.mxu0 %v2535
        %2569 = vmatprep.subr.bf16.mxu0 %v2538
        %2570 = vmatpush1.bf16.msra.mxu0 %v2537
        %2571 = vmatprep.subr.bf16.mxu0 %v2540
        %2572 = vmatpush1.bf16.msra.mxu0 %v2539
        %2573 = vmatprep.subr.bf16.mxu0 %v2542
        %2574 = vmatpush1.bf16.msra.mxu0 %v2541
        %2575 = vmatprep.subr.bf16.mxu0 %v2544
        %2576 = vmatpush1.bf16.msra.mxu0 %v2543
        %2577 = vmatprep.subr.bf16.mxu0 %v2546
        %2578 = vmatpush1.bf16.msra.mxu0 %v2545
        %2579 = vmatprep.subr.bf16.mxu0 %v2548
        %2580 = vmatpush1.bf16.msra.mxu0 %v2547
        %2581 = vmatprep.subr.bf16.mxu0 %v2550
        %2582 = vmatpush1.bf16.msra.mxu0 %v2549
        %2583 = vmatprep.subr.bf16.mxu0 %v2552
        %2584 = vmatpush1.bf16.msra.mxu0 %v2551
        %2585 = vmatprep.subr.bf16.mxu0 %v2554
        %2586 = vmatpush1.bf16.msra.mxu0 %v2553
        %2587 = vmatprep.subr.bf16.mxu0 %v2556
        %2588 = vmatpush1.bf16.msra.mxu0 %v2555
        %2589 = vmatprep.subr.bf16.mxu0 %v2558
        %2590 = vmatpush1.bf16.msra.mxu0 %v2557
        %2591 = vmatprep.mubr.bf16.mxu0 %v2526
        %2592 = vmatmul.mubr.bf16.gmra.mrb[0].mxu0 %v2525
        %v2593 = vpop.f32.mrb[0].mxu0
        %v2594 = vadd.f32 0.0, %v2593
        %v2595 = vpop.f32.mrb[0].mxu0
        %v2596 = vadd.f32 0.0, %v2595
        %v2597 = vpop.f32.mrb[0].mxu0
        %v2598 = vpop.f32.mrb[0].mxu0
        %2599 = vdwg.mxu0
        %v2600 = vadd.f32 %v2523, %v2594
        %v2601 = vadd.f32 %v2524, %v2596
        %v2602 = vtanh.pop %v2600
        %v2603 = vtanh.pop %v2601
        %s2604 = smul.u32 23, 2
        %s2605 = smul.addr %s2604, 8
        %s2606 = scalar_lea.vmem [#allocation5], %s2605
        %2607 = vst [vmem:[%s2606] sm:$0xff] %v2602
        %2608 = vst [vmem:[%s2606 + $0x8] sm:$0xff] %v2603
        %s2609 = scalar_lea.vmem [#allocation4], 384
        %v2610 = vld [vmem:[%s2609] sm:$0xff]
        %v2611 = vld [vmem:[%s2609 + $0x8] sm:$0xff]
        %v2612 = vpack.c.bf16 %v2602, %v2602
        %v2613 = vpack.c.bf16 %v2603, %v2603
        %v2614 = vld [vmem:[#allocation2] sm:$0xff]
        %v2615 = vld [vmem:[#allocation2 + $0x8] sm:$0xff]
        %v2616 = vld [vmem:[#allocation2 + $0x10] sm:$0xff]
        %v2617 = vld [vmem:[#allocation2 + $0x18] sm:$0xff]
        %v2618 = vld [vmem:[#allocation2 + $0x20] sm:$0xff]
        %v2619 = vld [vmem:[#allocation2 + $0x28] sm:$0xff]
        %v2620 = vld [vmem:[#allocation2 + $0x30] sm:$0xff]
        %v2621 = vld [vmem:[#allocation2 + $0x38] sm:$0xff]
        %v2622 = vld [vmem:[#allocation2 + $0x40] sm:$0xff]
        %v2623 = vld [vmem:[#allocation2 + $0x48] sm:$0xff]
        %v2624 = vld [vmem:[#allocation2 + $0x50] sm:$0xff]
        %v2625 = vld [vmem:[#allocation2 + $0x58] sm:$0xff]
        %v2626 = vld [vmem:[#allocation2 + $0x60] sm:$0xff]
        %v2627 = vld [vmem:[#allocation2 + $0x68] sm:$0xff]
        %v2628 = vld [vmem:[#allocation2 + $0x70] sm:$0xff]
        %v2629 = vld [vmem:[#allocation2 + $0x78] sm:$0xff]
        %v2630 = vld [vmem:[#allocation2 + $0x80] sm:$0xff]
        %v2631 = vld [vmem:[#allocation2 + $0x88] sm:$0xff]
        %v2632 = vld [vmem:[#allocation2 + $0x90] sm:$0xff]
        %v2633 = vld [vmem:[#allocation2 + $0x98] sm:$0xff]
        %v2634 = vld [vmem:[#allocation2 + $0xa0] sm:$0xff]
        %v2635 = vld [vmem:[#allocation2 + $0xa8] sm:$0xff]
        %v2636 = vld [vmem:[#allocation2 + $0xb0] sm:$0xff]
        %v2637 = vld [vmem:[#allocation2 + $0xb8] sm:$0xff]
        %v2638 = vld [vmem:[#allocation2 + $0xc0] sm:$0xff]
        %v2639 = vld [vmem:[#allocation2 + $0xc8] sm:$0xff]
        %v2640 = vld [vmem:[#allocation2 + $0xd0] sm:$0xff]
        %v2641 = vld [vmem:[#allocation2 + $0xd8] sm:$0xff]
        %v2642 = vld [vmem:[#allocation2 + $0xe0] sm:$0xff]
        %v2643 = vld [vmem:[#allocation2 + $0xe8] sm:$0xff]
        %v2644 = vld [vmem:[#allocation2 + $0xf0] sm:$0xff]
        %v2645 = vld [vmem:[#allocation2 + $0xf8] sm:$0xff]
        %2646 = vmatprep.subr.bf16.mxu0 %v2615
        %2647 = vmatpush1.bf16.msra.mxu0 %v2614
        %2648 = vmatprep.subr.bf16.mxu0 %v2617
        %2649 = vmatpush1.bf16.msra.mxu0 %v2616
        %2650 = vmatprep.subr.bf16.mxu0 %v2619
        %2651 = vmatpush1.bf16.msra.mxu0 %v2618
        %2652 = vmatprep.subr.bf16.mxu0 %v2621
        %2653 = vmatpush1.bf16.msra.mxu0 %v2620
        %2654 = vmatprep.subr.bf16.mxu0 %v2623
        %2655 = vmatpush1.bf16.msra.mxu0 %v2622
        %2656 = vmatprep.subr.bf16.mxu0 %v2625
        %2657 = vmatpush1.bf16.msra.mxu0 %v2624
        %2658 = vmatprep.subr.bf16.mxu0 %v2627
        %2659 = vmatpush1.bf16.msra.mxu0 %v2626
        %2660 = vmatprep.subr.bf16.mxu0 %v2629
        %2661 = vmatpush1.bf16.msra.mxu0 %v2628
        %2662 = vmatprep.subr.bf16.mxu0 %v2631
        %2663 = vmatpush1.bf16.msra.mxu0 %v2630
        %2664 = vmatprep.subr.bf16.mxu0 %v2633
        %2665 = vmatpush1.bf16.msra.mxu0 %v2632
        %2666 = vmatprep.subr.bf16.mxu0 %v2635
        %2667 = vmatpush1.bf16.msra.mxu0 %v2634
        %2668 = vmatprep.subr.bf16.mxu0 %v2637
        %2669 = vmatpush1.bf16.msra.mxu0 %v2636
        %2670 = vmatprep.subr.bf16.mxu0 %v2639
        %2671 = vmatpush1.bf16.msra.mxu0 %v2638
        %2672 = vmatprep.subr.bf16.mxu0 %v2641
        %2673 = vmatpush1.bf16.msra.mxu0 %v2640
        %2674 = vmatprep.subr.bf16.mxu0 %v2643
        %2675 = vmatpush1.bf16.msra.mxu0 %v2642
        %2676 = vmatprep.subr.bf16.mxu0 %v2645
        %2677 = vmatpush1.bf16.msra.mxu0 %v2644
        %2678 = vmatprep.mubr.bf16.mxu0 %v2613
        %2679 = vmatmul.mubr.bf16.gmra.mrb[0].mxu0 %v2612
        %v2680 = vpop.f32.mrb[0].mxu0
        %v2681 = vadd.f32 0.0, %v2680
        %v2682 = vpop.f32.mrb[0].mxu0
        %v2683 = vadd.f32 0.0, %v2682
        %v2684 = vpop.f32.mrb[0].mxu0
        %v2685 = vpop.f32.mrb[0].mxu0
        %2686 = vdwg.mxu0
        %v2687 = vadd.f32 %v2610, %v2681
        %v2688 = vadd.f32 %v2611, %v2683
        %v2689 = vtanh.pop %v2687
        %v2690 = vtanh.pop %v2688
        %s2691 = smul.u32 24, 2
        %s2692 = smul.addr %s2691, 8
        %s2693 = scalar_lea.vmem [#allocation5], %s2692
        %2694 = vst [vmem:[%s2693] sm:$0xff] %v2689
        %2695 = vst [vmem:[%s2693 + $0x8] sm:$0xff] %v2690
        %s2696 = scalar_lea.vmem [#allocation4], 400
        %v2697 = vld [vmem:[%s2696] sm:$0xff]
        %v2698 = vld [vmem:[%s2696 + $0x8] sm:$0xff]
        %v2699 = vpack.c.bf16 %v2689, %v2689
        %v2700 = vpack.c.bf16 %v2690, %v2690
        %v2701 = vld [vmem:[#allocation2] sm:$0xff]
        %v2702 = vld [vmem:[#allocation2 + $0x8] sm:$0xff]
        %v2703 = vld [vmem:[#allocation2 + $0x10] sm:$0xff]
        %v2704 = vld [vmem:[#allocation2 + $0x18] sm:$0xff]
        %v2705 = vld [vmem:[#allocation2 + $0x20] sm:$0xff]
        %v2706 = vld [vmem:[#allocation2 + $0x28] sm:$0xff]
        %v2707 = vld [vmem:[#allocation2 + $0x30] sm:$0xff]
        %v2708 = vld [vmem:[#allocation2 + $0x38] sm:$0xff]
        %v2709 = vld [vmem:[#allocation2 + $0x40] sm:$0xff]
        %v2710 = vld [vmem:[#allocation2 + $0x48] sm:$0xff]
        %v2711 = vld [vmem:[#allocation2 + $0x50] sm:$0xff]
        %v2712 = vld [vmem:[#allocation2 + $0x58] sm:$0xff]
        %v2713 = vld [vmem:[#allocation2 + $0x60] sm:$0xff]
        %v2714 = vld [vmem:[#allocation2 + $0x68] sm:$0xff]
        %v2715 = vld [vmem:[#allocation2 + $0x70] sm:$0xff]
        %v2716 = vld [vmem:[#allocation2 + $0x78] sm:$0xff]
        %v2717 = vld [vmem:[#allocation2 + $0x80] sm:$0xff]
        %v2718 = vld [vmem:[#allocation2 + $0x88] sm:$0xff]
        %v2719 = vld [vmem:[#allocation2 + $0x90] sm:$0xff]
        %v2720 = vld [vmem:[#allocation2 + $0x98] sm:$0xff]
        %v2721 = vld [vmem:[#allocation2 + $0xa0] sm:$0xff]
        %v2722 = vld [vmem:[#allocation2 + $0xa8] sm:$0xff]
        %v2723 = vld [vmem:[#allocation2 + $0xb0] sm:$0xff]
        %v2724 = vld [vmem:[#allocation2 + $0xb8] sm:$0xff]
        %v2725 = vld [vmem:[#allocation2 + $0xc0] sm:$0xff]
        %v2726 = vld [vmem:[#allocation2 + $0xc8] sm:$0xff]
        %v2727 = vld [vmem:[#allocation2 + $0xd0] sm:$0xff]
        %v2728 = vld [vmem:[#allocation2 + $0xd8] sm:$0xff]
        %v2729 = vld [vmem:[#allocation2 + $0xe0] sm:$0xff]
        %v2730 = vld [vmem:[#allocation2 + $0xe8] sm:$0xff]
        %v2731 = vld [vmem:[#allocation2 + $0xf0] sm:$0xff]
        %v2732 = vld [vmem:[#allocation2 + $0xf8] sm:$0xff]
        %2733 = vmatprep.subr.bf16.mxu0 %v2702
        %2734 = vmatpush1.bf16.msra.mxu0 %v2701
        %2735 = vmatprep.subr.bf16.mxu0 %v2704
        %2736 = vmatpush1.bf16.msra.mxu0 %v2703
        %2737 = vmatprep.subr.bf16.mxu0 %v2706
        %2738 = vmatpush1.bf16.msra.mxu0 %v2705
        %2739 = vmatprep.subr.bf16.mxu0 %v2708
        %2740 = vmatpush1.bf16.msra.mxu0 %v2707
        %2741 = vmatprep.subr.bf16.mxu0 %v2710
        %2742 = vmatpush1.bf16.msra.mxu0 %v2709
        %2743 = vmatprep.subr.bf16.mxu0 %v2712
        %2744 = vmatpush1.bf16.msra.mxu0 %v2711
        %2745 = vmatprep.subr.bf16.mxu0 %v2714
        %2746 = vmatpush1.bf16.msra.mxu0 %v2713
        %2747 = vmatprep.subr.bf16.mxu0 %v2716
        %2748 = vmatpush1.bf16.msra.mxu0 %v2715
        %2749 = vmatprep.subr.bf16.mxu0 %v2718
        %2750 = vmatpush1.bf16.msra.mxu0 %v2717
        %2751 = vmatprep.subr.bf16.mxu0 %v2720
        %2752 = vmatpush1.bf16.msra.mxu0 %v2719
        %2753 = vmatprep.subr.bf16.mxu0 %v2722
        %2754 = vmatpush1.bf16.msra.mxu0 %v2721
        %2755 = vmatprep.subr.bf16.mxu0 %v2724
        %2756 = vmatpush1.bf16.msra.mxu0 %v2723
        %2757 = vmatprep.subr.bf16.mxu0 %v2726
        %2758 = vmatpush1.bf16.msra.mxu0 %v2725
        %2759 = vmatprep.subr.bf16.mxu0 %v2728
        %2760 = vmatpush1.bf16.msra.mxu0 %v2727
        %2761 = vmatprep.subr.bf16.mxu0 %v2730
        %2762 = vmatpush1.bf16.msra.mxu0 %v2729
        %2763 = vmatprep.subr.bf16.mxu0 %v2732
        %2764 = vmatpush1.bf16.msra.mxu0 %v2731
        %2765 = vmatprep.mubr.bf16.mxu0 %v2700
        %2766 = vmatmul.mubr.bf16.gmra.mrb[0].mxu0 %v2699
        %v2767 = vpop.f32.mrb[0].mxu0
        %v2768 = vadd.f32 0.0, %v2767
        %v2769 = vpop.f32.mrb[0].mxu0
        %v2770 = vadd.f32 0.0, %v2769
        %v2771 = vpop.f32.mrb[0].mxu0
        %v2772 = vpop.f32.mrb[0].mxu0
        %2773 = vdwg.mxu0
        %v2774 = vadd.f32 %v2697, %v2768
        %v2775 = vadd.f32 %v2698, %v2770
        %v2776 = vtanh.pop %v2774
        %v2777 = vtanh.pop %v2775
        %s2778 = smul.u32 25, 2
        %s2779 = smul.addr %s2778, 8
        %s2780 = scalar_lea.vmem [#allocation5], %s2779
        %2781 = vst [vmem:[%s2780] sm:$0xff] %v2776
        %2782 = vst [vmem:[%s2780 + $0x8] sm:$0xff] %v2777
        %s2783 = scalar_lea.vmem [#allocation4], 416
        %v2784 = vld [vmem:[%s2783] sm:$0xff]
        %v2785 = vld [vmem:[%s2783 + $0x8] sm:$0xff]
        %v2786 = vpack.c.bf16 %v2776, %v2776
        %v2787 = vpack.c.bf16 %v2777, %v2777
        %v2788 = vld [vmem:[#allocation2] sm:$0xff]
        %v2789 = vld [vmem:[#allocation2 + $0x8] sm:$0xff]
        %v2790 = vld [vmem:[#allocation2 + $0x10] sm:$0xff]
        %v2791 = vld [vmem:[#allocation2 + $0x18] sm:$0xff]
        %v2792 = vld [vmem:[#allocation2 + $0x20] sm:$0xff]
        %v2793 = vld [vmem:[#allocation2 + $0x28] sm:$0xff]
        %v2794 = vld [vmem:[#allocation2 + $0x30] sm:$0xff]
        %v2795 = vld [vmem:[#allocation2 + $0x38] sm:$0xff]
        %v2796 = vld [vmem:[#allocation2 + $0x40] sm:$0xff]
        %v2797 = vld [vmem:[#allocation2 + $0x48] sm:$0xff]
        %v2798 = vld [vmem:[#allocation2 + $0x50] sm:$0xff]
        %v2799 = vld [vmem:[#allocation2 + $0x58] sm:$0xff]
        %v2800 = vld [vmem:[#allocation2 + $0x60] sm:$0xff]
        %v2801 = vld [vmem:[#allocation2 + $0x68] sm:$0xff]
        %v2802 = vld [vmem:[#allocation2 + $0x70] sm:$0xff]
        %v2803 = vld [vmem:[#allocation2 + $0x78] sm:$0xff]
        %v2804 = vld [vmem:[#allocation2 + $0x80] sm:$0xff]
        %v2805 = vld [vmem:[#allocation2 + $0x88] sm:$0xff]
        %v2806 = vld [vmem:[#allocation2 + $0x90] sm:$0xff]
        %v2807 = vld [vmem:[#allocation2 + $0x98] sm:$0xff]
        %v2808 = vld [vmem:[#allocation2 + $0xa0] sm:$0xff]
        %v2809 = vld [vmem:[#allocation2 + $0xa8] sm:$0xff]
        %v2810 = vld [vmem:[#allocation2 + $0xb0] sm:$0xff]
        %v2811 = vld [vmem:[#allocation2 + $0xb8] sm:$0xff]
        %v2812 = vld [vmem:[#allocation2 + $0xc0] sm:$0xff]
        %v2813 = vld [vmem:[#allocation2 + $0xc8] sm:$0xff]
        %v2814 = vld [vmem:[#allocation2 + $0xd0] sm:$0xff]
        %v2815 = vld [vmem:[#allocation2 + $0xd8] sm:$0xff]
        %v2816 = vld [vmem:[#allocation2 + $0xe0] sm:$0xff]
        %v2817 = vld [vmem:[#allocation2 + $0xe8] sm:$0xff]
        %v2818 = vld [vmem:[#allocation2 + $0xf0] sm:$0xff]
        %v2819 = vld [vmem:[#allocation2 + $0xf8] sm:$0xff]
        %2820 = vmatprep.subr.bf16.mxu0 %v2789
        %2821 = vmatpush1.bf16.msra.mxu0 %v2788
        %2822 = vmatprep.subr.bf16.mxu0 %v2791
        %2823 = vmatpush1.bf16.msra.mxu0 %v2790
        %2824 = vmatprep.subr.bf16.mxu0 %v2793
        %2825 = vmatpush1.bf16.msra.mxu0 %v2792
        %2826 = vmatprep.subr.bf16.mxu0 %v2795
        %2827 = vmatpush1.bf16.msra.mxu0 %v2794
        %2828 = vmatprep.subr.bf16.mxu0 %v2797
        %2829 = vmatpush1.bf16.msra.mxu0 %v2796
        %2830 = vmatprep.subr.bf16.mxu0 %v2799
        %2831 = vmatpush1.bf16.msra.mxu0 %v2798
        %2832 = vmatprep.subr.bf16.mxu0 %v2801
        %2833 = vmatpush1.bf16.msra.mxu0 %v2800
        %2834 = vmatprep.subr.bf16.mxu0 %v2803
        %2835 = vmatpush1.bf16.msra.mxu0 %v2802
        %2836 = vmatprep.subr.bf16.mxu0 %v2805
        %2837 = vmatpush1.bf16.msra.mxu0 %v2804
        %2838 = vmatprep.subr.bf16.mxu0 %v2807
        %2839 = vmatpush1.bf16.msra.mxu0 %v2806
        %2840 = vmatprep.subr.bf16.mxu0 %v2809
        %2841 = vmatpush1.bf16.msra.mxu0 %v2808
        %2842 = vmatprep.subr.bf16.mxu0 %v2811
        %2843 = vmatpush1.bf16.msra.mxu0 %v2810
        %2844 = vmatprep.subr.bf16.mxu0 %v2813
        %2845 = vmatpush1.bf16.msra.mxu0 %v2812
        %2846 = vmatprep.subr.bf16.mxu0 %v2815
        %2847 = vmatpush1.bf16.msra.mxu0 %v2814
        %2848 = vmatprep.subr.bf16.mxu0 %v2817
        %2849 = vmatpush1.bf16.msra.mxu0 %v2816
        %2850 = vmatprep.subr.bf16.mxu0 %v2819
        %2851 = vmatpush1.bf16.msra.mxu0 %v2818
        %2852 = vmatprep.mubr.bf16.mxu0 %v2787
        %2853 = vmatmul.mubr.bf16.gmra.mrb[0].mxu0 %v2786
        %v2854 = vpop.f32.mrb[0].mxu0
        %v2855 = vadd.f32 0.0, %v2854
        %v2856 = vpop.f32.mrb[0].mxu0
        %v2857 = vadd.f32 0.0, %v2856
        %v2858 = vpop.f32.mrb[0].mxu0
        %v2859 = vpop.f32.mrb[0].mxu0
        %2860 = vdwg.mxu0
        %v2861 = vadd.f32 %v2784, %v2855
        %v2862 = vadd.f32 %v2785, %v2857
        %v2863 = vtanh.pop %v2861
        %v2864 = vtanh.pop %v2862
        %s2865 = smul.u32 26, 2
        %s2866 = smul.addr %s2865, 8
        %s2867 = scalar_lea.vmem [#allocation5], %s2866
        %2868 = vst [vmem:[%s2867] sm:$0xff] %v2863
        %2869 = vst [vmem:[%s2867 + $0x8] sm:$0xff] %v2864
        %s2870 = scalar_lea.vmem [#allocation4], 432
        %v2871 = vld [vmem:[%s2870] sm:$0xff]
        %v2872 = vld [vmem:[%s2870 + $0x8] sm:$0xff]
        %v2873 = vpack.c.bf16 %v2863, %v2863
        %v2874 = vpack.c.bf16 %v2864, %v2864
        %v2875 = vld [vmem:[#allocation2] sm:$0xff]
        %v2876 = vld [vmem:[#allocation2 + $0x8] sm:$0xff]
        %v2877 = vld [vmem:[#allocation2 + $0x10] sm:$0xff]
        %v2878 = vld [vmem:[#allocation2 + $0x18] sm:$0xff]
        %v2879 = vld [vmem:[#allocation2 + $0x20] sm:$0xff]
        %v2880 = vld [vmem:[#allocation2 + $0x28] sm:$0xff]
        %v2881 = vld [vmem:[#allocation2 + $0x30] sm:$0xff]
        %v2882 = vld [vmem:[#allocation2 + $0x38] sm:$0xff]
        %v2883 = vld [vmem:[#allocation2 + $0x40] sm:$0xff]
        %v2884 = vld [vmem:[#allocation2 + $0x48] sm:$0xff]
        %v2885 = vld [vmem:[#allocation2 + $0x50] sm:$0xff]
        %v2886 = vld [vmem:[#allocation2 + $0x58] sm:$0xff]
        %v2887 = vld [vmem:[#allocation2 + $0x60] sm:$0xff]
        %v2888 = vld [vmem:[#allocation2 + $0x68] sm:$0xff]
        %v2889 = vld [vmem:[#allocation2 + $0x70] sm:$0xff]
        %v2890 = vld [vmem:[#allocation2 + $0x78] sm:$0xff]
        %v2891 = vld [vmem:[#allocation2 + $0x80] sm:$0xff]
        %v2892 = vld [vmem:[#allocation2 + $0x88] sm:$0xff]
        %v2893 = vld [vmem:[#allocation2 + $0x90] sm:$0xff]
        %v2894 = vld [vmem:[#allocation2 + $0x98] sm:$0xff]
        %v2895 = vld [vmem:[#allocation2 + $0xa0] sm:$0xff]
        %v2896 = vld [vmem:[#allocation2 + $0xa8] sm:$0xff]
        %v2897 = vld [vmem:[#allocation2 + $0xb0] sm:$0xff]
        %v2898 = vld [vmem:[#allocation2 + $0xb8] sm:$0xff]
        %v2899 = vld [vmem:[#allocation2 + $0xc0] sm:$0xff]
        %v2900 = vld [vmem:[#allocation2 + $0xc8] sm:$0xff]
        %v2901 = vld [vmem:[#allocation2 + $0xd0] sm:$0xff]
        %v2902 = vld [vmem:[#allocation2 + $0xd8] sm:$0xff]
        %v2903 = vld [vmem:[#allocation2 + $0xe0] sm:$0xff]
        %v2904 = vld [vmem:[#allocation2 + $0xe8] sm:$0xff]
        %v2905 = vld [vmem:[#allocation2 + $0xf0] sm:$0xff]
        %v2906 = vld [vmem:[#allocation2 + $0xf8] sm:$0xff]
        %2907 = vmatprep.subr.bf16.mxu0 %v2876
        %2908 = vmatpush1.bf16.msra.mxu0 %v2875
        %2909 = vmatprep.subr.bf16.mxu0 %v2878
        %2910 = vmatpush1.bf16.msra.mxu0 %v2877
        %2911 = vmatprep.subr.bf16.mxu0 %v2880
        %2912 = vmatpush1.bf16.msra.mxu0 %v2879
        %2913 = vmatprep.subr.bf16.mxu0 %v2882
        %2914 = vmatpush1.bf16.msra.mxu0 %v2881
        %2915 = vmatprep.subr.bf16.mxu0 %v2884
        %2916 = vmatpush1.bf16.msra.mxu0 %v2883
        %2917 = vmatprep.subr.bf16.mxu0 %v2886
        %2918 = vmatpush1.bf16.msra.mxu0 %v2885
        %2919 = vmatprep.subr.bf16.mxu0 %v2888
        %2920 = vmatpush1.bf16.msra.mxu0 %v2887
        %2921 = vmatprep.subr.bf16.mxu0 %v2890
        %2922 = vmatpush1.bf16.msra.mxu0 %v2889
        %2923 = vmatprep.subr.bf16.mxu0 %v2892
        %2924 = vmatpush1.bf16.msra.mxu0 %v2891
        %2925 = vmatprep.subr.bf16.mxu0 %v2894
        %2926 = vmatpush1.bf16.msra.mxu0 %v2893
        %2927 = vmatprep.subr.bf16.mxu0 %v2896
        %2928 = vmatpush1.bf16.msra.mxu0 %v2895
        %2929 = vmatprep.subr.bf16.mxu0 %v2898
        %2930 = vmatpush1.bf16.msra.mxu0 %v2897
        %2931 = vmatprep.subr.bf16.mxu0 %v2900
        %2932 = vmatpush1.bf16.msra.mxu0 %v2899
        %2933 = vmatprep.subr.bf16.mxu0 %v2902
        %2934 = vmatpush1.bf16.msra.mxu0 %v2901
        %2935 = vmatprep.subr.bf16.mxu0 %v2904
        %2936 = vmatpush1.bf16.msra.mxu0 %v2903
        %2937 = vmatprep.subr.bf16.mxu0 %v2906
        %2938 = vmatpush1.bf16.msra.mxu0 %v2905
        %2939 = vmatprep.mubr.bf16.mxu0 %v2874
        %2940 = vmatmul.mubr.bf16.gmra.mrb[0].mxu0 %v2873
        %v2941 = vpop.f32.mrb[0].mxu0
        %v2942 = vadd.f32 0.0, %v2941
        %v2943 = vpop.f32.mrb[0].mxu0
        %v2944 = vadd.f32 0.0, %v2943
        %v2945 = vpop.f32.mrb[0].mxu0
        %v2946 = vpop.f32.mrb[0].mxu0
        %2947 = vdwg.mxu0
        %v2948 = vadd.f32 %v2871, %v2942
        %v2949 = vadd.f32 %v2872, %v2944
        %v2950 = vtanh.pop %v2948
        %v2951 = vtanh.pop %v2949
        %s2952 = smul.u32 27, 2
        %s2953 = smul.addr %s2952, 8
        %s2954 = scalar_lea.vmem [#allocation5], %s2953
        %2955 = vst [vmem:[%s2954] sm:$0xff] %v2950
        %2956 = vst [vmem:[%s2954 + $0x8] sm:$0xff] %v2951
        %s2957 = scalar_lea.vmem [#allocation4], 448
        %v2958 = vld [vmem:[%s2957] sm:$0xff]
        %v2959 = vld [vmem:[%s2957 + $0x8] sm:$0xff]
        %v2960 = vpack.c.bf16 %v2950, %v2950
        %v2961 = vpack.c.bf16 %v2951, %v2951
        %v2962 = vld [vmem:[#allocation2] sm:$0xff]
        %v2963 = vld [vmem:[#allocation2 + $0x8] sm:$0xff]
        %v2964 = vld [vmem:[#allocation2 + $0x10] sm:$0xff]
        %v2965 = vld [vmem:[#allocation2 + $0x18] sm:$0xff]
        %v2966 = vld [vmem:[#allocation2 + $0x20] sm:$0xff]
        %v2967 = vld [vmem:[#allocation2 + $0x28] sm:$0xff]
        %v2968 = vld [vmem:[#allocation2 + $0x30] sm:$0xff]
        %v2969 = vld [vmem:[#allocation2 + $0x38] sm:$0xff]
        %v2970 = vld [vmem:[#allocation2 + $0x40] sm:$0xff]
        %v2971 = vld [vmem:[#allocation2 + $0x48] sm:$0xff]
        %v2972 = vld [vmem:[#allocation2 + $0x50] sm:$0xff]
        %v2973 = vld [vmem:[#allocation2 + $0x58] sm:$0xff]
        %v2974 = vld [vmem:[#allocation2 + $0x60] sm:$0xff]
        %v2975 = vld [vmem:[#allocation2 + $0x68] sm:$0xff]
        %v2976 = vld [vmem:[#allocation2 + $0x70] sm:$0xff]
        %v2977 = vld [vmem:[#allocation2 + $0x78] sm:$0xff]
        %v2978 = vld [vmem:[#allocation2 + $0x80] sm:$0xff]
        %v2979 = vld [vmem:[#allocation2 + $0x88] sm:$0xff]
        %v2980 = vld [vmem:[#allocation2 + $0x90] sm:$0xff]
        %v2981 = vld [vmem:[#allocation2 + $0x98] sm:$0xff]
        %v2982 = vld [vmem:[#allocation2 + $0xa0] sm:$0xff]
        %v2983 = vld [vmem:[#allocation2 + $0xa8] sm:$0xff]
        %v2984 = vld [vmem:[#allocation2 + $0xb0] sm:$0xff]
        %v2985 = vld [vmem:[#allocation2 + $0xb8] sm:$0xff]
        %v2986 = vld [vmem:[#allocation2 + $0xc0] sm:$0xff]
        %v2987 = vld [vmem:[#allocation2 + $0xc8] sm:$0xff]
        %v2988 = vld [vmem:[#allocation2 + $0xd0] sm:$0xff]
        %v2989 = vld [vmem:[#allocation2 + $0xd8] sm:$0xff]
        %v2990 = vld [vmem:[#allocation2 + $0xe0] sm:$0xff]
        %v2991 = vld [vmem:[#allocation2 + $0xe8] sm:$0xff]
        %v2992 = vld [vmem:[#allocation2 + $0xf0] sm:$0xff]
        %v2993 = vld [vmem:[#allocation2 + $0xf8] sm:$0xff]
        %2994 = vmatprep.subr.bf16.mxu0 %v2963
        %2995 = vmatpush1.bf16.msra.mxu0 %v2962
        %2996 = vmatprep.subr.bf16.mxu0 %v2965
        %2997 = vmatpush1.bf16.msra.mxu0 %v2964
        %2998 = vmatprep.subr.bf16.mxu0 %v2967
        %2999 = vmatpush1.bf16.msra.mxu0 %v2966
        %3000 = vmatprep.subr.bf16.mxu0 %v2969
        %3001 = vmatpush1.bf16.msra.mxu0 %v2968
        %3002 = vmatprep.subr.bf16.mxu0 %v2971
        %3003 = vmatpush1.bf16.msra.mxu0 %v2970
        %3004 = vmatprep.subr.bf16.mxu0 %v2973
        %3005 = vmatpush1.bf16.msra.mxu0 %v2972
        %3006 = vmatprep.subr.bf16.mxu0 %v2975
        %3007 = vmatpush1.bf16.msra.mxu0 %v2974
        %3008 = vmatprep.subr.bf16.mxu0 %v2977
        %3009 = vmatpush1.bf16.msra.mxu0 %v2976
        %3010 = vmatprep.subr.bf16.mxu0 %v2979
        %3011 = vmatpush1.bf16.msra.mxu0 %v2978
        %3012 = vmatprep.subr.bf16.mxu0 %v2981
        %3013 = vmatpush1.bf16.msra.mxu0 %v2980
        %3014 = vmatprep.subr.bf16.mxu0 %v2983
        %3015 = vmatpush1.bf16.msra.mxu0 %v2982
        %3016 = vmatprep.subr.bf16.mxu0 %v2985
        %3017 = vmatpush1.bf16.msra.mxu0 %v2984
        %3018 = vmatprep.subr.bf16.mxu0 %v2987
        %3019 = vmatpush1.bf16.msra.mxu0 %v2986
        %3020 = vmatprep.subr.bf16.mxu0 %v2989
        %3021 = vmatpush1.bf16.msra.mxu0 %v2988
        %3022 = vmatprep.subr.bf16.mxu0 %v2991
        %3023 = vmatpush1.bf16.msra.mxu0 %v2990
        %3024 = vmatprep.subr.bf16.mxu0 %v2993
        %3025 = vmatpush1.bf16.msra.mxu0 %v2992
        %3026 = vmatprep.mubr.bf16.mxu0 %v2961
        %3027 = vmatmul.mubr.bf16.gmra.mrb[0].mxu0 %v2960
        %v3028 = vpop.f32.mrb[0].mxu0
        %v3029 = vadd.f32 0.0, %v3028
        %v3030 = vpop.f32.mrb[0].mxu0
        %v3031 = vadd.f32 0.0, %v3030
        %v3032 = vpop.f32.mrb[0].mxu0
        %v3033 = vpop.f32.mrb[0].mxu0
        %3034 = vdwg.mxu0
        %v3035 = vadd.f32 %v2958, %v3029
        %v3036 = vadd.f32 %v2959, %v3031
        %v3037 = vtanh.pop %v3035
        %v3038 = vtanh.pop %v3036
        %s3039 = smul.u32 28, 2
        %s3040 = smul.addr %s3039, 8
        %s3041 = scalar_lea.vmem [#allocation5], %s3040
        %3042 = vst [vmem:[%s3041] sm:$0xff] %v3037
        %3043 = vst [vmem:[%s3041 + $0x8] sm:$0xff] %v3038
        %s3044 = scalar_lea.vmem [#allocation4], 464
        %v3045 = vld [vmem:[%s3044] sm:$0xff]
        %v3046 = vld [vmem:[%s3044 + $0x8] sm:$0xff]
        %v3047 = vpack.c.bf16 %v3037, %v3037
        %v3048 = vpack.c.bf16 %v3038, %v3038
        %v3049 = vld [vmem:[#allocation2] sm:$0xff]
        %v3050 = vld [vmem:[#allocation2 + $0x8] sm:$0xff]
        %v3051 = vld [vmem:[#allocation2 + $0x10] sm:$0xff]
        %v3052 = vld [vmem:[#allocation2 + $0x18] sm:$0xff]
        %v3053 = vld [vmem:[#allocation2 + $0x20] sm:$0xff]
        %v3054 = vld [vmem:[#allocation2 + $0x28] sm:$0xff]
        %v3055 = vld [vmem:[#allocation2 + $0x30] sm:$0xff]
        %v3056 = vld [vmem:[#allocation2 + $0x38] sm:$0xff]
        %v3057 = vld [vmem:[#allocation2 + $0x40] sm:$0xff]
        %v3058 = vld [vmem:[#allocation2 + $0x48] sm:$0xff]
        %v3059 = vld [vmem:[#allocation2 + $0x50] sm:$0xff]
        %v3060 = vld [vmem:[#allocation2 + $0x58] sm:$0xff]
        %v3061 = vld [vmem:[#allocation2 + $0x60] sm:$0xff]
        %v3062 = vld [vmem:[#allocation2 + $0x68] sm:$0xff]
        %v3063 = vld [vmem:[#allocation2 + $0x70] sm:$0xff]
        %v3064 = vld [vmem:[#allocation2 + $0x78] sm:$0xff]
        %v3065 = vld [vmem:[#allocation2 + $0x80] sm:$0xff]
        %v3066 = vld [vmem:[#allocation2 + $0x88] sm:$0xff]
        %v3067 = vld [vmem:[#allocation2 + $0x90] sm:$0xff]
        %v3068 = vld [vmem:[#allocation2 + $0x98] sm:$0xff]
        %v3069 = vld [vmem:[#allocation2 + $0xa0] sm:$0xff]
        %v3070 = vld [vmem:[#allocation2 + $0xa8] sm:$0xff]
        %v3071 = vld [vmem:[#allocation2 + $0xb0] sm:$0xff]
        %v3072 = vld [vmem:[#allocation2 + $0xb8] sm:$0xff]
        %v3073 = vld [vmem:[#allocation2 + $0xc0] sm:$0xff]
        %v3074 = vld [vmem:[#allocation2 + $0xc8] sm:$0xff]
        %v3075 = vld [vmem:[#allocation2 + $0xd0] sm:$0xff]
        %v3076 = vld [vmem:[#allocation2 + $0xd8] sm:$0xff]
        %v3077 = vld [vmem:[#allocation2 + $0xe0] sm:$0xff]
        %v3078 = vld [vmem:[#allocation2 + $0xe8] sm:$0xff]
        %v3079 = vld [vmem:[#allocation2 + $0xf0] sm:$0xff]
        %v3080 = vld [vmem:[#allocation2 + $0xf8] sm:$0xff]
        %3081 = vmatprep.subr.bf16.mxu0 %v3050
        %3082 = vmatpush1.bf16.msra.mxu0 %v3049
        %3083 = vmatprep.subr.bf16.mxu0 %v3052
        %3084 = vmatpush1.bf16.msra.mxu0 %v3051
        %3085 = vmatprep.subr.bf16.mxu0 %v3054
        %3086 = vmatpush1.bf16.msra.mxu0 %v3053
        %3087 = vmatprep.subr.bf16.mxu0 %v3056
        %3088 = vmatpush1.bf16.msra.mxu0 %v3055
        %3089 = vmatprep.subr.bf16.mxu0 %v3058
        %3090 = vmatpush1.bf16.msra.mxu0 %v3057
        %3091 = vmatprep.subr.bf16.mxu0 %v3060
        %3092 = vmatpush1.bf16.msra.mxu0 %v3059
        %3093 = vmatprep.subr.bf16.mxu0 %v3062
        %3094 = vmatpush1.bf16.msra.mxu0 %v3061
        %3095 = vmatprep.subr.bf16.mxu0 %v3064
        %3096 = vmatpush1.bf16.msra.mxu0 %v3063
        %3097 = vmatprep.subr.bf16.mxu0 %v3066
        %3098 = vmatpush1.bf16.msra.mxu0 %v3065
        %3099 = vmatprep.subr.bf16.mxu0 %v3068
        %3100 = vmatpush1.bf16.msra.mxu0 %v3067
        %3101 = vmatprep.subr.bf16.mxu0 %v3070
        %3102 = vmatpush1.bf16.msra.mxu0 %v3069
        %3103 = vmatprep.subr.bf16.mxu0 %v3072
        %3104 = vmatpush1.bf16.msra.mxu0 %v3071
        %3105 = vmatprep.subr.bf16.mxu0 %v3074
        %3106 = vmatpush1.bf16.msra.mxu0 %v3073
        %3107 = vmatprep.subr.bf16.mxu0 %v3076
        %3108 = vmatpush1.bf16.msra.mxu0 %v3075
        %3109 = vmatprep.subr.bf16.mxu0 %v3078
        %3110 = vmatpush1.bf16.msra.mxu0 %v3077
        %3111 = vmatprep.subr.bf16.mxu0 %v3080
        %3112 = vmatpush1.bf16.msra.mxu0 %v3079
        %3113 = vmatprep.mubr.bf16.mxu0 %v3048
        %3114 = vmatmul.mubr.bf16.gmra.mrb[0].mxu0 %v3047
        %v3115 = vpop.f32.mrb[0].mxu0
        %v3116 = vadd.f32 0.0, %v3115
        %v3117 = vpop.f32.mrb[0].mxu0
        %v3118 = vadd.f32 0.0, %v3117
        %v3119 = vpop.f32.mrb[0].mxu0
        %v3120 = vpop.f32.mrb[0].mxu0
        %3121 = vdwg.mxu0
        %v3122 = vadd.f32 %v3045, %v3116
        %v3123 = vadd.f32 %v3046, %v3118
        %v3124 = vtanh.pop %v3122
        %v3125 = vtanh.pop %v3123
        %s3126 = smul.u32 29, 2
        %s3127 = smul.addr %s3126, 8
        %s3128 = scalar_lea.vmem [#allocation5], %s3127
        %3129 = vst [vmem:[%s3128] sm:$0xff] %v3124
        %3130 = vst [vmem:[%s3128 + $0x8] sm:$0xff] %v3125
        %s3131 = scalar_lea.vmem [#allocation4], 480
        %v3132 = vld [vmem:[%s3131] sm:$0xff]
        %v3133 = vld [vmem:[%s3131 + $0x8] sm:$0xff]
        %v3134 = vpack.c.bf16 %v3124, %v3124
        %v3135 = vpack.c.bf16 %v3125, %v3125
        %v3136 = vld [vmem:[#allocation2] sm:$0xff]
        %v3137 = vld [vmem:[#allocation2 + $0x8] sm:$0xff]
        %v3138 = vld [vmem:[#allocation2 + $0x10] sm:$0xff]
        %v3139 = vld [vmem:[#allocation2 + $0x18] sm:$0xff]
        %v3140 = vld [vmem:[#allocation2 + $0x20] sm:$0xff]
        %v3141 = vld [vmem:[#allocation2 + $0x28] sm:$0xff]
        %v3142 = vld [vmem:[#allocation2 + $0x30] sm:$0xff]
        %v3143 = vld [vmem:[#allocation2 + $0x38] sm:$0xff]
        %v3144 = vld [vmem:[#allocation2 + $0x40] sm:$0xff]
        %v3145 = vld [vmem:[#allocation2 + $0x48] sm:$0xff]
        %v3146 = vld [vmem:[#allocation2 + $0x50] sm:$0xff]
        %v3147 = vld [vmem:[#allocation2 + $0x58] sm:$0xff]
        %v3148 = vld [vmem:[#allocation2 + $0x60] sm:$0xff]
        %v3149 = vld [vmem:[#allocation2 + $0x68] sm:$0xff]
        %v3150 = vld [vmem:[#allocation2 + $0x70] sm:$0xff]
        %v3151 = vld [vmem:[#allocation2 + $0x78] sm:$0xff]
        %v3152 = vld [vmem:[#allocation2 + $0x80] sm:$0xff]
        %v3153 = vld [vmem:[#allocation2 + $0x88] sm:$0xff]
        %v3154 = vld [vmem:[#allocation2 + $0x90] sm:$0xff]
        %v3155 = vld [vmem:[#allocation2 + $0x98] sm:$0xff]
        %v3156 = vld [vmem:[#allocation2 + $0xa0] sm:$0xff]
        %v3157 = vld [vmem:[#allocation2 + $0xa8] sm:$0xff]
        %v3158 = vld [vmem:[#allocation2 + $0xb0] sm:$0xff]
        %v3159 = vld [vmem:[#allocation2 + $0xb8] sm:$0xff]
        %v3160 = vld [vmem:[#allocation2 + $0xc0] sm:$0xff]
        %v3161 = vld [vmem:[#allocation2 + $0xc8] sm:$0xff]
        %v3162 = vld [vmem:[#allocation2 + $0xd0] sm:$0xff]
        %v3163 = vld [vmem:[#allocation2 + $0xd8] sm:$0xff]
        %v3164 = vld [vmem:[#allocation2 + $0xe0] sm:$0xff]
        %v3165 = vld [vmem:[#allocation2 + $0xe8] sm:$0xff]
        %v3166 = vld [vmem:[#allocation2 + $0xf0] sm:$0xff]
        %v3167 = vld [vmem:[#allocation2 + $0xf8] sm:$0xff]
        %3168 = vmatprep.subr.bf16.mxu0 %v3137
        %3169 = vmatpush1.bf16.msra.mxu0 %v3136
        %3170 = vmatprep.subr.bf16.mxu0 %v3139
        %3171 = vmatpush1.bf16.msra.mxu0 %v3138
        %3172 = vmatprep.subr.bf16.mxu0 %v3141
        %3173 = vmatpush1.bf16.msra.mxu0 %v3140
        %3174 = vmatprep.subr.bf16.mxu0 %v3143
        %3175 = vmatpush1.bf16.msra.mxu0 %v3142
        %3176 = vmatprep.subr.bf16.mxu0 %v3145
        %3177 = vmatpush1.bf16.msra.mxu0 %v3144
        %3178 = vmatprep.subr.bf16.mxu0 %v3147
        %3179 = vmatpush1.bf16.msra.mxu0 %v3146
        %3180 = vmatprep.subr.bf16.mxu0 %v3149
        %3181 = vmatpush1.bf16.msra.mxu0 %v3148
        %3182 = vmatprep.subr.bf16.mxu0 %v3151
        %3183 = vmatpush1.bf16.msra.mxu0 %v3150
        %3184 = vmatprep.subr.bf16.mxu0 %v3153
        %3185 = vmatpush1.bf16.msra.mxu0 %v3152
        %3186 = vmatprep.subr.bf16.mxu0 %v3155
        %3187 = vmatpush1.bf16.msra.mxu0 %v3154
        %3188 = vmatprep.subr.bf16.mxu0 %v3157
        %3189 = vmatpush1.bf16.msra.mxu0 %v3156
        %3190 = vmatprep.subr.bf16.mxu0 %v3159
        %3191 = vmatpush1.bf16.msra.mxu0 %v3158
        %3192 = vmatprep.subr.bf16.mxu0 %v3161
        %3193 = vmatpush1.bf16.msra.mxu0 %v3160
        %3194 = vmatprep.subr.bf16.mxu0 %v3163
        %3195 = vmatpush1.bf16.msra.mxu0 %v3162
        %3196 = vmatprep.subr.bf16.mxu0 %v3165
        %3197 = vmatpush1.bf16.msra.mxu0 %v3164
        %3198 = vmatprep.subr.bf16.mxu0 %v3167
        %3199 = vmatpush1.bf16.msra.mxu0 %v3166
        %3200 = vmatprep.mubr.bf16.mxu0 %v3135
        %3201 = vmatmul.mubr.bf16.gmra.mrb[0].mxu0 %v3134
        %v3202 = vpop.f32.mrb[0].mxu0
        %v3203 = vadd.f32 0.0, %v3202
        %v3204 = vpop.f32.mrb[0].mxu0
        %v3205 = vadd.f32 0.0, %v3204
        %v3206 = vpop.f32.mrb[0].mxu0
        %v3207 = vpop.f32.mrb[0].mxu0
        %3208 = vdwg.mxu0
        %v3209 = vadd.f32 %v3132, %v3203
        %v3210 = vadd.f32 %v3133, %v3205
        %v3211 = vtanh.pop %v3209
        %v3212 = vtanh.pop %v3210
        %s3213 = smul.u32 30, 2
        %s3214 = smul.addr %s3213, 8
        %s3215 = scalar_lea.vmem [#allocation5], %s3214
        %3216 = vst [vmem:[%s3215] sm:$0xff] %v3211
        %3217 = vst [vmem:[%s3215 + $0x8] sm:$0xff] %v3212
        %s3218 = scalar_lea.vmem [#allocation4], 496
        %v3219 = vld [vmem:[%s3218] sm:$0xff]
        %v3220 = vld [vmem:[%s3218 + $0x8] sm:$0xff]
        %v3221 = vpack.c.bf16 %v3211, %v3211
        %v3222 = vpack.c.bf16 %v3212, %v3212
        %v3223 = vld [vmem:[#allocation2] sm:$0xff]
        %v3224 = vld [vmem:[#allocation2 + $0x8] sm:$0xff]
        %v3225 = vld [vmem:[#allocation2 + $0x10] sm:$0xff]
        %v3226 = vld [vmem:[#allocation2 + $0x18] sm:$0xff]
        %v3227 = vld [vmem:[#allocation2 + $0x20] sm:$0xff]
        %v3228 = vld [vmem:[#allocation2 + $0x28] sm:$0xff]
        %v3229 = vld [vmem:[#allocation2 + $0x30] sm:$0xff]
        %v3230 = vld [vmem:[#allocation2 + $0x38] sm:$0xff]
        %v3231 = vld [vmem:[#allocation2 + $0x40] sm:$0xff]
        %v3232 = vld [vmem:[#allocation2 + $0x48] sm:$0xff]
        %v3233 = vld [vmem:[#allocation2 + $0x50] sm:$0xff]
        %v3234 = vld [vmem:[#allocation2 + $0x58] sm:$0xff]
        %v3235 = vld [vmem:[#allocation2 + $0x60] sm:$0xff]
        %v3236 = vld [vmem:[#allocation2 + $0x68] sm:$0xff]
        %v3237 = vld [vmem:[#allocation2 + $0x70] sm:$0xff]
        %v3238 = vld [vmem:[#allocation2 + $0x78] sm:$0xff]
        %v3239 = vld [vmem:[#allocation2 + $0x80] sm:$0xff]
        %v3240 = vld [vmem:[#allocation2 + $0x88] sm:$0xff]
        %v3241 = vld [vmem:[#allocation2 + $0x90] sm:$0xff]
        %v3242 = vld [vmem:[#allocation2 + $0x98] sm:$0xff]
        %v3243 = vld [vmem:[#allocation2 + $0xa0] sm:$0xff]
        %v3244 = vld [vmem:[#allocation2 + $0xa8] sm:$0xff]
        %v3245 = vld [vmem:[#allocation2 + $0xb0] sm:$0xff]
        %v3246 = vld [vmem:[#allocation2 + $0xb8] sm:$0xff]
        %v3247 = vld [vmem:[#allocation2 + $0xc0] sm:$0xff]
        %v3248 = vld [vmem:[#allocation2 + $0xc8] sm:$0xff]
        %v3249 = vld [vmem:[#allocation2 + $0xd0] sm:$0xff]
        %v3250 = vld [vmem:[#allocation2 + $0xd8] sm:$0xff]
        %v3251 = vld [vmem:[#allocation2 + $0xe0] sm:$0xff]
        %v3252 = vld [vmem:[#allocation2 + $0xe8] sm:$0xff]
        %v3253 = vld [vmem:[#allocation2 + $0xf0] sm:$0xff]
        %v3254 = vld [vmem:[#allocation2 + $0xf8] sm:$0xff]
        %3255 = vmatprep.subr.bf16.mxu0 %v3224
        %3256 = vmatpush1.bf16.msra.mxu0 %v3223
        %3257 = vmatprep.subr.bf16.mxu0 %v3226
        %3258 = vmatpush1.bf16.msra.mxu0 %v3225
        %3259 = vmatprep.subr.bf16.mxu0 %v3228
        %3260 = vmatpush1.bf16.msra.mxu0 %v3227
        %3261 = vmatprep.subr.bf16.mxu0 %v3230
        %3262 = vmatpush1.bf16.msra.mxu0 %v3229
        %3263 = vmatprep.subr.bf16.mxu0 %v3232
        %3264 = vmatpush1.bf16.msra.mxu0 %v3231
        %3265 = vmatprep.subr.bf16.mxu0 %v3234
        %3266 = vmatpush1.bf16.msra.mxu0 %v3233
        %3267 = vmatprep.subr.bf16.mxu0 %v3236
        %3268 = vmatpush1.bf16.msra.mxu0 %v3235
        %3269 = vmatprep.subr.bf16.mxu0 %v3238
        %3270 = vmatpush1.bf16.msra.mxu0 %v3237
        %3271 = vmatprep.subr.bf16.mxu0 %v3240
        %3272 = vmatpush1.bf16.msra.mxu0 %v3239
        %3273 = vmatprep.subr.bf16.mxu0 %v3242
        %3274 = vmatpush1.bf16.msra.mxu0 %v3241
        %3275 = vmatprep.subr.bf16.mxu0 %v3244
        %3276 = vmatpush1.bf16.msra.mxu0 %v3243
        %3277 = vmatprep.subr.bf16.mxu0 %v3246
        %3278 = vmatpush1.bf16.msra.mxu0 %v3245
        %3279 = vmatprep.subr.bf16.mxu0 %v3248
        %3280 = vmatpush1.bf16.msra.mxu0 %v3247
        %3281 = vmatprep.subr.bf16.mxu0 %v3250
        %3282 = vmatpush1.bf16.msra.mxu0 %v3249
        %3283 = vmatprep.subr.bf16.mxu0 %v3252
        %3284 = vmatpush1.bf16.msra.mxu0 %v3251
        %3285 = vmatprep.subr.bf16.mxu0 %v3254
        %3286 = vmatpush1.bf16.msra.mxu0 %v3253
        %3287 = vmatprep.mubr.bf16.mxu0 %v3222
        %3288 = vmatmul.mubr.bf16.gmra.mrb[0].mxu0 %v3221
        %v3289 = vpop.f32.mrb[0].mxu0
        %v3290 = vadd.f32 0.0, %v3289
        %v3291 = vpop.f32.mrb[0].mxu0
        %v3292 = vadd.f32 0.0, %v3291
        %v3293 = vpop.f32.mrb[0].mxu0
        %v3294 = vpop.f32.mrb[0].mxu0
        %3295 = vdwg.mxu0
        %v3296 = vadd.f32 %v3219, %v3290
        %v3297 = vadd.f32 %v3220, %v3292
        %v3298 = vtanh.pop %v3296
        %v3299 = vtanh.pop %v3297
        %s3300 = smul.u32 31, 2
        %s3301 = smul.addr %s3300, 8
        %s3302 = scalar_lea.vmem [#allocation5], %s3301
        %3303 = vst [vmem:[%s3302] sm:$0xff] %v3298
        %3304 = vst [vmem:[%s3302 + $0x8] sm:$0xff] %v3299
        %3305 = vst [vmem:[#allocation3] sm:$0xff] %v3298
        %3306 = vst [vmem:[#allocation3 + $0x8] sm:$0xff] %v3299
        %p3307 = scmp.le.s32.totalorder %s232, 34
        %s3308 = sadd.s32 %s232, 32
        %p3309 = scmp.gt.s32.totalorder %s3308, 34
        %p3310 = pnand %p3307, %p3309
        %p3311 = pneg %p3310
        // Predicated region
        $region45: #{tpu_custom_call.1} parent=31 // pred_check
          _
        $region46: #{tpu_custom_call.1} parent=31 // pred_check_branch
          %3313 = sbr.rel (%p3310) target = $region48
        $region47: #{tpu_custom_call.1} parent=31 // pred_region
          %s3314 = ssub.s32 34, %s232
          %s3315 = smul.u32 %s3314, 8
          %s3316 = sshra.s32 %s3315, 3
          %s3317 = sand.u32 %s3315, 7
          %s3318 = smul.u32 %s3316, 2
          %s3319 = smul.addr %s3318, 8
          %s3320 = scalar_lea.vmem [#allocation5], %s3319
          %v3321 = vld [vmem:[%s3320] sm:$0xff]
          %v3322 = vld [vmem:[%s3320 + $0x8] sm:$0xff]
          %3323 = vst [vmem:[#allocation13] sm:$0xff] %v3321
          %3324 = vst [vmem:[#allocation13 + $0x8] sm:$0xff] %v3322
        $region48: #{tpu_custom_call.1} parent=31 // pred_fallthru
          _
        %v3325 = vld [vmem:[#allocation5] sm:$0xff]
        %v3326 = vld [vmem:[#allocation5 + $0x8] sm:$0xff]
        %v3327 = vld [vmem:[#allocation5 + $0x10] sm:$0xff]
        %v3328 = vld [vmem:[#allocation5 + $0x18] sm:$0xff]
        %v3329 = vld [vmem:[#allocation5 + $0x20] sm:$0xff]
        %v3330 = vld [vmem:[#allocation5 + $0x28] sm:$0xff]
        %v3331 = vld [vmem:[#allocation5 + $0x30] sm:$0xff]
        %v3332 = vld [vmem:[#allocation5 + $0x38] sm:$0xff]
        %v3333 = vld [vmem:[#allocation5 + $0x40] sm:$0xff]
        %v3334 = vld [vmem:[#allocation5 + $0x48] sm:$0xff]
        %v3335 = vld [vmem:[#allocation5 + $0x50] sm:$0xff]
        %v3336 = vld [vmem:[#allocation5 + $0x58] sm:$0xff]
        %v3337 = vld [vmem:[#allocation5 + $0x60] sm:$0xff]
        %v3338 = vld [vmem:[#allocation5 + $0x68] sm:$0xff]
        %v3339 = vld [vmem:[#allocation5 + $0x70] sm:$0xff]
        %v3340 = vld [vmem:[#allocation5 + $0x78] sm:$0xff]
        %v3341 = vld [vmem:[#allocation5 + $0x80] sm:$0xff]
        %v3342 = vld [vmem:[#allocation5 + $0x88] sm:$0xff]
        %v3343 = vld [vmem:[#allocation5 + $0x90] sm:$0xff]
        %v3344 = vld [vmem:[#allocation5 + $0x98] sm:$0xff]
        %v3345 = vld [vmem:[#allocation5 + $0xa0] sm:$0xff]
        %v3346 = vld [vmem:[#allocation5 + $0xa8] sm:$0xff]
        %v3347 = vld [vmem:[#allocation5 + $0xb0] sm:$0xff]
        %v3348 = vld [vmem:[#allocation5 + $0xb8] sm:$0xff]
        %v3349 = vld [vmem:[#allocation5 + $0xc0] sm:$0xff]
        %v3350 = vld [vmem:[#allocation5 + $0xc8] sm:$0xff]
        %v3351 = vld [vmem:[#allocation5 + $0xd0] sm:$0xff]
        %v3352 = vld [vmem:[#allocation5 + $0xd8] sm:$0xff]
        %v3353 = vld [vmem:[#allocation5 + $0xe0] sm:$0xff]
        %v3354 = vld [vmem:[#allocation5 + $0xe8] sm:$0xff]
        %v3355 = vld [vmem:[#allocation5 + $0xf0] sm:$0xff]
        %v3356 = vld [vmem:[#allocation5 + $0xf8] sm:$0xff]
        %v3357 = vld [vmem:[#allocation5 + $0x100] sm:$0xff]
        %v3358 = vld [vmem:[#allocation5 + $0x108] sm:$0xff]
        %v3359 = vld [vmem:[#allocation5 + $0x110] sm:$0xff]
        %v3360 = vld [vmem:[#allocation5 + $0x118] sm:$0xff]
        %v3361 = vld [vmem:[#allocation5 + $0x120] sm:$0xff]
        %v3362 = vld [vmem:[#allocation5 + $0x128] sm:$0xff]
        %v3363 = vld [vmem:[#allocation5 + $0x130] sm:$0xff]
        %v3364 = vld [vmem:[#allocation5 + $0x138] sm:$0xff]
        %v3365 = vld [vmem:[#allocation5 + $0x140] sm:$0xff]
        %v3366 = vld [vmem:[#allocation5 + $0x148] sm:$0xff]
        %v3367 = vld [vmem:[#allocation5 + $0x150] sm:$0xff]
        %v3368 = vld [vmem:[#allocation5 + $0x158] sm:$0xff]
        %v3369 = vld [vmem:[#allocation5 + $0x160] sm:$0xff]
        %v3370 = vld [vmem:[#allocation5 + $0x168] sm:$0xff]
        %v3371 = vld [vmem:[#allocation5 + $0x170] sm:$0xff]
        %v3372 = vld [vmem:[#allocation5 + $0x178] sm:$0xff]
        %v3373 = vld [vmem:[#allocation5 + $0x180] sm:$0xff]
        %v3374 = vld [vmem:[#allocation5 + $0x188] sm:$0xff]
        %v3375 = vld [vmem:[#allocation5 + $0x190] sm:$0xff]
        %v3376 = vld [vmem:[#allocation5 + $0x198] sm:$0xff]
        %v3377 = vld [vmem:[#allocation5 + $0x1a0] sm:$0xff]
        %v3378 = vld [vmem:[#allocation5 + $0x1a8] sm:$0xff]
        %v3379 = vld [vmem:[#allocation5 + $0x1b0] sm:$0xff]
        %v3380 = vld [vmem:[#allocation5 + $0x1b8] sm:$0xff]
        %v3381 = vld [vmem:[#allocation5 + $0x1c0] sm:$0xff]
        %v3382 = vld [vmem:[#allocation5 + $0x1c8] sm:$0xff]
        %v3383 = vld [vmem:[#allocation5 + $0x1d0] sm:$0xff]
        %v3384 = vld [vmem:[#allocation5 + $0x1d8] sm:$0xff]
        %v3385 = vld [vmem:[#allocation5 + $0x1e0] sm:$0xff]
        %v3386 = vld [vmem:[#allocation5 + $0x1e8] sm:$0xff]
        %v3387 = vld [vmem:[#allocation5 + $0x1f0] sm:$0xff]
        %v3388 = vld [vmem:[#allocation5 + $0x1f8] sm:$0xff]
        %v3389 = vpack.c.bf16 %v3327, %v3325
        %v3390 = vpack.c.bf16 %v3328, %v3326
        %v3391 = vpack.c.bf16 %v3331, %v3329
        %v3392 = vpack.c.bf16 %v3332, %v3330
        %v3393 = vpack.c.bf16 %v3335, %v3333
        %v3394 = vpack.c.bf16 %v3336, %v3334
        %v3395 = vpack.c.bf16 %v3339, %v3337
        %v3396 = vpack.c.bf16 %v3340, %v3338
        %v3397 = vpack.c.bf16 %v3343, %v3341
        %v3398 = vpack.c.bf16 %v3344, %v3342
        %v3399 = vpack.c.bf16 %v3347, %v3345
        %v3400 = vpack.c.bf16 %v3348, %v3346
        %v3401 = vpack.c.bf16 %v3351, %v3349
        %v3402 = vpack.c.bf16 %v3352, %v3350
        %v3403 = vpack.c.bf16 %v3355, %v3353
        %v3404 = vpack.c.bf16 %v3356, %v3354
        %v3405 = vpack.c.bf16 %v3359, %v3357
        %v3406 = vpack.c.bf16 %v3360, %v3358
        %v3407 = vpack.c.bf16 %v3363, %v3361
        %v3408 = vpack.c.bf16 %v3364, %v3362
        %v3409 = vpack.c.bf16 %v3367, %v3365
        %v3410 = vpack.c.bf16 %v3368, %v3366
        %v3411 = vpack.c.bf16 %v3371, %v3369
        %v3412 = vpack.c.bf16 %v3372, %v3370
        %v3413 = vpack.c.bf16 %v3375, %v3373
        %v3414 = vpack.c.bf16 %v3376, %v3374
        %v3415 = vpack.c.bf16 %v3379, %v3377
        %v3416 = vpack.c.bf16 %v3380, %v3378
        %v3417 = vpack.c.bf16 %v3383, %v3381
        %v3418 = vpack.c.bf16 %v3384, %v3382
        %v3419 = vpack.c.bf16 %v3387, %v3385
        %v3420 = vpack.c.bf16 %v3388, %v3386
        %v3453 = vunpack.c.l.b16 %v3389
        %v3454 = vunpack.c.l.b16 %v3390
        %v3455 = vunpack.c.h.b16 %v3389
        %v3456 = vunpack.c.h.b16 %v3390
        %v3457 = vunpack.c.l.b16 %v3391
        %v3458 = vunpack.c.l.b16 %v3392
        %v3459 = vunpack.c.h.b16 %v3391
        %v3460 = vunpack.c.h.b16 %v3392
        %v3461 = vunpack.c.l.b16 %v3393
        %v3462 = vunpack.c.l.b16 %v3394
        %v3463 = vunpack.c.h.b16 %v3393
        %v3464 = vunpack.c.h.b16 %v3394
        %v3465 = vunpack.c.l.b16 %v3395
        %v3466 = vunpack.c.l.b16 %v3396
        %v3467 = vunpack.c.h.b16 %v3395
        %v3468 = vunpack.c.h.b16 %v3396
        %v3469 = vunpack.c.l.b16 %v3397
        %v3470 = vunpack.c.l.b16 %v3398
        %v3471 = vunpack.c.h.b16 %v3397
        %v3472 = vunpack.c.h.b16 %v3398
        %v3473 = vunpack.c.l.b16 %v3399
        %v3474 = vunpack.c.l.b16 %v3400
        %v3475 = vunpack.c.h.b16 %v3399
        %v3476 = vunpack.c.h.b16 %v3400
        %v3477 = vunpack.c.l.b16 %v3401
        %v3478 = vunpack.c.l.b16 %v3402
        %v3479 = vunpack.c.h.b16 %v3401
        %v3480 = vunpack.c.h.b16 %v3402
        %v3481 = vunpack.c.l.b16 %v3403
        %v3482 = vunpack.c.l.b16 %v3404
        %v3483 = vunpack.c.h.b16 %v3403
        %v3484 = vunpack.c.h.b16 %v3404
        %v3485 = vunpack.c.l.b16 %v3405
        %v3486 = vunpack.c.l.b16 %v3406
        %v3487 = vunpack.c.h.b16 %v3405
        %v3488 = vunpack.c.h.b16 %v3406
        %v3489 = vunpack.c.l.b16 %v3407
        %v3490 = vunpack.c.l.b16 %v3408
        %v3491 = vunpack.c.h.b16 %v3407
        %v3492 = vunpack.c.h.b16 %v3408
        %v3493 = vunpack.c.l.b16 %v3409
        %v3494 = vunpack.c.l.b16 %v3410
        %v3495 = vunpack.c.h.b16 %v3409
        %v3496 = vunpack.c.h.b16 %v3410
        %v3497 = vunpack.c.l.b16 %v3411
        %v3498 = vunpack.c.l.b16 %v3412
        %v3499 = vunpack.c.h.b16 %v3411
        %v3500 = vunpack.c.h.b16 %v3412
        %v3501 = vunpack.c.l.b16 %v3413
        %v3502 = vunpack.c.l.b16 %v3414
        %v3503 = vunpack.c.h.b16 %v3413
        %v3504 = vunpack.c.h.b16 %v3414
        %v3505 = vunpack.c.l.b16 %v3415
        %v3506 = vunpack.c.l.b16 %v3416
        %v3507 = vunpack.c.h.b16 %v3415
        %v3508 = vunpack.c.h.b16 %v3416
        %v3509 = vunpack.c.l.b16 %v3417
        %v3510 = vunpack.c.l.b16 %v3418
        %v3511 = vunpack.c.h.b16 %v3417
        %v3512 = vunpack.c.h.b16 %v3418
        %v3513 = vunpack.c.l.b16 %v3419
        %v3514 = vunpack.c.l.b16 %v3420
        %v3515 = vunpack.c.h.b16 %v3419
        %v3516 = vunpack.c.h.b16 %v3420
        %v3517 = vpack.c.b16 %v3454, %v3453
        %v3518 = vpack.c.b16 %v3456, %v3455
        %v3519 = vpack.c.b16 %v3458, %v3457
        %v3520 = vpack.c.b16 %v3460, %v3459
        %v3521 = vpack.c.b16 %v3462, %v3461
        %v3522 = vpack.c.b16 %v3464, %v3463
        %v3523 = vpack.c.b16 %v3466, %v3465
        %v3524 = vpack.c.b16 %v3468, %v3467
        %v3525 = vpack.c.b16 %v3470, %v3469
        %v3526 = vpack.c.b16 %v3472, %v3471
        %v3527 = vpack.c.b16 %v3474, %v3473
        %v3528 = vpack.c.b16 %v3476, %v3475
        %v3529 = vpack.c.b16 %v3478, %v3477
        %v3530 = vpack.c.b16 %v3480, %v3479
        %v3531 = vpack.c.b16 %v3482, %v3481
        %v3532 = vpack.c.b16 %v3484, %v3483
        %v3533 = vpack.c.b16 %v3486, %v3485
        %v3534 = vpack.c.b16 %v3488, %v3487
        %v3535 = vpack.c.b16 %v3490, %v3489
        %v3536 = vpack.c.b16 %v3492, %v3491
        %v3537 = vpack.c.b16 %v3494, %v3493
        %v3538 = vpack.c.b16 %v3496, %v3495
        %v3539 = vpack.c.b16 %v3498, %v3497
        %v3540 = vpack.c.b16 %v3500, %v3499
        %v3541 = vpack.c.b16 %v3502, %v3501
        %v3542 = vpack.c.b16 %v3504, %v3503
        %v3543 = vpack.c.b16 %v3506, %v3505
        %v3544 = vpack.c.b16 %v3508, %v3507
        %v3545 = vpack.c.b16 %v3510, %v3509
        %v3546 = vpack.c.b16 %v3512, %v3511
        %v3547 = vpack.c.b16 %v3514, %v3513
        %v3548 = vpack.c.b16 %v3516, %v3515
        %3581 = vst [vmem:[%s227] sm:$0xff] %v3517
        %3582 = vst [vmem:[%s227 + $0x8] sm:$0xff] %v3518
        %3583 = vst [vmem:[%s227 + $0x10] sm:$0xff] %v3519
        %3584 = vst [vmem:[%s227 + $0x18] sm:$0xff] %v3520
        %3585 = vst [vmem:[%s227 + $0x20] sm:$0xff] %v3521
        %3586 = vst [vmem:[%s227 + $0x28] sm:$0xff] %v3522
        %3587 = vst [vmem:[%s227 + $0x30] sm:$0xff] %v3523
        %3588 = vst [vmem:[%s227 + $0x38] sm:$0xff] %v3524
        %3589 = vst [vmem:[%s227 + $0x40] sm:$0xff] %v3525
        %3590 = vst [vmem:[%s227 + $0x48] sm:$0xff] %v3526
        %3591 = vst [vmem:[%s227 + $0x50] sm:$0xff] %v3527
        %3592 = vst [vmem:[%s227 + $0x58] sm:$0xff] %v3528
        %3593 = vst [vmem:[%s227 + $0x60] sm:$0xff] %v3529
        %3594 = vst [vmem:[%s227 + $0x68] sm:$0xff] %v3530
        %3595 = vst [vmem:[%s227 + $0x70] sm:$0xff] %v3531
        %3596 = vst [vmem:[%s227 + $0x78] sm:$0xff] %v3532
        %3597 = vst [vmem:[%s227 + $0x80] sm:$0xff] %v3533
        %3598 = vst [vmem:[%s227 + $0x88] sm:$0xff] %v3534
        %3599 = vst [vmem:[%s227 + $0x90] sm:$0xff] %v3535
        %3600 = vst [vmem:[%s227 + $0x98] sm:$0xff] %v3536
        %3601 = vst [vmem:[%s227 + $0xa0] sm:$0xff] %v3537
        %3602 = vst [vmem:[%s227 + $0xa8] sm:$0xff] %v3538
        %3603 = vst [vmem:[%s227 + $0xb0] sm:$0xff] %v3539
        %3604 = vst [vmem:[%s227 + $0xb8] sm:$0xff] %v3540
        %3605 = vst [vmem:[%s227 + $0xc0] sm:$0xff] %v3541
        %3606 = vst [vmem:[%s227 + $0xc8] sm:$0xff] %v3542
        %3607 = vst [vmem:[%s227 + $0xd0] sm:$0xff] %v3543
        %3608 = vst [vmem:[%s227 + $0xd8] sm:$0xff] %v3544
        %3609 = vst [vmem:[%s227 + $0xe0] sm:$0xff] %v3545
        %3610 = vst [vmem:[%s227 + $0xe8] sm:$0xff] %v3546
        %3611 = vst [vmem:[%s227 + $0xf0] sm:$0xff] %v3547
        %3612 = vst [vmem:[%s227 + $0xf8] sm:$0xff] %v3548
        %s3613 = sand.u32 %s101, 1
        %s3614 = scalar_lea.sflag [#allocation9], %s3613
        %s3615 = sand.u32 %s101, 1
        %s3616 = smul.addr %s3615, 256
        %s3617 = scalar_lea.vmem [#allocation12], %s3616
        // Predicated region
        $region49: #{tpu_custom_call.1} parent=31 // pred_check
          %p3618 = pneg %p111
        $region50: #{tpu_custom_call.1} parent=31 // pred_check_branch
          %3620 = sbr.rel (%p3618) target = $region52
        $region51: #{tpu_custom_call.1} parent=31 // pred_region
          %s3621 = smul.u32 32, %s25
          %s3623 = ssub.s32 4096, 4096
          %3624 = vsyncadd %s3614, %s3623
          %s3625 = smul.addr %s3621, 2
          %s3626 = smul.addr %s3625, 64
          %s3627 = scalar_lea.hbm %s4, %s3626
          %s3628 = sshll.u32 %s3617, 4
          %s3629 = int_to_ptr.vmem [resolvable:$true] %s3628
          %3634 = dma.vmem_to_hbm [thread:$0]  %s3629, 4096, %s3627, %s3614, 128, 128, 8
        $region52: #{tpu_custom_call.1} parent=31 // pred_fallthru
          _
        // Predicated region
        $region53: #{tpu_custom_call.1} parent=31 // pred_check
          %p3635 = pneg %p132
        $region54: #{tpu_custom_call.1} parent=31 // pred_check_branch
          %3637 = sbr.rel (%p3635) target = $region56
        $region55: #{tpu_custom_call.1} parent=31 // pred_region
          %s3639 = ssub.s32 256, 256
          %3640 = vsyncadd [#allocation14], %s3639
          %s3642 = sshll.u32 [#allocation13], 4
          %s3643 = int_to_ptr.vmem [resolvable:$true] %s3642
          %3645 = dma.vmem_to_hbm [thread:$0]  %s3643, 256, %s5, [#allocation14]
        $region56: #{tpu_custom_call.1} parent=31 // pred_fallthru
          _
        // Predicated region
        $region57: #{tpu_custom_call.1} parent=31 // pred_check
          %p3646 = pneg %p132
        $region58: #{tpu_custom_call.1} parent=31 // pred_check_branch
          %3648 = sbr.rel (%p3646) target = $region60
        $region59: #{tpu_custom_call.1} parent=31 // pred_region
          %3649 = dma.done [#allocation14], 256
        $region60: #{tpu_custom_call.1} parent=31 // pred_fallthru
          _
      $region32: #{tpu_custom_call.1} parent=5 // pred_fallthru
        _
      %p3650 = scmp.le.s32.totalorder 2, %s20
      // Predicated region
      $region61: #{tpu_custom_call.1} parent=5 // pred_check
        %p3651 = pneg %p3650
      $region62: #{tpu_custom_call.1} parent=5 // pred_check_branch
        %3653 = sbr.rel (%p3651) target = $region64
      $region63: #{tpu_custom_call.1} parent=5 // pred_region
        %s3654 = ssub.s32 %s20, 2
        // Predicated region
        $region65: #{tpu_custom_call.1} parent=63 // pred_check
          %p3655 = pneg %p117
        $region66: #{tpu_custom_call.1} parent=63 // pred_check_branch
          %3657 = sbr.rel (%p3655) target = $region68
        $region67: #{tpu_custom_call.1} parent=63 // pred_region
          %s3658 = sand.u32 %s102, 1
          %s3659 = scalar_lea.sflag [#allocation9], %s3658
          %s3660 = sand.u32 %s102, 1
          %s3661 = smul.addr %s3660, 256
          %s3662 = scalar_lea.vmem [#allocation12], %s3661
          %3663 = dma.done %s3659, 4096
        $region68: #{tpu_custom_call.1} parent=63 // pred_fallthru
          _
      $region64: #{tpu_custom_call.1} parent=5 // pred_fallthru
        _
    $region6: #{tpu_custom_call.1} parent=1 // loop_footer
      %s24 = sadd.s32 1, %s20
    $region7: #{tpu_custom_call.1} parent=1 // loop_footer_branch
      %19 = sbr.rel target = $region3
    $region8: #{tpu_custom_call.1} parent=1 // loop_exit
      _
    %3664 = vsyncpa [#allocation8], 1
    %s3665 = scalar_lea.sflag [#allocation8], 1
    %3666 = vsyncpa %s3665, 1
    %3667 = vsyncpa [#allocation11], 1
    %3668 = vsyncpa [#allocation9], 1
    %s3669 = scalar_lea.sflag [#allocation9], 1
    %3670 = vsyncpa %s3669, 1
    %3671 = vsyncpa [#allocation14], 1
  %3672 = vsyncmov [#allocation6]
  %s3673 = vpop.sfrf %3672
  %p3674 = scmp.eq.s32.totalorder %s3673, 0
  %p3675 = pneg %p3674
  %3677 = shalt.err (%p3675)

</llo_original>
